<compile_context>
chip_gen: v7x
topology: tpu7x:2x2x1
jax: 0.10.0
libtpu: 0.0.40
codegen_flags: <defaults>
</compile_context>

<pallas_src>
import functools

import jax
import jax.numpy as jnp
from jax.experimental import pallas as pl
from jax.experimental.pallas import tpu as pltpu

EPS = 1e-5
VMEM_LIMIT = 32 * 1024 * 1024  # explicit scoped-VMEM budget; per-image tiles fit v7x's 64 MiB


def _zero_border(pad_ref, H, W, C):
    """Zero only the 1-pixel halo ring of the padded VMEM scratch.

    The interior is fully overwritten every grid step, so re-zeroing the whole
    buffer would be a wasted second write of the tile.
    """
    zr = jnp.zeros((1, W + 2, C), jnp.float32)
    pad_ref[0:1, :, :] = zr
    pad_ref[H + 1:H + 2, :, :] = zr
    zc = jnp.zeros((H + 2, 1, C), jnp.float32)
    pad_ref[:, 0:1, :] = zc
    pad_ref[:, W + 1:W + 2, :] = zc


def _conv3x3(pad_ref, w_ref, H, W, Cin):
    """3x3 conv on a zero-padded (H+2, W+2, Cin) VMEM tile as shifted MXU matmuls.

    Operands are cast to bf16 (2-4x MXU rate on v5e/v6e/v7x); accumulation is f32.
    """
    HW = H * W
    Cout = w_ref.shape[-1]
    acc = jnp.zeros((HW, Cout), jnp.float32)
    # TODO(synk): fuse into a single (HW, 9*Cin) im2col matmul; minor-dim concat of
    # non-128-aligned slabs is not reliably lowered by Mosaic, so keep 9 shifted dots.
    for k in range(9):
        dy, dx = k // 3, k % 3
        patch = pad_ref[dy:dy + H, dx:dx + W, :].reshape(HW, Cin).astype(jnp.bfloat16)
        acc = acc + jnp.dot(patch, w_ref[k], preferred_element_type=jnp.float32)
    return acc


def conv1_kernel(x_ref, w_ref, raw_ref, stats_ref, xpad_ref, *, H, W, Cin):
    # Stage 1: conv1 (bias omitted: it cancels exactly under training-mode BN).
    _zero_border(xpad_ref, H, W, Cin)
    xpad_ref[1:1 + H, 1:1 + W, :] = x_ref[...]
    acc = _conv3x3(xpad_ref, w_ref, H, W, Cin)            # (H*W, Cout) f32
    raw_ref[...] = acc.astype(raw_ref.dtype)              # bf16 mid: halves HBM traffic/VMEM
    # Per-image partial BN stats in ONE pass (sum and sum-of-squares).
    stats_ref[0:1, :] = jnp.sum(acc, axis=0, keepdims=True)
    stats_ref[1:2, :] = jnp.sum(acc * acc, axis=0, keepdims=True)


def conv2_kernel(raw1_ref, scale_ref, shift_ref, w_ref, raw2_ref, stats_ref, mpad_ref,
                 *, H, W, Cout):
    # Stage 2: BN1 (pre-folded global scale/shift) + ReLU + conv2 + BN2 partial stats.
    a = raw1_ref[...].astype(jnp.float32) * scale_ref[...] + shift_ref[...]
    a = jnp.maximum(a, 0.0)                                # f32 elementwise (v5e-friendly)
    _zero_border(mpad_ref, H, W, Cout)
    mpad_ref[1:1 + H, 1:1 + W, :] = a.reshape(H, W, Cout)
    acc = _conv3x3(mpad_ref, w_ref, H, W, Cout)
    raw2_ref[...] = acc.astype(raw2_ref.dtype)
    stats_ref[0:1, :] = jnp.sum(acc, axis=0, keepdims=True)
    stats_ref[1:2, :] = jnp.sum(acc * acc, axis=0, keepdims=True)


def bn_relu_kernel(raw_ref, scale_ref, shift_ref, y_ref):
    # Stage 3: BN2 + ReLU.
    a = raw_ref[...].astype(jnp.float32) * scale_ref[...] + shift_ref[...]
    y_ref[...] = jnp.maximum(a, 0.0)


def _finish_stats(partials, gamma, beta, count):
    """(N, 2, Cout) per-image partial sums -> folded BN scale/shift of shape (1, Cout)."""
    s = jnp.sum(partials, axis=0)                          # (2, Cout)
    mean = s[0] / count
    var = jnp.maximum(s[1] / count - mean * mean, 0.0)     # guard f32 cancellation
    scale = gamma * jax.lax.rsqrt(var + EPS)
    shift = beta - mean * scale
    return (scale.reshape(1, -1).astype(jnp.float32),
            shift.reshape(1, -1).astype(jnp.float32))


def double_conv(x_nchw, params):
    """x_nchw: (N, Cin, H, W) float32 -> (N, Cout, H, W) float32 (DoubleConv forward)."""
    w1k, b1, g1, be1, w2k, b2, g2, be2 = params
    del b1, b2  # conv biases are mathematically cancelled by training-mode BN
    N, Cin, H, W = x_nchw.shape
    Cout = w1k.shape[-1]
    HW = H * W
    M = N * HW

    # Layout glue: NCHW -> NHWC (channels-last for the MXU matmuls).
    x = jnp.transpose(x_nchw, (0, 2, 3, 1)).astype(jnp.float32)
    w1b = w1k.astype(jnp.bfloat16)
    w2b = w2k.astype(jnp.bfloat16)

    cp = pltpu.CompilerParams(dimension_semantics=("parallel",),
                              vmem_limit_bytes=VMEM_LIMIT)

    def full(shape):
        return pl.BlockSpec(shape, lambda i: (0,) * len(shape))

    def per_img(shape):
        return pl.BlockSpec((None,) + shape, lambda i: (i,) + (0,) * len(shape))

    # ---- stage 1: conv1 + partial BN1 stats (grid over batch, pipelined) ----
    raw1, st1 = pl.pallas_call(
        functools.partial(conv1_kernel, H=H, W=W, Cin=Cin),
        grid=(N,),
        in_specs=[per_img((H, W, Cin)), full((9, Cin, Cout))],
        out_specs=[per_img((HW, Cout)), per_img((2, Cout))],
        out_shape=[jax.ShapeDtypeStruct((N, HW, Cout), jnp.bfloat16),
                   jax.ShapeDtypeStruct((N, 2, Cout), jnp.float32)],
        scratch_shapes=[pltpu.VMEM((H + 2, W + 2, Cin), jnp.float32)],
        compiler_params=cp,
        cost_estimate=pl.CostEstimate(
            flops=2 * M * 9 * Cin * Cout, transcendentals=0,
            bytes_accessed=x.size * 4 + w1b.size * 2 + M * Cout * 2 + N * 2 * Cout * 4),
    )(x, w1b)

    scale1, shift1 = _finish_stats(st1, g1, be1, M)

    # ---- stage 2: BN1+ReLU (folded) + conv2 + partial BN2 stats ----
    raw2, st2 = pl.pallas_call(
        functools.partial(conv2_kernel, H=H, W=W, Cout=Cout),
        grid=(N,),
        in_specs=[per_img((HW, Cout)), full((1, Cout)), full((1, Cout)),
                  full((9, Cout, Cout))],
        out_specs=[per_img((HW, Cout)), per_img((2, Cout))],
        out_shape=[jax.ShapeDtypeStruct((N, HW, Cout), jnp.bfloat16),
                   jax.ShapeDtypeStruct((N, 2, Cout), jnp.float32)],
        scratch_shapes=[pltpu.VMEM((H + 2, W + 2, Cout), jnp.float32)],
        compiler_params=cp,
        cost_estimate=pl.CostEstimate(
            flops=2 * M * 9 * Cout * Cout, transcendentals=0,
            bytes_accessed=2 * M * Cout * 2 + w2b.size * 2 + N * 2 * Cout * 4),
    )(raw1, scale1, shift1, w2b)

    scale2, shift2 = _finish_stats(st2, g2, be2, M)

    # ---- stage 3: BN2 + ReLU ----
    y = pl.pallas_call(
        bn_relu_kernel,
        grid=(N,),
        in_specs=[per_img((HW, Cout)), full((1, Cout)), full((1, Cout))],
        out_specs=per_img((HW, Cout)),
        out_shape=jax.ShapeDtypeStruct((N, HW, Cout), jnp.float32),
        compiler_params=cp,
    )(raw2, scale2, shift2)

    # TODO(synk): pack (W, Cout) into the lane dim for Cout < 128 to make the final
    # stores fully lane-dense (real UNet stages have Cout >= 64 so impact is smaller).
    return jnp.transpose(y.reshape(N, H, W, Cout), (0, 3, 1, 2))


def init_params(key, in_ch, out_ch):
    """Deterministic synthetic parameters (PyTorch default-style init)."""
    k1, k2, k3, k4 = jax.random.split(key, 4)
    bound1 = 1.0 / (in_ch * 9) ** 0.5
    w1 = jax.random.uniform(k1, (out_ch, in_ch, 3, 3), jnp.float32, -bound1, bound1)
    b1 = jax.random.uniform(k2, (out_ch,), jnp.float32, -bound1, bound1)
    bound2 = 1.0 / (out_ch * 9) ** 0.5
    w2 = jax.random.uniform(k3, (out_ch, out_ch, 3, 3), jnp.float32, -bound2, bound2)
    b2 = jax.random.uniform(k4, (out_ch,), jnp.float32, -bound2, bound2)
    g1 = jnp.ones((out_ch,), jnp.float32)
    be1 = jnp.zeros((out_ch,), jnp.float32)
    g2 = jnp.ones((out_ch,), jnp.float32)
    be2 = jnp.zeros((out_ch,), jnp.float32)
    # repack conv weights (O, I, kh, kw) -> (kh*kw, I, O) for the kernel
    w1k = jnp.transpose(w1, (2, 3, 1, 0)).reshape(9, in_ch, out_ch)
    w2k = jnp.transpose(w2, (2, 3, 1, 0)).reshape(9, out_ch, out_ch)
    return (w1k, b1, g1, be1, w2k, b2, g2, be2)


def _reference(x_nchw, params):
    """Pure-JAX f32 reference of the PyTorch DoubleConv forward (training-mode BN)."""
    w1k, b1, g1, be1, w2k, b2, g2, be2 = params

    def conv(x, wk):
        o = wk.shape[-1]
        i = wk.shape[1]
        w = jnp.transpose(wk.reshape(3, 3, i, o), (3, 2, 0, 1))  # -> (O, I, 3, 3)
        return jax.lax.conv_general_dilated(
            x, w, (1, 1), ((1, 1), (1, 1)),
            dimension_numbers=("NCHW", "OIHW", "NCHW"))

    def bn_relu(x, g, b):
        m = x.mean(axis=(0, 2, 3), keepdims=True)
        v = ((x - m) ** 2).mean(axis=(0, 2, 3), keepdims=True)
        xn = (x - m) * jax.lax.rsqrt(v + EPS)
        return jnp.maximum(xn * g.reshape(1, -1, 1, 1) + b.reshape(1, -1, 1, 1), 0.0)

    h = bn_relu(conv(x_nchw, w1k) + b1.reshape(1, -1, 1, 1), g1, be1)
    return bn_relu(conv(h, w2k) + b2.reshape(1, -1, 1, 1), g2, be2)


if __name__ == "__main__":
    key = jax.random.PRNGKey(0)
    kx, kp = jax.random.split(key)

    N, in_ch, out_ch, H, W = 2, 4, 8, 16, 16
    x = jax.random.normal(kx, (N, in_ch, H, W), jnp.float32)
    params = init_params(kp, in_ch, out_ch)

    y = double_conv(x, params)
    jax.block_until_ready(y)
    assert y.shape == (N, out_ch, H, W)

    # Loose tolerance: kernel uses bf16 MXU operands / bf16 intermediates.
    y_ref = _reference(x, params)
    assert float(jnp.max(jnp.abs(y - y_ref))) < 0.1

    print("KERNEL_OK")
</pallas_src>

<mosaic_0001>
module attributes {stable_mosaic.version = 11 : i64} {
  func.func @conv1_kernel(%arg0: i32, %arg1: memref<1x16x16x4xf32, #tpu.memory_space<vmem>>, %arg2: memref<9x4x8xbf16, #tpu.memory_space<vmem>>, %arg3: memref<1x256x8xbf16, #tpu.memory_space<vmem>>, %arg4: memref<1x2x8xf32, #tpu.memory_space<vmem>>, %arg5: memref<18x18x4xf32, #tpu.memory_space<vmem>>) attributes {dimension_semantics = [#tpu.dimension_semantics<parallel>], iteration_bounds = array<i64: 2>, scalar_prefetch = 0 : i64, scratch_operands = 1 : i64, tpu.core_type = #tpu.core_type<tc>, window_params = [{transform_indices = @transform_0, window_bounds = array<i64: 1, 16, 16, 4>}, {pipeline_mode = #tpu.pipeline_mode<synchronous>, transform_indices = @transform_1, window_bounds = array<i64: 9, 4, 8>}, {transform_indices = @transform_2, window_bounds = array<i64: 1, 256, 8>}, {transform_indices = @transform_3, window_bounds = array<i64: 1, 2, 8>}]} {
    %cst = arith.constant 0.000000e+00 : f32
    %0 = vector.broadcast %cst : f32 to vector<1x18x4xf32>
    %c0 = arith.constant 0 : index
    %c0_0 = arith.constant 0 : index
    %c0_1 = arith.constant 0 : index
    %1 = vector.load %arg5[%c0, %c0_0, %c0_1] : memref<18x18x4xf32, #tpu.memory_space<vmem>>, vector<1x18x4xf32>
    tpu.vector_store %arg5[%c0, %c0_0, %c0_1], %0 {strides = array<i32>} : memref<18x18x4xf32, #tpu.memory_space<vmem>>, vector<1x18x4xf32>,
    %c17 = arith.constant 17 : index
    %c0_2 = arith.constant 0 : index
    %c0_3 = arith.constant 0 : index
    %2 = vector.load %arg5[%c17, %c0_2, %c0_3] : memref<18x18x4xf32, #tpu.memory_space<vmem>>, vector<1x18x4xf32>
    tpu.vector_store %arg5[%c17, %c0_2, %c0_3], %0 {strides = array<i32>} : memref<18x18x4xf32, #tpu.memory_space<vmem>>, vector<1x18x4xf32>,
    %cst_4 = arith.constant 0.000000e+00 : f32
    %3 = vector.broadcast %cst_4 : f32 to vector<18x1x4xf32>
    %c0_5 = arith.constant 0 : index
    %c0_6 = arith.constant 0 : index
    %c0_7 = arith.constant 0 : index
    %4 = vector.load %arg5[%c0_5, %c0_6, %c0_7] : memref<18x18x4xf32, #tpu.memory_space<vmem>>, vector<18x1x4xf32>
    tpu.vector_store %arg5[%c0_5, %c0_6, %c0_7], %3 {strides = array<i32>} : memref<18x18x4xf32, #tpu.memory_space<vmem>>, vector<18x1x4xf32>,
    %c0_8 = arith.constant 0 : index
    %c17_9 = arith.constant 17 : index
    %c0_10 = arith.constant 0 : index
    %5 = vector.load %arg5[%c0_8, %c17_9, %c0_10] : memref<18x18x4xf32, #tpu.memory_space<vmem>>, vector<18x1x4xf32>
    tpu.vector_store %arg5[%c0_8, %c17_9, %c0_10], %3 {strides = array<i32>} : memref<18x18x4xf32, #tpu.memory_space<vmem>>, vector<18x1x4xf32>,
    %c0_11 = arith.constant 0 : index
    %c0_12 = arith.constant 0 : index
    %c0_13 = arith.constant 0 : index
    %c0_14 = arith.constant 0 : index
    %6 = vector.load %arg1[%c0_11, %c0_12, %c0_13, %c0_14] : memref<1x16x16x4xf32, #tpu.memory_space<vmem>>, vector<1x16x16x4xf32>
    %7 = vector.shape_cast %6 : vector<1x16x16x4xf32> to vector<16x16x4xf32>
    %c1 = arith.constant 1 : index
    %c1_15 = arith.constant 1 : index
    %c0_16 = arith.constant 0 : index
    %8 = vector.load %arg5[%c1, %c1_15, %c0_16] : memref<18x18x4xf32, #tpu.memory_space<vmem>>, vector<16x16x4xf32>
    tpu.vector_store %arg5[%c1, %c1_15, %c0_16], %7 {strides = array<i32>} : memref<18x18x4xf32, #tpu.memory_space<vmem>>, vector<16x16x4xf32>,
    %cst_17 = arith.constant 0.000000e+00 : f32
    %9 = vector.broadcast %cst_17 : f32 to vector<256x8xf32>
    %c0_18 = arith.constant 0 : index
    %c0_19 = arith.constant 0 : index
    %c0_20 = arith.constant 0 : index
    %10 = vector.load %arg5[%c0_18, %c0_19, %c0_20] : memref<18x18x4xf32, #tpu.memory_space<vmem>>, vector<16x16x4xf32>
    %11 = vector.shape_cast %10 : vector<16x16x4xf32> to vector<256x4xf32>
    %12 = arith.truncf %11 : vector<256x4xf32> to vector<256x4xbf16>
    %c0_21 = arith.constant 0 : index
    %c0_22 = arith.constant 0 : index
    %c0_23 = arith.constant 0 : index
    %13 = vector.load %arg2[%c0_21, %c0_22, %c0_23] : memref<9x4x8xbf16, #tpu.memory_space<vmem>>, vector<1x4x8xbf16>
    %14 = vector.shape_cast %13 : vector<1x4x8xbf16> to vector<4x8xbf16>
    %cst_24 = arith.constant dense<0.000000e+00> : vector<256x8xf32>
    %15 = tpu.matmul %12, %14, %cst_24 {dimension_numbers = #tpu.dot_dimension_numbers<[1], [0], [0], [1], [0, 0, 1, 1], [], []>} : vector<256x4xbf16>, vector<4x8xbf16>, vector<256x8xf32> -> vector<256x8xf32>
    %16 = arith.addf %9, %15 : vector<256x8xf32>
    %c0_25 = arith.constant 0 : index
    %c1_26 = arith.constant 1 : index
    %c0_27 = arith.constant 0 : index
    %17 = vector.load %arg5[%c0_25, %c1_26, %c0_27] : memref<18x18x4xf32, #tpu.memory_space<vmem>>, vector<16x16x4xf32>
    %18 = vector.shape_cast %17 : vector<16x16x4xf32> to vector<256x4xf32>
    %19 = arith.truncf %18 : vector<256x4xf32> to vector<256x4xbf16>
    %c1_28 = arith.constant 1 : index
    %c0_29 = arith.constant 0 : index
    %c0_30 = arith.constant 0 : index
    %20 = vector.load %arg2[%c1_28, %c0_29, %c0_30] : memref<9x4x8xbf16, #tpu.memory_space<vmem>>, vector<1x4x8xbf16>
    %21 = vector.shape_cast %20 : vector<1x4x8xbf16> to vector<4x8xbf16>
    %cst_31 = arith.constant dense<0.000000e+00> : vector<256x8xf32>
    %22 = tpu.matmul %19, %21, %cst_31 {dimension_numbers = #tpu.dot_dimension_numbers<[1], [0], [0], [1], [0, 0, 1, 1], [], []>} : vector<256x4xbf16>, vector<4x8xbf16>, vector<256x8xf32> -> vector<256x8xf32>
    %23 = arith.addf %16, %22 : vector<256x8xf32>
    %c0_32 = arith.constant 0 : index
    %c2 = arith.constant 2 : index
    %c0_33 = arith.constant 0 : index
    %24 = vector.load %arg5[%c0_32, %c2, %c0_33] : memref<18x18x4xf32, #tpu.memory_space<vmem>>, vector<16x16x4xf32>
    %25 = vector.shape_cast %24 : vector<16x16x4xf32> to vector<256x4xf32>
    %26 = arith.truncf %25 : vector<256x4xf32> to vector<256x4xbf16>
    %c2_34 = arith.constant 2 : index
    %c0_35 = arith.constant 0 : index
    %c0_36 = arith.constant 0 : index
    %27 = vector.load %arg2[%c2_34, %c0_35, %c0_36] : memref<9x4x8xbf16, #tpu.memory_space<vmem>>, vector<1x4x8xbf16>
    %28 = vector.shape_cast %27 : vector<1x4x8xbf16> to vector<4x8xbf16>
    %cst_37 = arith.constant dense<0.000000e+00> : vector<256x8xf32>
    %29 = tpu.matmul %26, %28, %cst_37 {dimension_numbers = #tpu.dot_dimension_numbers<[1], [0], [0], [1], [0, 0, 1, 1], [], []>} : vector<256x4xbf16>, vector<4x8xbf16>, vector<256x8xf32> -> vector<256x8xf32>
    %30 = arith.addf %23, %29 : vector<256x8xf32>
    %c1_38 = arith.constant 1 : index
    %c0_39 = arith.constant 0 : index
    %c0_40 = arith.constant 0 : index
    %31 = vector.load %arg5[%c1_38, %c0_39, %c0_40] : memref<18x18x4xf32, #tpu.memory_space<vmem>>, vector<16x16x4xf32>
    %32 = vector.shape_cast %31 : vector<16x16x4xf32> to vector<256x4xf32>
    %33 = arith.truncf %32 : vector<256x4xf32> to vector<256x4xbf16>
    %c3 = arith.constant 3 : index
    %c0_41 = arith.constant 0 : index
    %c0_42 = arith.constant 0 : index
    %34 = vector.load %arg2[%c3, %c0_41, %c0_42] : memref<9x4x8xbf16, #tpu.memory_space<vmem>>, vector<1x4x8xbf16>
    %35 = vector.shape_cast %34 : vector<1x4x8xbf16> to vector<4x8xbf16>
    %cst_43 = arith.constant dense<0.000000e+00> : vector<256x8xf32>
    %36 = tpu.matmul %33, %35, %cst_43 {dimension_numbers = #tpu.dot_dimension_numbers<[1], [0], [0], [1], [0, 0, 1, 1], [], []>} : vector<256x4xbf16>, vector<4x8xbf16>, vector<256x8xf32> -> vector<256x8xf32>
    %37 = arith.addf %30, %36 : vector<256x8xf32>
    %c1_44 = arith.constant 1 : index
    %c1_45 = arith.constant 1 : index
    %c0_46 = arith.constant 0 : index
    %38 = vector.load %arg5[%c1_44, %c1_45, %c0_46] : memref<18x18x4xf32, #tpu.memory_space<vmem>>, vector<16x16x4xf32>
    %39 = vector.shape_cast %38 : vector<16x16x4xf32> to vector<256x4xf32>
    %40 = arith.truncf %39 : vector<256x4xf32> to vector<256x4xbf16>
    %c4 = arith.constant 4 : index
    %c0_47 = arith.constant 0 : index
    %c0_48 = arith.constant 0 : index
    %41 = vector.load %arg2[%c4, %c0_47, %c0_48] : memref<9x4x8xbf16, #tpu.memory_space<vmem>>, vector<1x4x8xbf16>
    %42 = vector.shape_cast %41 : vector<1x4x8xbf16> to vector<4x8xbf16>
    %cst_49 = arith.constant dense<0.000000e+00> : vector<256x8xf32>
    %43 = tpu.matmul %40, %42, %cst_49 {dimension_numbers = #tpu.dot_dimension_numbers<[1], [0], [0], [1], [0, 0, 1, 1], [], []>} : vector<256x4xbf16>, vector<4x8xbf16>, vector<256x8xf32> -> vector<256x8xf32>
    %44 = arith.addf %37, %43 : vector<256x8xf32>
    %c1_50 = arith.constant 1 : index
    %c2_51 = arith.constant 2 : index
    %c0_52 = arith.constant 0 : index
    %45 = vector.load %arg5[%c1_50, %c2_51, %c0_52] : memref<18x18x4xf32, #tpu.memory_space<vmem>>, vector<16x16x4xf32>
    %46 = vector.shape_cast %45 : vector<16x16x4xf32> to vector<256x4xf32>
    %47 = arith.truncf %46 : vector<256x4xf32> to vector<256x4xbf16>
    %c5 = arith.constant 5 : index
    %c0_53 = arith.constant 0 : index
    %c0_54 = arith.constant 0 : index
    %48 = vector.load %arg2[%c5, %c0_53, %c0_54] : memref<9x4x8xbf16, #tpu.memory_space<vmem>>, vector<1x4x8xbf16>
    %49 = vector.shape_cast %48 : vector<1x4x8xbf16> to vector<4x8xbf16>
    %cst_55 = arith.constant dense<0.000000e+00> : vector<256x8xf32>
    %50 = tpu.matmul %47, %49, %cst_55 {dimension_numbers = #tpu.dot_dimension_numbers<[1], [0], [0], [1], [0, 0, 1, 1], [], []>} : vector<256x4xbf16>, vector<4x8xbf16>, vector<256x8xf32> -> vector<256x8xf32>
    %51 = arith.addf %44, %50 : vector<256x8xf32>
    %c2_56 = arith.constant 2 : index
    %c0_57 = arith.constant 0 : index
    %c0_58 = arith.constant 0 : index
    %52 = vector.load %arg5[%c2_56, %c0_57, %c0_58] : memref<18x18x4xf32, #tpu.memory_space<vmem>>, vector<16x16x4xf32>
    %53 = vector.shape_cast %52 : vector<16x16x4xf32> to vector<256x4xf32>
    %54 = arith.truncf %53 : vector<256x4xf32> to vector<256x4xbf16>
    %c6 = arith.constant 6 : index
    %c0_59 = arith.constant 0 : index
    %c0_60 = arith.constant 0 : index
    %55 = vector.load %arg2[%c6, %c0_59, %c0_60] : memref<9x4x8xbf16, #tpu.memory_space<vmem>>, vector<1x4x8xbf16>
    %56 = vector.shape_cast %55 : vector<1x4x8xbf16> to vector<4x8xbf16>
    %cst_61 = arith.constant dense<0.000000e+00> : vector<256x8xf32>
    %57 = tpu.matmul %54, %56, %cst_61 {dimension_numbers = #tpu.dot_dimension_numbers<[1], [0], [0], [1], [0, 0, 1, 1], [], []>} : vector<256x4xbf16>, vector<4x8xbf16>, vector<256x8xf32> -> vector<256x8xf32>
    %58 = arith.addf %51, %57 : vector<256x8xf32>
    %c2_62 = arith.constant 2 : index
    %c1_63 = arith.constant 1 : index
    %c0_64 = arith.constant 0 : index
    %59 = vector.load %arg5[%c2_62, %c1_63, %c0_64] : memref<18x18x4xf32, #tpu.memory_space<vmem>>, vector<16x16x4xf32>
    %60 = vector.shape_cast %59 : vector<16x16x4xf32> to vector<256x4xf32>
    %61 = arith.truncf %60 : vector<256x4xf32> to vector<256x4xbf16>
    %c7 = arith.constant 7 : index
    %c0_65 = arith.constant 0 : index
    %c0_66 = arith.constant 0 : index
    %62 = vector.load %arg2[%c7, %c0_65, %c0_66] : memref<9x4x8xbf16, #tpu.memory_space<vmem>>, vector<1x4x8xbf16>
    %63 = vector.shape_cast %62 : vector<1x4x8xbf16> to vector<4x8xbf16>
    %cst_67 = arith.constant dense<0.000000e+00> : vector<256x8xf32>
    %64 = tpu.matmul %61, %63, %cst_67 {dimension_numbers = #tpu.dot_dimension_numbers<[1], [0], [0], [1], [0, 0, 1, 1], [], []>} : vector<256x4xbf16>, vector<4x8xbf16>, vector<256x8xf32> -> vector<256x8xf32>
    %65 = arith.addf %58, %64 : vector<256x8xf32>
    %c2_68 = arith.constant 2 : index
    %c2_69 = arith.constant 2 : index
    %c0_70 = arith.constant 0 : index
    %66 = vector.load %arg5[%c2_68, %c2_69, %c0_70] : memref<18x18x4xf32, #tpu.memory_space<vmem>>, vector<16x16x4xf32>
    %67 = vector.shape_cast %66 : vector<16x16x4xf32> to vector<256x4xf32>
    %68 = arith.truncf %67 : vector<256x4xf32> to vector<256x4xbf16>
    %c8 = arith.constant 8 : index
    %c0_71 = arith.constant 0 : index
    %c0_72 = arith.constant 0 : index
    %69 = vector.load %arg2[%c8, %c0_71, %c0_72] : memref<9x4x8xbf16, #tpu.memory_space<vmem>>, vector<1x4x8xbf16>
    %70 = vector.shape_cast %69 : vector<1x4x8xbf16> to vector<4x8xbf16>
    %cst_73 = arith.constant dense<0.000000e+00> : vector<256x8xf32>
    %71 = tpu.matmul %68, %70, %cst_73 {dimension_numbers = #tpu.dot_dimension_numbers<[1], [0], [0], [1], [0, 0, 1, 1], [], []>} : vector<256x4xbf16>, vector<4x8xbf16>, vector<256x8xf32> -> vector<256x8xf32>
    %72 = arith.addf %65, %71 : vector<256x8xf32>
    %73 = arith.truncf %72 : vector<256x8xf32> to vector<256x8xbf16>
    %c0_74 = arith.constant 0 : index
    %c0_75 = arith.constant 0 : index
    %c0_76 = arith.constant 0 : index
    %74 = vector.load %arg3[%c0_74, %c0_75, %c0_76] : memref<1x256x8xbf16, #tpu.memory_space<vmem>>, vector<1x256x8xbf16>
    %75 = vector.shape_cast %74 : vector<1x256x8xbf16> to vector<256x8xbf16>
    %76 = vector.shape_cast %73 : vector<256x8xbf16> to vector<1x256x8xbf16>
    tpu.vector_store %arg3[%c0_74, %c0_75, %c0_76], %76 {strides = array<i32>} : memref<1x256x8xbf16, #tpu.memory_space<vmem>>, vector<1x256x8xbf16>,
    %cst_77 = arith.constant dense<0.000000e+00> : vector<8xf32>
    %77 = vector.multi_reduction <add>, %72, %cst_77 [0] : vector<256x8xf32> to vector<8xf32>
    %78 = vector.shape_cast %77 : vector<8xf32> to vector<1x8xf32>
    %c0_78 = arith.constant 0 : index
    %c0_79 = arith.constant 0 : index
    %c0_80 = arith.constant 0 : index
    %79 = vector.load %arg4[%c0_78, %c0_79, %c0_80] : memref<1x2x8xf32, #tpu.memory_space<vmem>>, vector<1x1x8xf32>
    %80 = vector.shape_cast %79 : vector<1x1x8xf32> to vector<1x8xf32>
    %81 = vector.shape_cast %78 : vector<1x8xf32> to vector<1x1x8xf32>
    tpu.vector_store %arg4[%c0_78, %c0_79, %c0_80], %81 {strides = array<i32>} : memref<1x2x8xf32, #tpu.memory_space<vmem>>, vector<1x1x8xf32>,
    %82 = arith.mulf %72, %72 : vector<256x8xf32>
    %cst_81 = arith.constant dense<0.000000e+00> : vector<8xf32>
    %83 = vector.multi_reduction <add>, %82, %cst_81 [0] : vector<256x8xf32> to vector<8xf32>
    %84 = vector.shape_cast %83 : vector<8xf32> to vector<1x8xf32>
    %c0_82 = arith.constant 0 : index
    %c1_83 = arith.constant 1 : index
    %c0_84 = arith.constant 0 : index
    %85 = vector.load %arg4[%c0_82, %c1_83, %c0_84] : memref<1x2x8xf32, #tpu.memory_space<vmem>>, vector<1x1x8xf32>
    %86 = vector.shape_cast %85 : vector<1x1x8xf32> to vector<1x8xf32>
    %87 = vector.shape_cast %84 : vector<1x8xf32> to vector<1x1x8xf32>
    tpu.vector_store %arg4[%c0_82, %c1_83, %c0_84], %87 {strides = array<i32>} : memref<1x2x8xf32, #tpu.memory_space<vmem>>, vector<1x1x8xf32>,
    return
  }
  func.func @transform_0(%arg0: i32) -> (i32, i32, i32, i32) {
    %c0_i32 = arith.constant 0 : i32
    %c0_i32_0 = arith.constant 0 : i32
    %c0_i32_1 = arith.constant 0 : i32
    %c0_i32_2 = arith.constant 0 : i32
    return %arg0, %c0_i32, %c0_i32_0, %c0_i32_1 : i32, i32, i32, i32
  }
  func.func @transform_1(%arg0: i32) -> (i32, i32, i32) {
    %c0_i32 = arith.constant 0 : i32
    %c0_i32_0 = arith.constant 0 : i32
    %c0_i32_1 = arith.constant 0 : i32
    %c0_i32_2 = arith.constant 0 : i32
    return %c0_i32, %c0_i32_0, %c0_i32_1 : i32, i32, i32
  }
  func.func @transform_2(%arg0: i32) -> (i32, i32, i32) {
    %c0_i32 = arith.constant 0 : i32
    %c0_i32_0 = arith.constant 0 : i32
    %c0_i32_1 = arith.constant 0 : i32
    return %arg0, %c0_i32, %c0_i32_0 : i32, i32, i32
  }
  func.func @transform_3(%arg0: i32) -> (i32, i32, i32) {
    %c0_i32 = arith.constant 0 : i32
    %c0_i32_0 = arith.constant 0 : i32
    %c0_i32_1 = arith.constant 0 : i32
    return %arg0, %c0_i32, %c0_i32_0 : i32, i32, i32
  }
}

</mosaic_0001>

<llo_original>
// kernel: tpu_custom_call.1
$region0: #{tpu_custom_call.1}
  #allocation0 [shape = 'u32[]', space=smem, size = 0x4, offset = 0x4, fixed_abs, tag = 'smem constant byte address 0x4 - core index']
  #allocation1 [shape = 'u32[144,128]{1,0:T(1,128)}', space=vmem, size = 0x12000, scoped, tag = 'internal scratch']
  #allocation2 [shape = 'f32[18,18,4]{2,1,0:T(8,128)}', space=vmem, size = 0x36000, scoped, tag = 'scratch operand']
  %s0 = inlined_call_operand.vmem [shape: f32[2,16,16,4], index: 0, kind: input, shape index: {}]
  %s1 = inlined_call_operand.vmem [shape: bf16[9,4,8], index: 1, kind: input, shape index: {}]
  %s2 = inlined_call_operand.vmem [shape: bf16[2,256,8], index: 2, kind: output, shape index: {0}]
  %s3 = inlined_call_operand.hbm [shape: f32[2,2,8], index: 3, kind: output, shape index: {1}]
  %4 = xla_tuple %s2, %s3
  %s5 = sld [smem:[#allocation0]]
  $region49: #{tpu_custom_call.1} parent=0
    _
  %s7 = ssub.s32 1, %s5
  %s8 = scalar_select 0, %s7, %s5
  $region1: #{tpu_custom_call.1} parent=0
    #allocation3 [shape = 'u8[2048]{0}', space=vmem, size = 0x800, scoped, tag = 'output window, operand 1']
    #allocation4 [shape = 's32[2]{0}', space=sflag, size = 0x8, scoped, tag = 'scoped memory for tpu_custom_call.1']
    %9 = vsyncpa [#allocation4], 0
    %s10 = scalar_lea.sflag [#allocation4], 1
    %11 = vsyncpa %s10, 0
    loop: start=0, step=1, limit=4
    $region2: #{tpu_custom_call.1} parent=1 // loop_pre_header
      _
    $region3: #{tpu_custom_call.1} parent=1 // loop_header
      %s13 = sphi 0, %s17
      %p14 = scmp.ge.s32.totalorder %s13, 4
      %s23 = sphi 0, %s25
      %s26 = sphi 0, %s23
      %s27 = sphi 0, %s26
      %s43 = sphi 0, %s27
      %s47 = sphi 0, %s47
      %s49 = sphi 0, %s47
      %s50 = sphi 0, %s49
      %s64 = sphi 0, %s50
      %s70 = sphi 0, %s72
      %s73 = sphi 0, %s70
      %s74 = sphi 0, %s73
      %s90 = sphi 0, %s74
      %s96 = sphi 0, %s98
      %s99 = sphi 0, %s96
      %s100 = sphi 0, %s99
      %s116 = sphi 0, %s100
    $region4: #{tpu_custom_call.1} parent=1 // loop_header_branch
      %16 = sbr.rel (%p14) target = $region8
    $region5: #{tpu_custom_call.1} parent=1 // loop_body
      %s18 = ssub.s32 %s13, 1
      %s19 = ssub.s32 %s13, 2
      %s20 = sadd.s32 %s13, 1
      %s21 = ssub.s32 %s13, %s20
      %p22 = scmp.eq.s32.totalorder %s21, 0
      %s24 = sadd.s32 %s23, 1
      %s25 = scalar_select %p22, %s23, %s24
      %p28 = pneg %p22
      %p29 = scmp.eq.s32.totalorder %s13, 1
      %p30 = por %p28, %p29
      %p31 = scmp.ne.s32.totalorder %s23, %s26
      %p32 = scmp.eq.s32.totalorder %s13, 0
      %p33 = por %p31, %p32
      %p34 = scmp.ne.s32.totalorder %s23, %s26
      %p35 = scmp.eq.s32.totalorder %s18, 1
      %p36 = por %p34, %p35
      %p37 = scmp.ne.s32.totalorder %s26, %s27
      %p38 = scmp.eq.s32.totalorder %s18, 0
      %p39 = por %p37, %p38
      %p40 = scmp.ne.s32.totalorder %s26, %s27
      %p41 = scmp.eq.s32.totalorder %s19, 1
      %p42 = por %p40, %p41
      %p44 = scmp.ne.s32.totalorder %s27, %s43
      %p45 = scmp.eq.s32.totalorder %s19, 0
      %p46 = por %p44, %p45
      %s48 = sadd.s32 %s47, 1
      %p51 = scmp.eq.s32.totalorder %s13, 1
      %p52 = scmp.ne.s32.totalorder %s47, %s49
      %p53 = scmp.eq.s32.totalorder %s13, 0
      %p54 = por %p52, %p53
      %p55 = scmp.ne.s32.totalorder %s47, %s49
      %p56 = scmp.eq.s32.totalorder %s18, 1
      %p57 = por %p55, %p56
      %p58 = scmp.ne.s32.totalorder %s49, %s50
      %p59 = scmp.eq.s32.totalorder %s18, 0
      %p60 = por %p58, %p59
      %p61 = scmp.ne.s32.totalorder %s49, %s50
      %p62 = scmp.eq.s32.totalorder %s19, 1
      %p63 = por %p61, %p62
      %p65 = scmp.ne.s32.totalorder %s50, %s64
      %p66 = scmp.eq.s32.totalorder %s19, 0
      %p67 = por %p65, %p66
      %s68 = ssub.s32 %s13, %s20
      %p69 = scmp.eq.s32.totalorder %s68, 0
      %s71 = sadd.s32 %s70, 1
      %s72 = scalar_select %p69, %s70, %s71
      %p75 = pneg %p69
      %p76 = scmp.eq.s32.totalorder %s13, 1
      %p77 = por %p75, %p76
      %p78 = scmp.ne.s32.totalorder %s70, %s73
      %p79 = scmp.eq.s32.totalorder %s13, 0
      %p80 = por %p78, %p79
      %p81 = scmp.ne.s32.totalorder %s70, %s73
      %p82 = scmp.eq.s32.totalorder %s18, 1
      %p83 = por %p81, %p82
      %p84 = scmp.ne.s32.totalorder %s73, %s74
      %p85 = scmp.eq.s32.totalorder %s18, 0
      %p86 = por %p84, %p85
      %p87 = scmp.ne.s32.totalorder %s73, %s74
      %p88 = scmp.eq.s32.totalorder %s19, 1
      %p89 = por %p87, %p88
      %p91 = scmp.ne.s32.totalorder %s74, %s90
      %p92 = scmp.eq.s32.totalorder %s19, 0
      %p93 = por %p91, %p92
      %s94 = ssub.s32 %s13, %s20
      %p95 = scmp.eq.s32.totalorder %s94, 0
      %s97 = sadd.s32 %s96, 1
      %s98 = scalar_select %p95, %s96, %s97
      %p101 = pneg %p95
      %p102 = scmp.eq.s32.totalorder %s13, 1
      %p103 = por %p101, %p102
      %p104 = scmp.ne.s32.totalorder %s96, %s99
      %p105 = scmp.eq.s32.totalorder %s13, 0
      %p106 = por %p104, %p105
      %p107 = scmp.ne.s32.totalorder %s96, %s99
      %p108 = scmp.eq.s32.totalorder %s18, 1
      %p109 = por %p107, %p108
      %p110 = scmp.ne.s32.totalorder %s99, %s100
      %p111 = scmp.eq.s32.totalorder %s18, 0
      %p112 = por %p110, %p111
      %p113 = scmp.ne.s32.totalorder %s99, %s100
      %p114 = scmp.eq.s32.totalorder %s19, 1
      %p115 = por %p113, %p114
      %p117 = scmp.ne.s32.totalorder %s100, %s116
      %p118 = scmp.eq.s32.totalorder %s19, 0
      %p119 = por %p117, %p118
      %p120 = scmp.le.s32.totalorder 1, %s13
      %p121 = scmp.lt.s32.totalorder %s13, 3
      %p122 = pnand %p120, %p121
      %p123 = pneg %p122
      // Predicated region
      $region9: #{tpu_custom_call.1} parent=5 // pred_check
        _
      $region10: #{tpu_custom_call.1} parent=5 // pred_check_branch
        %125 = sbr.rel (%p122) target = $region12
      $region11: #{tpu_custom_call.1} parent=5 // pred_region
        %s126 = ssub.s32 %s13, 1
        // Predicated region
        $region13: #{tpu_custom_call.1} parent=11 // pred_check
          %p127 = pneg %p60
        $region14: #{tpu_custom_call.1} parent=11 // pred_check_branch
          %129 = sbr.rel (%p127) target = $region16
        $region15: #{tpu_custom_call.1} parent=11 // pred_region
          _
        $region16: #{tpu_custom_call.1} parent=11 // pred_fallthru
          _
      $region12: #{tpu_custom_call.1} parent=5 // pred_fallthru
        _
      %p130 = scmp.lt.s32.totalorder %s13, 2
      // Predicated region
      $region17: #{tpu_custom_call.1} parent=5 // pred_check
        %p131 = pneg %p130
      $region18: #{tpu_custom_call.1} parent=5 // pred_check_branch
        %133 = sbr.rel (%p131) target = $region20
      $region19: #{tpu_custom_call.1} parent=5 // pred_region
        // Predicated region
        $region21: #{tpu_custom_call.1} parent=19 // pred_check
          %p134 = pneg %p33
        $region22: #{tpu_custom_call.1} parent=19 // pred_check_branch
          %136 = sbr.rel (%p134) target = $region24
        $region23: #{tpu_custom_call.1} parent=19 // pred_region
          %p137 = scmp.lt.s32.totalorder %s13, 1
          %s138 = scalar_select %p137, %s13, 1
          %s139 = smul.addr %s138, 32
          %s140 = smul.addr %s139, 8
          %s141 = scalar_lea.vmem %s0, %s140
        $region24: #{tpu_custom_call.1} parent=19 // pred_fallthru
          _
      $region20: #{tpu_custom_call.1} parent=5 // pred_fallthru
        _
      %p142 = scmp.le.s32.totalorder 1, %s13
      %p143 = scmp.lt.s32.totalorder %s13, 3
      %p144 = pnand %p142, %p143
      %p145 = pneg %p144
      // Predicated region
      $region25: #{tpu_custom_call.1} parent=5 // pred_check
        _
      $region26: #{tpu_custom_call.1} parent=5 // pred_check_branch
        %147 = sbr.rel (%p144) target = $region28
      $region27: #{tpu_custom_call.1} parent=5 // pred_region
        %s148 = ssub.s32 %s13, 1
        %p149 = scmp.lt.s32.totalorder %s18, 1
        %s150 = scalar_select %p149, %s18, 1
        %s151 = smul.addr %s150, 32
        %s152 = smul.addr %s151, 8
        %s153 = scalar_lea.vmem %s0, %s152
        %p154 = pneg %p39
        %p155 = pneg %p36
        %p156 = pneg %p60
        %p157 = pneg %p57
        %p158 = pneg %p86
        %p159 = pneg %p83
        %p160 = scmp.lt.s32.totalorder %s18, 1
        %s161 = scalar_select %p160, %s18, 1
        %s162 = smul.addr %s161, 32
        %s163 = smul.addr %s162, 4
        %s164 = scalar_lea.vmem %s2, %s163
        %p165 = pneg %p112
        %p166 = pneg %p109
        %s167 = sand.u32 %s99, 1
        %s168 = scalar_lea.sflag [#allocation4], %s167
        %s169 = sand.u32 %s99, 1
        %s170 = smul.addr %s169, 2
        %s171 = scalar_lea.vmem [#allocation3], %s170
        %p172 = scmp.lt.s32.totalorder %s18, 1
        %s173 = scalar_select %p172, %s18, 1
        %s174 = smul.addr %s173, 32
        %s175 = smul.addr %s174, 8
        %s176 = scalar_lea.vmem %s0, %s175
        %p177 = scmp.lt.s32.totalorder %s18, 1
        %s178 = scalar_select %p177, %s18, 1
        %s179 = smul.addr %s178, 32
        %s180 = smul.addr %s179, 4
        %s181 = scalar_lea.vmem %s2, %s180
        %vm183 = vcmask 31744
        %184 = vst.msk [vmem:[#allocation2] sm:$0xff] %vm183, 0.0
        %185 = vst.msk [vmem:[#allocation2 + $0x8] sm:$0xff] %vm183, 0.0
        %vm186 = vcmask 25600
        %187 = vst.msk [vmem:[#allocation2 + $0x10] sm:$0x3] %vm186, 0.0
        %s188 = scalar_lea.vmem [#allocation2], 408
        %189 = vst.msk [vmem:[%s188] sm:$0xff] %vm183, 0.0
        %190 = vst.msk [vmem:[%s188 + $0x8] sm:$0xff] %vm183, 0.0
        %191 = vst.msk [vmem:[%s188 + $0x10] sm:$0x3] %vm186, 0.0
        %vm192 = vcmask 24576
        %193 = vst.msk [vmem:[#allocation2] sm:$0x1] %vm192, 0.0
        %194 = vst.msk [vmem:[#allocation2 + $0x18] sm:$0x1] %vm192, 0.0
        %195 = vst.msk [vmem:[#allocation2 + $0x30] sm:$0x1] %vm192, 0.0
        %196 = vst.msk [vmem:[#allocation2 + $0x48] sm:$0x1] %vm192, 0.0
        %197 = vst.msk [vmem:[#allocation2 + $0x60] sm:$0x1] %vm192, 0.0
        %198 = vst.msk [vmem:[#allocation2 + $0x78] sm:$0x1] %vm192, 0.0
        %199 = vst.msk [vmem:[#allocation2 + $0x90] sm:$0x1] %vm192, 0.0
        %200 = vst.msk [vmem:[#allocation2 + $0xa8] sm:$0x1] %vm192, 0.0
        %201 = vst.msk [vmem:[#allocation2 + $0xc0] sm:$0x1] %vm192, 0.0
        %202 = vst.msk [vmem:[#allocation2 + $0xd8] sm:$0x1] %vm192, 0.0
        %203 = vst.msk [vmem:[#allocation2 + $0xf0] sm:$0x1] %vm192, 0.0
        %204 = vst.msk [vmem:[#allocation2 + $0x108] sm:$0x1] %vm192, 0.0
        %205 = vst.msk [vmem:[#allocation2 + $0x120] sm:$0x1] %vm192, 0.0
        %206 = vst.msk [vmem:[#allocation2 + $0x138] sm:$0x1] %vm192, 0.0
        %207 = vst.msk [vmem:[#allocation2 + $0x150] sm:$0x1] %vm192, 0.0
        %208 = vst.msk [vmem:[#allocation2 + $0x168] sm:$0x1] %vm192, 0.0
        %209 = vst.msk [vmem:[#allocation2 + $0x180] sm:$0x1] %vm192, 0.0
        %210 = vst.msk [vmem:[#allocation2 + $0x198] sm:$0x1] %vm192, 0.0
        %211 = vst.msk [vmem:[#allocation2 + $0x11] sm:$0x1] %vm192, 0.0
        %212 = vst.msk [vmem:[#allocation2 + $0x29] sm:$0x1] %vm192, 0.0
        %213 = vst.msk [vmem:[#allocation2 + $0x41] sm:$0x1] %vm192, 0.0
        %214 = vst.msk [vmem:[#allocation2 + $0x59] sm:$0x1] %vm192, 0.0
        %215 = vst.msk [vmem:[#allocation2 + $0x71] sm:$0x1] %vm192, 0.0
        %216 = vst.msk [vmem:[#allocation2 + $0x89] sm:$0x1] %vm192, 0.0
        %217 = vst.msk [vmem:[#allocation2 + $0xa1] sm:$0x1] %vm192, 0.0
        %218 = vst.msk [vmem:[#allocation2 + $0xb9] sm:$0x1] %vm192, 0.0
        %219 = vst.msk [vmem:[#allocation2 + $0xd1] sm:$0x1] %vm192, 0.0
        %220 = vst.msk [vmem:[#allocation2 + $0xe9] sm:$0x1] %vm192, 0.0
        %221 = vst.msk [vmem:[#allocation2 + $0x101] sm:$0x1] %vm192, 0.0
        %222 = vst.msk [vmem:[#allocation2 + $0x119] sm:$0x1] %vm192, 0.0
        %223 = vst.msk [vmem:[#allocation2 + $0x131] sm:$0x1] %vm192, 0.0
        %224 = vst.msk [vmem:[#allocation2 + $0x149] sm:$0x1] %vm192, 0.0
        %225 = vst.msk [vmem:[#allocation2 + $0x161] sm:$0x1] %vm192, 0.0
        %226 = vst.msk [vmem:[#allocation2 + $0x179] sm:$0x1] %vm192, 0.0
        %227 = vst.msk [vmem:[#allocation2 + $0x191] sm:$0x1] %vm192, 0.0
        %228 = vst.msk [vmem:[#allocation2 + $0x1a9] sm:$0x1] %vm192, 0.0
        %v229 = vld [vmem:[%s176] sm:$0xff]
        %v230 = vld [vmem:[%s176 + $0x8] sm:$0xff]
        %v231 = vld [vmem:[%s176 + $0x10] sm:$0xff]
        %v232 = vld [vmem:[%s176 + $0x18] sm:$0xff]
        %v233 = vld [vmem:[%s176 + $0x20] sm:$0xff]
        %v234 = vld [vmem:[%s176 + $0x28] sm:$0xff]
        %v235 = vld [vmem:[%s176 + $0x30] sm:$0xff]
        %v236 = vld [vmem:[%s176 + $0x38] sm:$0xff]
        %v237 = vld [vmem:[%s176 + $0x40] sm:$0xff]
        %v238 = vld [vmem:[%s176 + $0x48] sm:$0xff]
        %v239 = vld [vmem:[%s176 + $0x50] sm:$0xff]
        %v240 = vld [vmem:[%s176 + $0x58] sm:$0xff]
        %v241 = vld [vmem:[%s176 + $0x60] sm:$0xff]
        %v242 = vld [vmem:[%s176 + $0x68] sm:$0xff]
        %v243 = vld [vmem:[%s176 + $0x70] sm:$0xff]
        %v244 = vld [vmem:[%s176 + $0x78] sm:$0xff]
        %v245 = vld [vmem:[%s176 + $0x80] sm:$0xff]
        %v246 = vld [vmem:[%s176 + $0x88] sm:$0xff]
        %v247 = vld [vmem:[%s176 + $0x90] sm:$0xff]
        %v248 = vld [vmem:[%s176 + $0x98] sm:$0xff]
        %v249 = vld [vmem:[%s176 + $0xa0] sm:$0xff]
        %v250 = vld [vmem:[%s176 + $0xa8] sm:$0xff]
        %v251 = vld [vmem:[%s176 + $0xb0] sm:$0xff]
        %v252 = vld [vmem:[%s176 + $0xb8] sm:$0xff]
        %v253 = vld [vmem:[%s176 + $0xc0] sm:$0xff]
        %v254 = vld [vmem:[%s176 + $0xc8] sm:$0xff]
        %v255 = vld [vmem:[%s176 + $0xd0] sm:$0xff]
        %v256 = vld [vmem:[%s176 + $0xd8] sm:$0xff]
        %v257 = vld [vmem:[%s176 + $0xe0] sm:$0xff]
        %v258 = vld [vmem:[%s176 + $0xe8] sm:$0xff]
        %v259 = vld [vmem:[%s176 + $0xf0] sm:$0xff]
        %v260 = vld [vmem:[%s176 + $0xf8] sm:$0xff]
        %s261 = scalar_lea.vmem [#allocation2], 24
        %262 = vst.msk [vmem:[%s261 + $0x1] sm:$0xff] %vm183, %v229
        %263 = vst.msk [vmem:[%s261 + $0x9] sm:$0xff] %vm183, %v230
        %264 = vst.msk [vmem:[%s261 + $0x19] sm:$0xff] %vm183, %v231
        %265 = vst.msk [vmem:[%s261 + $0x21] sm:$0xff] %vm183, %v232
        %266 = vst.msk [vmem:[%s261 + $0x31] sm:$0xff] %vm183, %v233
        %267 = vst.msk [vmem:[%s261 + $0x39] sm:$0xff] %vm183, %v234
        %268 = vst.msk [vmem:[%s261 + $0x49] sm:$0xff] %vm183, %v235
        %269 = vst.msk [vmem:[%s261 + $0x51] sm:$0xff] %vm183, %v236
        %270 = vst.msk [vmem:[%s261 + $0x61] sm:$0xff] %vm183, %v237
        %271 = vst.msk [vmem:[%s261 + $0x69] sm:$0xff] %vm183, %v238
        %272 = vst.msk [vmem:[%s261 + $0x79] sm:$0xff] %vm183, %v239
        %273 = vst.msk [vmem:[%s261 + $0x81] sm:$0xff] %vm183, %v240
        %274 = vst.msk [vmem:[%s261 + $0x91] sm:$0xff] %vm183, %v241
        %275 = vst.msk [vmem:[%s261 + $0x99] sm:$0xff] %vm183, %v242
        %276 = vst.msk [vmem:[%s261 + $0xa9] sm:$0xff] %vm183, %v243
        %277 = vst.msk [vmem:[%s261 + $0xb1] sm:$0xff] %vm183, %v244
        %278 = vst.msk [vmem:[%s261 + $0xc1] sm:$0xff] %vm183, %v245
        %279 = vst.msk [vmem:[%s261 + $0xc9] sm:$0xff] %vm183, %v246
        %280 = vst.msk [vmem:[%s261 + $0xd9] sm:$0xff] %vm183, %v247
        %281 = vst.msk [vmem:[%s261 + $0xe1] sm:$0xff] %vm183, %v248
        %282 = vst.msk [vmem:[%s261 + $0xf1] sm:$0xff] %vm183, %v249
        %283 = vst.msk [vmem:[%s261 + $0xf9] sm:$0xff] %vm183, %v250
        %284 = vst.msk [vmem:[%s261 + $0x109] sm:$0xff] %vm183, %v251
        %285 = vst.msk [vmem:[%s261 + $0x111] sm:$0xff] %vm183, %v252
        %286 = vst.msk [vmem:[%s261 + $0x121] sm:$0xff] %vm183, %v253
        %287 = vst.msk [vmem:[%s261 + $0x129] sm:$0xff] %vm183, %v254
        %288 = vst.msk [vmem:[%s261 + $0x139] sm:$0xff] %vm183, %v255
        %289 = vst.msk [vmem:[%s261 + $0x141] sm:$0xff] %vm183, %v256
        %290 = vst.msk [vmem:[%s261 + $0x151] sm:$0xff] %vm183, %v257
        %291 = vst.msk [vmem:[%s261 + $0x159] sm:$0xff] %vm183, %v258
        %292 = vst.msk [vmem:[%s261 + $0x169] sm:$0xff] %vm183, %v259
        %293 = vst.msk [vmem:[%s261 + $0x171] sm:$0xff] %vm183, %v260
        %v294 = vld [vmem:[#allocation2] sm:$0xff]
        %v295 = vld [vmem:[#allocation2 + $0x8] sm:$0xff]
        %v296 = vld [vmem:[#allocation2 + $0x18] sm:$0xff]
        %v297 = vld [vmem:[#allocation2 + $0x20] sm:$0xff]
        %v298 = vld [vmem:[#allocation2 + $0x30] sm:$0xff]
        %v299 = vld [vmem:[#allocation2 + $0x38] sm:$0xff]
        %v300 = vld [vmem:[#allocation2 + $0x48] sm:$0xff]
        %v301 = vld [vmem:[#allocation2 + $0x50] sm:$0xff]
        %v302 = vld [vmem:[#allocation2 + $0x60] sm:$0xff]
        %v303 = vld [vmem:[#allocation2 + $0x68] sm:$0xff]
        %v304 = vld [vmem:[#allocation2 + $0x78] sm:$0xff]
        %v305 = vld [vmem:[#allocation2 + $0x80] sm:$0xff]
        %v306 = vld [vmem:[#allocation2 + $0x90] sm:$0xff]
        %v307 = vld [vmem:[#allocation2 + $0x98] sm:$0xff]
        %v308 = vld [vmem:[#allocation2 + $0xa8] sm:$0xff]
        %v309 = vld [vmem:[#allocation2 + $0xb0] sm:$0xff]
        %v310 = vld [vmem:[#allocation2 + $0xc0] sm:$0xff]
        %v311 = vld [vmem:[#allocation2 + $0xc8] sm:$0xff]
        %v312 = vld [vmem:[#allocation2 + $0xd8] sm:$0xff]
        %v313 = vld [vmem:[#allocation2 + $0xe0] sm:$0xff]
        %v314 = vld [vmem:[#allocation2 + $0xf0] sm:$0xff]
        %v315 = vld [vmem:[#allocation2 + $0xf8] sm:$0xff]
        %v316 = vld [vmem:[#allocation2 + $0x108] sm:$0xff]
        %v317 = vld [vmem:[#allocation2 + $0x110] sm:$0xff]
        %v318 = vld [vmem:[#allocation2 + $0x120] sm:$0xff]
        %v319 = vld [vmem:[#allocation2 + $0x128] sm:$0xff]
        %v320 = vld [vmem:[#allocation2 + $0x138] sm:$0xff]
        %v321 = vld [vmem:[#allocation2 + $0x140] sm:$0xff]
        %v322 = vld [vmem:[#allocation2 + $0x150] sm:$0xff]
        %v323 = vld [vmem:[#allocation2 + $0x158] sm:$0xff]
        %v324 = vld [vmem:[#allocation2 + $0x168] sm:$0xff]
        %v325 = vld [vmem:[#allocation2 + $0x170] sm:$0xff]
        %v326 = vpack.c.bf16 %v295, %v294
        %v327 = vpack.c.bf16 %v297, %v296
        %v328 = vpack.c.bf16 %v299, %v298
        %v329 = vpack.c.bf16 %v301, %v300
        %v330 = vpack.c.bf16 %v303, %v302
        %v331 = vpack.c.bf16 %v305, %v304
        %v332 = vpack.c.bf16 %v307, %v306
        %v333 = vpack.c.bf16 %v309, %v308
        %v334 = vpack.c.bf16 %v311, %v310
        %v335 = vpack.c.bf16 %v313, %v312
        %v336 = vpack.c.bf16 %v315, %v314
        %v337 = vpack.c.bf16 %v317, %v316
        %v338 = vpack.c.bf16 %v319, %v318
        %v339 = vpack.c.bf16 %v321, %v320
        %v340 = vpack.c.bf16 %v323, %v322
        %v341 = vpack.c.bf16 %v325, %v324
        %v342 = vld [vmem:[%s1] sm:$0x3]
        %v343 = vld [vmem:[#allocation2 + $0x1] sm:$0xff]
        %v344 = vld [vmem:[#allocation2 + $0x9] sm:$0xff]
        %v345 = vld [vmem:[#allocation2 + $0x19] sm:$0xff]
        %v346 = vld [vmem:[#allocation2 + $0x21] sm:$0xff]
        %v347 = vld [vmem:[#allocation2 + $0x31] sm:$0xff]
        %v348 = vld [vmem:[#allocation2 + $0x39] sm:$0xff]
        %v349 = vld [vmem:[#allocation2 + $0x49] sm:$0xff]
        %v350 = vld [vmem:[#allocation2 + $0x51] sm:$0xff]
        %v351 = vld [vmem:[#allocation2 + $0x61] sm:$0xff]
        %v352 = vld [vmem:[#allocation2 + $0x69] sm:$0xff]
        %v353 = vld [vmem:[#allocation2 + $0x79] sm:$0xff]
        %v354 = vld [vmem:[#allocation2 + $0x81] sm:$0xff]
        %v355 = vld [vmem:[#allocation2 + $0x91] sm:$0xff]
        %v356 = vld [vmem:[#allocation2 + $0x99] sm:$0xff]
        %v357 = vld [vmem:[#allocation2 + $0xa9] sm:$0xff]
        %v358 = vld [vmem:[#allocation2 + $0xb1] sm:$0xff]
        %v359 = vld [vmem:[#allocation2 + $0xc1] sm:$0xff]
        %v360 = vld [vmem:[#allocation2 + $0xc9] sm:$0xff]
        %v361 = vld [vmem:[#allocation2 + $0xd9] sm:$0xff]
        %v362 = vld [vmem:[#allocation2 + $0xe1] sm:$0xff]
        %v363 = vld [vmem:[#allocation2 + $0xf1] sm:$0xff]
        %v364 = vld [vmem:[#allocation2 + $0xf9] sm:$0xff]
        %v365 = vld [vmem:[#allocation2 + $0x109] sm:$0xff]
        %v366 = vld [vmem:[#allocation2 + $0x111] sm:$0xff]
        %v367 = vld [vmem:[#allocation2 + $0x121] sm:$0xff]
        %v368 = vld [vmem:[#allocation2 + $0x129] sm:$0xff]
        %v369 = vld [vmem:[#allocation2 + $0x139] sm:$0xff]
        %v370 = vld [vmem:[#allocation2 + $0x141] sm:$0xff]
        %v371 = vld [vmem:[#allocation2 + $0x151] sm:$0xff]
        %v372 = vld [vmem:[#allocation2 + $0x159] sm:$0xff]
        %v373 = vld [vmem:[#allocation2 + $0x169] sm:$0xff]
        %v374 = vld [vmem:[#allocation2 + $0x171] sm:$0xff]
        %v375 = vpack.c.bf16 %v344, %v343
        %v376 = vpack.c.bf16 %v346, %v345
        %v377 = vpack.c.bf16 %v348, %v347
        %v378 = vpack.c.bf16 %v350, %v349
        %v379 = vpack.c.bf16 %v352, %v351
        %v380 = vpack.c.bf16 %v354, %v353
        %v381 = vpack.c.bf16 %v356, %v355
        %v382 = vpack.c.bf16 %v358, %v357
        %v383 = vpack.c.bf16 %v360, %v359
        %v384 = vpack.c.bf16 %v362, %v361
        %v385 = vpack.c.bf16 %v364, %v363
        %v386 = vpack.c.bf16 %v366, %v365
        %v387 = vpack.c.bf16 %v368, %v367
        %v388 = vpack.c.bf16 %v370, %v369
        %v389 = vpack.c.bf16 %v372, %v371
        %v390 = vpack.c.bf16 %v374, %v373
        %s391 = scalar_lea.vmem %s1, 2
        %v392 = vld [vmem:[%s391] sm:$0x3]
        %v394 = vsel %vm183, %v375, 0
        %v397 = vsel %vm183, %v376, 0
        %v400 = vsel %vm183, %v377, 0
        %v403 = vsel %vm183, %v378, 0
        %v406 = vsel %vm183, %v379, 0
        %v409 = vsel %vm183, %v380, 0
        %v412 = vsel %vm183, %v381, 0
        %v415 = vsel %vm183, %v382, 0
        %v418 = vsel %vm183, %v383, 0
        %v421 = vsel %vm183, %v384, 0
        %v424 = vsel %vm183, %v385, 0
        %v427 = vsel %vm183, %v386, 0
        %v430 = vsel %vm183, %v387, 0
        %v433 = vsel %vm183, %v388, 0
        %v436 = vsel %vm183, %v389, 0
        %v439 = vsel %vm183, %v390, 0
        %vm441 = vcmask 1041408
        %v443 = vsel %vm441, %v392, 0
        %445 = vmatprep.subr.bf16.mxu0 0
        %446 = vmatpush1.bf16.msra.mxu0 %v443
        %447 = vmatprep.subr.bf16.mxu0 0
        %448 = vmatpush1.bf16.msra.mxu0 0
        %449 = vmatprep.subr.bf16.mxu0 0
        %450 = vmatpush1.bf16.msra.mxu0 0
        %451 = vmatprep.subr.bf16.mxu0 0
        %452 = vmatpush1.bf16.msra.mxu0 0
        %453 = vmatprep.subr.bf16.mxu0 0
        %454 = vmatpush1.bf16.msra.mxu0 0
        %455 = vmatprep.subr.bf16.mxu0 0
        %456 = vmatpush1.bf16.msra.mxu0 0
        %457 = vmatprep.subr.bf16.mxu0 0
        %458 = vmatpush1.bf16.msra.mxu0 0
        %459 = vmatprep.subr.bf16.mxu0 0
        %460 = vmatpush1.bf16.msra.mxu0 0
        %461 = vmatprep.subr.bf16.mxu0 0
        %462 = vmatpush1.bf16.msra.mxu0 0
        %463 = vmatprep.subr.bf16.mxu0 0
        %464 = vmatpush1.bf16.msra.mxu0 0
        %465 = vmatprep.subr.bf16.mxu0 0
        %466 = vmatpush1.bf16.msra.mxu0 0
        %467 = vmatprep.subr.bf16.mxu0 0
        %468 = vmatpush1.bf16.msra.mxu0 0
        %469 = vmatprep.subr.bf16.mxu0 0
        %470 = vmatpush1.bf16.msra.mxu0 0
        %471 = vmatprep.subr.bf16.mxu0 0
        %472 = vmatpush1.bf16.msra.mxu0 0
        %473 = vmatprep.subr.bf16.mxu0 0
        %474 = vmatpush1.bf16.msra.mxu0 0
        %475 = vmatprep.subr.bf16.mxu0 0
        %476 = vmatpush1.bf16.msra.mxu0 0
        %477 = vmatprep.mubr.bf16.mxu0 0
        %478 = vmatmul.mubr.bf16.gmra.mrb[0].mxu0 %v394
        %v479 = vpop.f32.mrb[0].mxu0
        %v480 = vadd.f32 0.0, %v479
        %v481 = vpop.f32.mrb[0].mxu0
        %v482 = vpop.f32.mrb[0].mxu0
        %v483 = vadd.f32 0.0, %v482
        %v484 = vpop.f32.mrb[0].mxu0
        %485 = vmatprep.mubr.bf16.mxu0 0
        %486 = vmatmul.mubr.bf16.gmra.mrb[0].mxu0 %v397
        %v487 = vpop.f32.mrb[0].mxu0
        %v488 = vadd.f32 0.0, %v487
        %v489 = vpop.f32.mrb[0].mxu0
        %v490 = vpop.f32.mrb[0].mxu0
        %v491 = vadd.f32 0.0, %v490
        %v492 = vpop.f32.mrb[0].mxu0
        %493 = vmatprep.mubr.bf16.mxu0 0
        %494 = vmatmul.mubr.bf16.gmra.mrb[0].mxu0 %v400
        %v495 = vpop.f32.mrb[0].mxu0
        %v496 = vadd.f32 0.0, %v495
        %v497 = vpop.f32.mrb[0].mxu0
        %v498 = vpop.f32.mrb[0].mxu0
        %v499 = vadd.f32 0.0, %v498
        %v500 = vpop.f32.mrb[0].mxu0
        %501 = vmatprep.mubr.bf16.mxu0 0
        %502 = vmatmul.mubr.bf16.gmra.mrb[0].mxu0 %v403
        %v503 = vpop.f32.mrb[0].mxu0
        %v504 = vadd.f32 0.0, %v503
        %v505 = vpop.f32.mrb[0].mxu0
        %v506 = vpop.f32.mrb[0].mxu0
        %v507 = vadd.f32 0.0, %v506
        %v508 = vpop.f32.mrb[0].mxu0
        %509 = vmatprep.mubr.bf16.mxu0 0
        %510 = vmatmul.mubr.bf16.gmra.mrb[0].mxu0 %v406
        %v511 = vpop.f32.mrb[0].mxu0
        %v512 = vadd.f32 0.0, %v511
        %v513 = vpop.f32.mrb[0].mxu0
        %v514 = vpop.f32.mrb[0].mxu0
        %v515 = vadd.f32 0.0, %v514
        %v516 = vpop.f32.mrb[0].mxu0
        %517 = vmatprep.mubr.bf16.mxu0 0
        %518 = vmatmul.mubr.bf16.gmra.mrb[0].mxu0 %v409
        %v519 = vpop.f32.mrb[0].mxu0
        %v520 = vadd.f32 0.0, %v519
        %v521 = vpop.f32.mrb[0].mxu0
        %v522 = vpop.f32.mrb[0].mxu0
        %v523 = vadd.f32 0.0, %v522
        %v524 = vpop.f32.mrb[0].mxu0
        %525 = vmatprep.mubr.bf16.mxu0 0
        %526 = vmatmul.mubr.bf16.gmra.mrb[0].mxu0 %v412
        %v527 = vpop.f32.mrb[0].mxu0
        %v528 = vadd.f32 0.0, %v527
        %v529 = vpop.f32.mrb[0].mxu0
        %v530 = vpop.f32.mrb[0].mxu0
        %v531 = vadd.f32 0.0, %v530
        %v532 = vpop.f32.mrb[0].mxu0
        %533 = vmatprep.mubr.bf16.mxu0 0
        %534 = vmatmul.mubr.bf16.gmra.mrb[0].mxu0 %v415
        %v535 = vpop.f32.mrb[0].mxu0
        %v536 = vadd.f32 0.0, %v535
        %v537 = vpop.f32.mrb[0].mxu0
        %v538 = vpop.f32.mrb[0].mxu0
        %v539 = vadd.f32 0.0, %v538
        %v540 = vpop.f32.mrb[0].mxu0
        %541 = vmatprep.mubr.bf16.mxu0 0
        %542 = vmatmul.mubr.bf16.gmra.mrb[0].mxu0 %v418
        %v543 = vpop.f32.mrb[0].mxu0
        %v544 = vadd.f32 0.0, %v543
        %v545 = vpop.f32.mrb[0].mxu0
        %v546 = vpop.f32.mrb[0].mxu0
        %v547 = vadd.f32 0.0, %v546
        %v548 = vpop.f32.mrb[0].mxu0
        %549 = vmatprep.mubr.bf16.mxu0 0
        %550 = vmatmul.mubr.bf16.gmra.mrb[0].mxu0 %v421
        %v551 = vpop.f32.mrb[0].mxu0
        %v552 = vadd.f32 0.0, %v551
        %v553 = vpop.f32.mrb[0].mxu0
        %v554 = vpop.f32.mrb[0].mxu0
        %v555 = vadd.f32 0.0, %v554
        %v556 = vpop.f32.mrb[0].mxu0
        %557 = vmatprep.mubr.bf16.mxu0 0
        %558 = vmatmul.mubr.bf16.gmra.mrb[0].mxu0 %v424
        %v559 = vpop.f32.mrb[0].mxu0
        %v560 = vadd.f32 0.0, %v559
        %v561 = vpop.f32.mrb[0].mxu0
        %v562 = vpop.f32.mrb[0].mxu0
        %v563 = vadd.f32 0.0, %v562
        %v564 = vpop.f32.mrb[0].mxu0
        %565 = vmatprep.mubr.bf16.mxu0 0
        %566 = vmatmul.mubr.bf16.gmra.mrb[0].mxu0 %v427
        %v567 = vpop.f32.mrb[0].mxu0
        %v568 = vadd.f32 0.0, %v567
        %v569 = vpop.f32.mrb[0].mxu0
        %v570 = vpop.f32.mrb[0].mxu0
        %v571 = vadd.f32 0.0, %v570
        %v572 = vpop.f32.mrb[0].mxu0
        %573 = vmatprep.mubr.bf16.mxu0 0
        %574 = vmatmul.mubr.bf16.gmra.mrb[0].mxu0 %v430
        %v575 = vpop.f32.mrb[0].mxu0
        %v576 = vadd.f32 0.0, %v575
        %v577 = vpop.f32.mrb[0].mxu0
        %v578 = vpop.f32.mrb[0].mxu0
        %v579 = vadd.f32 0.0, %v578
        %v580 = vpop.f32.mrb[0].mxu0
        %581 = vmatprep.mubr.bf16.mxu0 0
        %582 = vmatmul.mubr.bf16.gmra.mrb[0].mxu0 %v433
        %v583 = vpop.f32.mrb[0].mxu0
        %v584 = vadd.f32 0.0, %v583
        %v585 = vpop.f32.mrb[0].mxu0
        %v586 = vpop.f32.mrb[0].mxu0
        %v587 = vadd.f32 0.0, %v586
        %v588 = vpop.f32.mrb[0].mxu0
        %589 = vmatprep.mubr.bf16.mxu0 0
        %590 = vmatmul.mubr.bf16.gmra.mrb[0].mxu0 %v436
        %v591 = vpop.f32.mrb[0].mxu0
        %v592 = vadd.f32 0.0, %v591
        %v593 = vpop.f32.mrb[0].mxu0
        %v594 = vpop.f32.mrb[0].mxu0
        %v595 = vadd.f32 0.0, %v594
        %v596 = vpop.f32.mrb[0].mxu0
        %597 = vmatprep.mubr.bf16.mxu0 0
        %598 = vmatmul.mubr.bf16.gmra.mrb[0].mxu0 %v439
        %v599 = vpop.f32.mrb[0].mxu0
        %v600 = vadd.f32 0.0, %v599
        %v601 = vpop.f32.mrb[0].mxu0
        %v602 = vpop.f32.mrb[0].mxu0
        %v603 = vadd.f32 0.0, %v602
        %v604 = vpop.f32.mrb[0].mxu0
        %605 = vdwg.mxu0
        %v607 = vsel %vm183, %v326, 0
        %v610 = vsel %vm183, %v327, 0
        %v613 = vsel %vm183, %v328, 0
        %v616 = vsel %vm183, %v329, 0
        %v619 = vsel %vm183, %v330, 0
        %v622 = vsel %vm183, %v331, 0
        %v625 = vsel %vm183, %v332, 0
        %v628 = vsel %vm183, %v333, 0
        %v631 = vsel %vm183, %v334, 0
        %v634 = vsel %vm183, %v335, 0
        %v637 = vsel %vm183, %v336, 0
        %v640 = vsel %vm183, %v337, 0
        %v643 = vsel %vm183, %v338, 0
        %v646 = vsel %vm183, %v339, 0
        %v649 = vsel %vm183, %v340, 0
        %v652 = vsel %vm183, %v341, 0
        %v655 = vsel %vm441, %v342, 0
        %657 = vmatprep.subr.bf16.mxu0 0
        %658 = vmatpush1.bf16.msra.mxu0 %v655
        %659 = vmatprep.subr.bf16.mxu0 0
        %660 = vmatpush1.bf16.msra.mxu0 0
        %661 = vmatprep.subr.bf16.mxu0 0
        %662 = vmatpush1.bf16.msra.mxu0 0
        %663 = vmatprep.subr.bf16.mxu0 0
        %664 = vmatpush1.bf16.msra.mxu0 0
        %665 = vmatprep.subr.bf16.mxu0 0
        %666 = vmatpush1.bf16.msra.mxu0 0
        %667 = vmatprep.subr.bf16.mxu0 0
        %668 = vmatpush1.bf16.msra.mxu0 0
        %669 = vmatprep.subr.bf16.mxu0 0
        %670 = vmatpush1.bf16.msra.mxu0 0
        %671 = vmatprep.subr.bf16.mxu0 0
        %672 = vmatpush1.bf16.msra.mxu0 0
        %673 = vmatprep.subr.bf16.mxu0 0
        %674 = vmatpush1.bf16.msra.mxu0 0
        %675 = vmatprep.subr.bf16.mxu0 0
        %676 = vmatpush1.bf16.msra.mxu0 0
        %677 = vmatprep.subr.bf16.mxu0 0
        %678 = vmatpush1.bf16.msra.mxu0 0
        %679 = vmatprep.subr.bf16.mxu0 0
        %680 = vmatpush1.bf16.msra.mxu0 0
        %681 = vmatprep.subr.bf16.mxu0 0
        %682 = vmatpush1.bf16.msra.mxu0 0
        %683 = vmatprep.subr.bf16.mxu0 0
        %684 = vmatpush1.bf16.msra.mxu0 0
        %685 = vmatprep.subr.bf16.mxu0 0
        %686 = vmatpush1.bf16.msra.mxu0 0
        %687 = vmatprep.subr.bf16.mxu0 0
        %688 = vmatpush1.bf16.msra.mxu0 0
        %689 = vmatprep.mubr.bf16.mxu0 0
        %690 = vmatmul.mubr.bf16.gmra.mrb[0].mxu0 %v607
        %v691 = vpop.f32.mrb[0].mxu0
        %v692 = vadd.f32 %v480, %v691
        %v693 = vpop.f32.mrb[0].mxu0
        %v694 = vpop.f32.mrb[0].mxu0
        %v695 = vadd.f32 %v483, %v694
        %v696 = vpop.f32.mrb[0].mxu0
        %697 = vmatprep.mubr.bf16.mxu0 0
        %698 = vmatmul.mubr.bf16.gmra.mrb[0].mxu0 %v610
        %v699 = vpop.f32.mrb[0].mxu0
        %v700 = vadd.f32 %v488, %v699
        %v701 = vpop.f32.mrb[0].mxu0
        %v702 = vpop.f32.mrb[0].mxu0
        %v703 = vadd.f32 %v491, %v702
        %v704 = vpop.f32.mrb[0].mxu0
        %705 = vmatprep.mubr.bf16.mxu0 0
        %706 = vmatmul.mubr.bf16.gmra.mrb[0].mxu0 %v613
        %v707 = vpop.f32.mrb[0].mxu0
        %v708 = vadd.f32 %v496, %v707
        %v709 = vpop.f32.mrb[0].mxu0
        %v710 = vpop.f32.mrb[0].mxu0
        %v711 = vadd.f32 %v499, %v710
        %v712 = vpop.f32.mrb[0].mxu0
        %713 = vmatprep.mubr.bf16.mxu0 0
        %714 = vmatmul.mubr.bf16.gmra.mrb[0].mxu0 %v616
        %v715 = vpop.f32.mrb[0].mxu0
        %v716 = vadd.f32 %v504, %v715
        %v717 = vpop.f32.mrb[0].mxu0
        %v718 = vpop.f32.mrb[0].mxu0
        %v719 = vadd.f32 %v507, %v718
        %v720 = vpop.f32.mrb[0].mxu0
        %721 = vmatprep.mubr.bf16.mxu0 0
        %722 = vmatmul.mubr.bf16.gmra.mrb[0].mxu0 %v619
        %v723 = vpop.f32.mrb[0].mxu0
        %v724 = vadd.f32 %v512, %v723
        %v725 = vpop.f32.mrb[0].mxu0
        %v726 = vpop.f32.mrb[0].mxu0
        %v727 = vadd.f32 %v515, %v726
        %v728 = vpop.f32.mrb[0].mxu0
        %729 = vmatprep.mubr.bf16.mxu0 0
        %730 = vmatmul.mubr.bf16.gmra.mrb[0].mxu0 %v622
        %v731 = vpop.f32.mrb[0].mxu0
        %v732 = vadd.f32 %v520, %v731
        %v733 = vpop.f32.mrb[0].mxu0
        %v734 = vpop.f32.mrb[0].mxu0
        %v735 = vadd.f32 %v523, %v734
        %v736 = vpop.f32.mrb[0].mxu0
        %737 = vmatprep.mubr.bf16.mxu0 0
        %738 = vmatmul.mubr.bf16.gmra.mrb[0].mxu0 %v625
        %v739 = vpop.f32.mrb[0].mxu0
        %v740 = vadd.f32 %v528, %v739
        %v741 = vpop.f32.mrb[0].mxu0
        %v742 = vpop.f32.mrb[0].mxu0
        %v743 = vadd.f32 %v531, %v742
        %v744 = vpop.f32.mrb[0].mxu0
        %745 = vmatprep.mubr.bf16.mxu0 0
        %746 = vmatmul.mubr.bf16.gmra.mrb[0].mxu0 %v628
        %v747 = vpop.f32.mrb[0].mxu0
        %v748 = vadd.f32 %v536, %v747
        %v749 = vpop.f32.mrb[0].mxu0
        %v750 = vpop.f32.mrb[0].mxu0
        %v751 = vadd.f32 %v539, %v750
        %v752 = vpop.f32.mrb[0].mxu0
        %753 = vmatprep.mubr.bf16.mxu0 0
        %754 = vmatmul.mubr.bf16.gmra.mrb[0].mxu0 %v631
        %v755 = vpop.f32.mrb[0].mxu0
        %v756 = vadd.f32 %v544, %v755
        %v757 = vpop.f32.mrb[0].mxu0
        %v758 = vpop.f32.mrb[0].mxu0
        %v759 = vadd.f32 %v547, %v758
        %v760 = vpop.f32.mrb[0].mxu0
        %761 = vmatprep.mubr.bf16.mxu0 0
        %762 = vmatmul.mubr.bf16.gmra.mrb[0].mxu0 %v634
        %v763 = vpop.f32.mrb[0].mxu0
        %v764 = vadd.f32 %v552, %v763
        %v765 = vpop.f32.mrb[0].mxu0
        %v766 = vpop.f32.mrb[0].mxu0
        %v767 = vadd.f32 %v555, %v766
        %v768 = vpop.f32.mrb[0].mxu0
        %769 = vmatprep.mubr.bf16.mxu0 0
        %770 = vmatmul.mubr.bf16.gmra.mrb[0].mxu0 %v637
        %v771 = vpop.f32.mrb[0].mxu0
        %v772 = vadd.f32 %v560, %v771
        %v773 = vpop.f32.mrb[0].mxu0
        %v774 = vpop.f32.mrb[0].mxu0
        %v775 = vadd.f32 %v563, %v774
        %v776 = vpop.f32.mrb[0].mxu0
        %777 = vmatprep.mubr.bf16.mxu0 0
        %778 = vmatmul.mubr.bf16.gmra.mrb[0].mxu0 %v640
        %v779 = vpop.f32.mrb[0].mxu0
        %v780 = vadd.f32 %v568, %v779
        %v781 = vpop.f32.mrb[0].mxu0
        %v782 = vpop.f32.mrb[0].mxu0
        %v783 = vadd.f32 %v571, %v782
        %v784 = vpop.f32.mrb[0].mxu0
        %785 = vmatprep.mubr.bf16.mxu0 0
        %786 = vmatmul.mubr.bf16.gmra.mrb[0].mxu0 %v643
        %v787 = vpop.f32.mrb[0].mxu0
        %v788 = vadd.f32 %v576, %v787
        %v789 = vpop.f32.mrb[0].mxu0
        %v790 = vpop.f32.mrb[0].mxu0
        %v791 = vadd.f32 %v579, %v790
        %v792 = vpop.f32.mrb[0].mxu0
        %793 = vmatprep.mubr.bf16.mxu0 0
        %794 = vmatmul.mubr.bf16.gmra.mrb[0].mxu0 %v646
        %v795 = vpop.f32.mrb[0].mxu0
        %v796 = vadd.f32 %v584, %v795
        %v797 = vpop.f32.mrb[0].mxu0
        %v798 = vpop.f32.mrb[0].mxu0
        %v799 = vadd.f32 %v587, %v798
        %v800 = vpop.f32.mrb[0].mxu0
        %801 = vmatprep.mubr.bf16.mxu0 0
        %802 = vmatmul.mubr.bf16.gmra.mrb[0].mxu0 %v649
        %v803 = vpop.f32.mrb[0].mxu0
        %v804 = vadd.f32 %v592, %v803
        %v805 = vpop.f32.mrb[0].mxu0
        %v806 = vpop.f32.mrb[0].mxu0
        %v807 = vadd.f32 %v595, %v806
        %v808 = vpop.f32.mrb[0].mxu0
        %809 = vmatprep.mubr.bf16.mxu0 0
        %810 = vmatmul.mubr.bf16.gmra.mrb[0].mxu0 %v652
        %v811 = vpop.f32.mrb[0].mxu0
        %v812 = vadd.f32 %v600, %v811
        %v813 = vpop.f32.mrb[0].mxu0
        %v814 = vpop.f32.mrb[0].mxu0
        %v815 = vadd.f32 %v603, %v814
        %v816 = vpop.f32.mrb[0].mxu0
        %817 = vdwg.mxu0
        %v818 = vld [vmem:[#allocation2 + $0x2] sm:$0xff]
        %v819 = vld [vmem:[#allocation2 + $0xa] sm:$0xff]
        %v820 = vld [vmem:[#allocation2 + $0x1a] sm:$0xff]
        %v821 = vld [vmem:[#allocation2 + $0x22] sm:$0xff]
        %v822 = vld [vmem:[#allocation2 + $0x32] sm:$0xff]
        %v823 = vld [vmem:[#allocation2 + $0x3a] sm:$0xff]
        %v824 = vld [vmem:[#allocation2 + $0x4a] sm:$0xff]
        %v825 = vld [vmem:[#allocation2 + $0x52] sm:$0xff]
        %v826 = vld [vmem:[#allocation2 + $0x62] sm:$0xff]
        %v827 = vld [vmem:[#allocation2 + $0x6a] sm:$0xff]
        %v828 = vld [vmem:[#allocation2 + $0x7a] sm:$0xff]
        %v829 = vld [vmem:[#allocation2 + $0x82] sm:$0xff]
        %v830 = vld [vmem:[#allocation2 + $0x92] sm:$0xff]
        %v831 = vld [vmem:[#allocation2 + $0x9a] sm:$0xff]
        %v832 = vld [vmem:[#allocation2 + $0xaa] sm:$0xff]
        %v833 = vld [vmem:[#allocation2 + $0xb2] sm:$0xff]
        %v834 = vld [vmem:[#allocation2 + $0xc2] sm:$0xff]
        %v835 = vld [vmem:[#allocation2 + $0xca] sm:$0xff]
        %v836 = vld [vmem:[#allocation2 + $0xda] sm:$0xff]
        %v837 = vld [vmem:[#allocation2 + $0xe2] sm:$0xff]
        %v838 = vld [vmem:[#allocation2 + $0xf2] sm:$0xff]
        %v839 = vld [vmem:[#allocation2 + $0xfa] sm:$0xff]
        %v840 = vld [vmem:[#allocation2 + $0x10a] sm:$0xff]
        %v841 = vld [vmem:[#allocation2 + $0x112] sm:$0xff]
        %v842 = vld [vmem:[#allocation2 + $0x122] sm:$0xff]
        %v843 = vld [vmem:[#allocation2 + $0x12a] sm:$0xff]
        %v844 = vld [vmem:[#allocation2 + $0x13a] sm:$0xff]
        %v845 = vld [vmem:[#allocation2 + $0x142] sm:$0xff]
        %v846 = vld [vmem:[#allocation2 + $0x152] sm:$0xff]
        %v847 = vld [vmem:[#allocation2 + $0x15a] sm:$0xff]
        %v848 = vld [vmem:[#allocation2 + $0x16a] sm:$0xff]
        %v849 = vld [vmem:[#allocation2 + $0x172] sm:$0xff]
        %v850 = vpack.c.bf16 %v819, %v818
        %v851 = vpack.c.bf16 %v821, %v820
        %v852 = vpack.c.bf16 %v823, %v822
        %v853 = vpack.c.bf16 %v825, %v824
        %v854 = vpack.c.bf16 %v827, %v826
        %v855 = vpack.c.bf16 %v829, %v828
        %v856 = vpack.c.bf16 %v831, %v830
        %v857 = vpack.c.bf16 %v833, %v832
        %v858 = vpack.c.bf16 %v835, %v834
        %v859 = vpack.c.bf16 %v837, %v836
        %v860 = vpack.c.bf16 %v839, %v838
        %v861 = vpack.c.bf16 %v841, %v840
        %v862 = vpack.c.bf16 %v843, %v842
        %v863 = vpack.c.bf16 %v845, %v844
        %v864 = vpack.c.bf16 %v847, %v846
        %v865 = vpack.c.bf16 %v849, %v848
        %s866 = scalar_lea.vmem %s1, 4
        %v867 = vld [vmem:[%s866] sm:$0x3]
        %v869 = vsel %vm183, %v850, 0
        %v872 = vsel %vm183, %v851, 0
        %v875 = vsel %vm183, %v852, 0
        %v878 = vsel %vm183, %v853, 0
        %v881 = vsel %vm183, %v854, 0
        %v884 = vsel %vm183, %v855, 0
        %v887 = vsel %vm183, %v856, 0
        %v890 = vsel %vm183, %v857, 0
        %v893 = vsel %vm183, %v858, 0
        %v896 = vsel %vm183, %v859, 0
        %v899 = vsel %vm183, %v860, 0
        %v902 = vsel %vm183, %v861, 0
        %v905 = vsel %vm183, %v862, 0
        %v908 = vsel %vm183, %v863, 0
        %v911 = vsel %vm183, %v864, 0
        %v914 = vsel %vm183, %v865, 0
        %v917 = vsel %vm441, %v867, 0
        %919 = vmatprep.subr.bf16.mxu0 0
        %920 = vmatpush1.bf16.msra.mxu0 %v917
        %921 = vmatprep.subr.bf16.mxu0 0
        %922 = vmatpush1.bf16.msra.mxu0 0
        %923 = vmatprep.subr.bf16.mxu0 0
        %924 = vmatpush1.bf16.msra.mxu0 0
        %925 = vmatprep.subr.bf16.mxu0 0
        %926 = vmatpush1.bf16.msra.mxu0 0
        %927 = vmatprep.subr.bf16.mxu0 0
        %928 = vmatpush1.bf16.msra.mxu0 0
        %929 = vmatprep.subr.bf16.mxu0 0
        %930 = vmatpush1.bf16.msra.mxu0 0
        %931 = vmatprep.subr.bf16.mxu0 0
        %932 = vmatpush1.bf16.msra.mxu0 0
        %933 = vmatprep.subr.bf16.mxu0 0
        %934 = vmatpush1.bf16.msra.mxu0 0
        %935 = vmatprep.subr.bf16.mxu0 0
        %936 = vmatpush1.bf16.msra.mxu0 0
        %937 = vmatprep.subr.bf16.mxu0 0
        %938 = vmatpush1.bf16.msra.mxu0 0
        %939 = vmatprep.subr.bf16.mxu0 0
        %940 = vmatpush1.bf16.msra.mxu0 0
        %941 = vmatprep.subr.bf16.mxu0 0
        %942 = vmatpush1.bf16.msra.mxu0 0
        %943 = vmatprep.subr.bf16.mxu0 0
        %944 = vmatpush1.bf16.msra.mxu0 0
        %945 = vmatprep.subr.bf16.mxu0 0
        %946 = vmatpush1.bf16.msra.mxu0 0
        %947 = vmatprep.subr.bf16.mxu0 0
        %948 = vmatpush1.bf16.msra.mxu0 0
        %949 = vmatprep.subr.bf16.mxu0 0
        %950 = vmatpush1.bf16.msra.mxu0 0
        %951 = vmatprep.mubr.bf16.mxu0 0
        %952 = vmatmul.mubr.bf16.gmra.mrb[0].mxu0 %v869
        %v953 = vpop.f32.mrb[0].mxu0
        %v954 = vadd.f32 0.0, %v953
        %v955 = vpop.f32.mrb[0].mxu0
        %v956 = vpop.f32.mrb[0].mxu0
        %v957 = vadd.f32 0.0, %v956
        %v958 = vpop.f32.mrb[0].mxu0
        %959 = vmatprep.mubr.bf16.mxu0 0
        %960 = vmatmul.mubr.bf16.gmra.mrb[0].mxu0 %v872
        %v961 = vpop.f32.mrb[0].mxu0
        %v962 = vadd.f32 0.0, %v961
        %v963 = vpop.f32.mrb[0].mxu0
        %v964 = vpop.f32.mrb[0].mxu0
        %v965 = vadd.f32 0.0, %v964
        %v966 = vpop.f32.mrb[0].mxu0
        %967 = vmatprep.mubr.bf16.mxu0 0
        %968 = vmatmul.mubr.bf16.gmra.mrb[0].mxu0 %v875
        %v969 = vpop.f32.mrb[0].mxu0
        %v970 = vadd.f32 0.0, %v969
        %v971 = vpop.f32.mrb[0].mxu0
        %v972 = vpop.f32.mrb[0].mxu0
        %v973 = vadd.f32 0.0, %v972
        %v974 = vpop.f32.mrb[0].mxu0
        %975 = vmatprep.mubr.bf16.mxu0 0
        %976 = vmatmul.mubr.bf16.gmra.mrb[0].mxu0 %v878
        %v977 = vpop.f32.mrb[0].mxu0
        %v978 = vadd.f32 0.0, %v977
        %v979 = vpop.f32.mrb[0].mxu0
        %v980 = vpop.f32.mrb[0].mxu0
        %v981 = vadd.f32 0.0, %v980
        %v982 = vpop.f32.mrb[0].mxu0
        %983 = vmatprep.mubr.bf16.mxu0 0
        %984 = vmatmul.mubr.bf16.gmra.mrb[0].mxu0 %v881
        %v985 = vpop.f32.mrb[0].mxu0
        %v986 = vadd.f32 0.0, %v985
        %v987 = vpop.f32.mrb[0].mxu0
        %v988 = vpop.f32.mrb[0].mxu0
        %v989 = vadd.f32 0.0, %v988
        %v990 = vpop.f32.mrb[0].mxu0
        %991 = vmatprep.mubr.bf16.mxu0 0
        %992 = vmatmul.mubr.bf16.gmra.mrb[0].mxu0 %v884
        %v993 = vpop.f32.mrb[0].mxu0
        %v994 = vadd.f32 0.0, %v993
        %v995 = vpop.f32.mrb[0].mxu0
        %v996 = vpop.f32.mrb[0].mxu0
        %v997 = vadd.f32 0.0, %v996
        %v998 = vpop.f32.mrb[0].mxu0
        %999 = vmatprep.mubr.bf16.mxu0 0
        %1000 = vmatmul.mubr.bf16.gmra.mrb[0].mxu0 %v887
        %v1001 = vpop.f32.mrb[0].mxu0
        %v1002 = vadd.f32 0.0, %v1001
        %v1003 = vpop.f32.mrb[0].mxu0
        %v1004 = vpop.f32.mrb[0].mxu0
        %v1005 = vadd.f32 0.0, %v1004
        %v1006 = vpop.f32.mrb[0].mxu0
        %1007 = vmatprep.mubr.bf16.mxu0 0
        %1008 = vmatmul.mubr.bf16.gmra.mrb[0].mxu0 %v890
        %v1009 = vpop.f32.mrb[0].mxu0
        %v1010 = vadd.f32 0.0, %v1009
        %v1011 = vpop.f32.mrb[0].mxu0
        %v1012 = vpop.f32.mrb[0].mxu0
        %v1013 = vadd.f32 0.0, %v1012
        %v1014 = vpop.f32.mrb[0].mxu0
        %1015 = vmatprep.mubr.bf16.mxu0 0
        %1016 = vmatmul.mubr.bf16.gmra.mrb[0].mxu0 %v893
        %v1017 = vpop.f32.mrb[0].mxu0
        %v1018 = vadd.f32 0.0, %v1017
        %v1019 = vpop.f32.mrb[0].mxu0
        %v1020 = vpop.f32.mrb[0].mxu0
        %v1021 = vadd.f32 0.0, %v1020
        %v1022 = vpop.f32.mrb[0].mxu0
        %1023 = vmatprep.mubr.bf16.mxu0 0
        %1024 = vmatmul.mubr.bf16.gmra.mrb[0].mxu0 %v896
        %v1025 = vpop.f32.mrb[0].mxu0
        %v1026 = vadd.f32 0.0, %v1025
        %v1027 = vpop.f32.mrb[0].mxu0
        %v1028 = vpop.f32.mrb[0].mxu0
        %v1029 = vadd.f32 0.0, %v1028
        %v1030 = vpop.f32.mrb[0].mxu0
        %1031 = vmatprep.mubr.bf16.mxu0 0
        %1032 = vmatmul.mubr.bf16.gmra.mrb[0].mxu0 %v899
        %v1033 = vpop.f32.mrb[0].mxu0
        %v1034 = vadd.f32 0.0, %v1033
        %v1035 = vpop.f32.mrb[0].mxu0
        %v1036 = vpop.f32.mrb[0].mxu0
        %v1037 = vadd.f32 0.0, %v1036
        %v1038 = vpop.f32.mrb[0].mxu0
        %1039 = vmatprep.mubr.bf16.mxu0 0
        %1040 = vmatmul.mubr.bf16.gmra.mrb[0].mxu0 %v902
        %v1041 = vpop.f32.mrb[0].mxu0
        %v1042 = vadd.f32 0.0, %v1041
        %v1043 = vpop.f32.mrb[0].mxu0
        %v1044 = vpop.f32.mrb[0].mxu0
        %v1045 = vadd.f32 0.0, %v1044
        %v1046 = vpop.f32.mrb[0].mxu0
        %1047 = vmatprep.mubr.bf16.mxu0 0
        %1048 = vmatmul.mubr.bf16.gmra.mrb[0].mxu0 %v905
        %v1049 = vpop.f32.mrb[0].mxu0
        %v1050 = vadd.f32 0.0, %v1049
        %v1051 = vpop.f32.mrb[0].mxu0
        %v1052 = vpop.f32.mrb[0].mxu0
        %v1053 = vadd.f32 0.0, %v1052
        %v1054 = vpop.f32.mrb[0].mxu0
        %1055 = vmatprep.mubr.bf16.mxu0 0
        %1056 = vmatmul.mubr.bf16.gmra.mrb[0].mxu0 %v908
        %v1057 = vpop.f32.mrb[0].mxu0
        %v1058 = vadd.f32 0.0, %v1057
        %v1059 = vpop.f32.mrb[0].mxu0
        %v1060 = vpop.f32.mrb[0].mxu0
        %v1061 = vadd.f32 0.0, %v1060
        %v1062 = vpop.f32.mrb[0].mxu0
        %1063 = vmatprep.mubr.bf16.mxu0 0
        %1064 = vmatmul.mubr.bf16.gmra.mrb[0].mxu0 %v911
        %v1065 = vpop.f32.mrb[0].mxu0
        %v1066 = vadd.f32 0.0, %v1065
        %v1067 = vpop.f32.mrb[0].mxu0
        %v1068 = vpop.f32.mrb[0].mxu0
        %v1069 = vadd.f32 0.0, %v1068
        %v1070 = vpop.f32.mrb[0].mxu0
        %1071 = vmatprep.mubr.bf16.mxu0 0
        %1072 = vmatmul.mubr.bf16.gmra.mrb[0].mxu0 %v914
        %v1073 = vpop.f32.mrb[0].mxu0
        %v1074 = vadd.f32 0.0, %v1073
        %v1075 = vpop.f32.mrb[0].mxu0
        %v1076 = vpop.f32.mrb[0].mxu0
        %v1077 = vadd.f32 0.0, %v1076
        %v1078 = vpop.f32.mrb[0].mxu0
        %1079 = vdwg.mxu0
        %v1080 = vadd.f32 %v692, %v954
        %v1081 = vadd.f32 %v695, %v957
        %v1082 = vadd.f32 %v700, %v962
        %v1083 = vadd.f32 %v703, %v965
        %v1084 = vadd.f32 %v708, %v970
        %v1085 = vadd.f32 %v711, %v973
        %v1086 = vadd.f32 %v716, %v978
        %v1087 = vadd.f32 %v719, %v981
        %v1088 = vadd.f32 %v724, %v986
        %v1089 = vadd.f32 %v727, %v989
        %v1090 = vadd.f32 %v732, %v994
        %v1091 = vadd.f32 %v735, %v997
        %v1092 = vadd.f32 %v740, %v1002
        %v1093 = vadd.f32 %v743, %v1005
        %v1094 = vadd.f32 %v748, %v1010
        %v1095 = vadd.f32 %v751, %v1013
        %v1096 = vadd.f32 %v756, %v1018
        %v1097 = vadd.f32 %v759, %v1021
        %v1098 = vadd.f32 %v764, %v1026
        %v1099 = vadd.f32 %v767, %v1029
        %v1100 = vadd.f32 %v772, %v1034
        %v1101 = vadd.f32 %v775, %v1037
        %v1102 = vadd.f32 %v780, %v1042
        %v1103 = vadd.f32 %v783, %v1045
        %v1104 = vadd.f32 %v788, %v1050
        %v1105 = vadd.f32 %v791, %v1053
        %v1106 = vadd.f32 %v796, %v1058
        %v1107 = vadd.f32 %v799, %v1061
        %v1108 = vadd.f32 %v804, %v1066
        %v1109 = vadd.f32 %v807, %v1069
        %v1110 = vadd.f32 %v812, %v1074
        %v1111 = vadd.f32 %v815, %v1077
        %v1112 = vld [vmem:[%s261] sm:$0xff]
        %v1113 = vld [vmem:[%s261 + $0x8] sm:$0xff]
        %v1114 = vld [vmem:[%s261 + $0x18] sm:$0xff]
        %v1115 = vld [vmem:[%s261 + $0x20] sm:$0xff]
        %v1116 = vld [vmem:[%s261 + $0x30] sm:$0xff]
        %v1117 = vld [vmem:[%s261 + $0x38] sm:$0xff]
        %v1118 = vld [vmem:[%s261 + $0x48] sm:$0xff]
        %v1119 = vld [vmem:[%s261 + $0x50] sm:$0xff]
        %v1120 = vld [vmem:[%s261 + $0x60] sm:$0xff]
        %v1121 = vld [vmem:[%s261 + $0x68] sm:$0xff]
        %v1122 = vld [vmem:[%s261 + $0x78] sm:$0xff]
        %v1123 = vld [vmem:[%s261 + $0x80] sm:$0xff]
        %v1124 = vld [vmem:[%s261 + $0x90] sm:$0xff]
        %v1125 = vld [vmem:[%s261 + $0x98] sm:$0xff]
        %v1126 = vld [vmem:[%s261 + $0xa8] sm:$0xff]
        %v1127 = vld [vmem:[%s261 + $0xb0] sm:$0xff]
        %v1128 = vld [vmem:[%s261 + $0xc0] sm:$0xff]
        %v1129 = vld [vmem:[%s261 + $0xc8] sm:$0xff]
        %v1130 = vld [vmem:[%s261 + $0xd8] sm:$0xff]
        %v1131 = vld [vmem:[%s261 + $0xe0] sm:$0xff]
        %v1132 = vld [vmem:[%s261 + $0xf0] sm:$0xff]
        %v1133 = vld [vmem:[%s261 + $0xf8] sm:$0xff]
        %v1134 = vld [vmem:[%s261 + $0x108] sm:$0xff]
        %v1135 = vld [vmem:[%s261 + $0x110] sm:$0xff]
        %v1136 = vld [vmem:[%s261 + $0x120] sm:$0xff]
        %v1137 = vld [vmem:[%s261 + $0x128] sm:$0xff]
        %v1138 = vld [vmem:[%s261 + $0x138] sm:$0xff]
        %v1139 = vld [vmem:[%s261 + $0x140] sm:$0xff]
        %v1140 = vld [vmem:[%s261 + $0x150] sm:$0xff]
        %v1141 = vld [vmem:[%s261 + $0x158] sm:$0xff]
        %v1142 = vld [vmem:[%s261 + $0x168] sm:$0xff]
        %v1143 = vld [vmem:[%s261 + $0x170] sm:$0xff]
        %v1144 = vpack.c.bf16 %v1113, %v1112
        %v1145 = vpack.c.bf16 %v1115, %v1114
        %v1146 = vpack.c.bf16 %v1117, %v1116
        %v1147 = vpack.c.bf16 %v1119, %v1118
        %v1148 = vpack.c.bf16 %v1121, %v1120
        %v1149 = vpack.c.bf16 %v1123, %v1122
        %v1150 = vpack.c.bf16 %v1125, %v1124
        %v1151 = vpack.c.bf16 %v1127, %v1126
        %v1152 = vpack.c.bf16 %v1129, %v1128
        %v1153 = vpack.c.bf16 %v1131, %v1130
        %v1154 = vpack.c.bf16 %v1133, %v1132
        %v1155 = vpack.c.bf16 %v1135, %v1134
        %v1156 = vpack.c.bf16 %v1137, %v1136
        %v1157 = vpack.c.bf16 %v1139, %v1138
        %v1158 = vpack.c.bf16 %v1141, %v1140
        %v1159 = vpack.c.bf16 %v1143, %v1142
        %s1160 = scalar_lea.vmem %s1, 6
        %v1161 = vld [vmem:[%s1160] sm:$0x3]
        %v1163 = vsel %vm183, %v1144, 0
        %v1166 = vsel %vm183, %v1145, 0
        %v1169 = vsel %vm183, %v1146, 0
        %v1172 = vsel %vm183, %v1147, 0
        %v1175 = vsel %vm183, %v1148, 0
        %v1178 = vsel %vm183, %v1149, 0
        %v1181 = vsel %vm183, %v1150, 0
        %v1184 = vsel %vm183, %v1151, 0
        %v1187 = vsel %vm183, %v1152, 0
        %v1190 = vsel %vm183, %v1153, 0
        %v1193 = vsel %vm183, %v1154, 0
        %v1196 = vsel %vm183, %v1155, 0
        %v1199 = vsel %vm183, %v1156, 0
        %v1202 = vsel %vm183, %v1157, 0
        %v1205 = vsel %vm183, %v1158, 0
        %v1208 = vsel %vm183, %v1159, 0
        %v1211 = vsel %vm441, %v1161, 0
        %1213 = vmatprep.subr.bf16.mxu0 0
        %1214 = vmatpush1.bf16.msra.mxu0 %v1211
        %1215 = vmatprep.subr.bf16.mxu0 0
        %1216 = vmatpush1.bf16.msra.mxu0 0
        %1217 = vmatprep.subr.bf16.mxu0 0
        %1218 = vmatpush1.bf16.msra.mxu0 0
        %1219 = vmatprep.subr.bf16.mxu0 0
        %1220 = vmatpush1.bf16.msra.mxu0 0
        %1221 = vmatprep.subr.bf16.mxu0 0
        %1222 = vmatpush1.bf16.msra.mxu0 0
        %1223 = vmatprep.subr.bf16.mxu0 0
        %1224 = vmatpush1.bf16.msra.mxu0 0
        %1225 = vmatprep.subr.bf16.mxu0 0
        %1226 = vmatpush1.bf16.msra.mxu0 0
        %1227 = vmatprep.subr.bf16.mxu0 0
        %1228 = vmatpush1.bf16.msra.mxu0 0
        %1229 = vmatprep.subr.bf16.mxu0 0
        %1230 = vmatpush1.bf16.msra.mxu0 0
        %1231 = vmatprep.subr.bf16.mxu0 0
        %1232 = vmatpush1.bf16.msra.mxu0 0
        %1233 = vmatprep.subr.bf16.mxu0 0
        %1234 = vmatpush1.bf16.msra.mxu0 0
        %1235 = vmatprep.subr.bf16.mxu0 0
        %1236 = vmatpush1.bf16.msra.mxu0 0
        %1237 = vmatprep.subr.bf16.mxu0 0
        %1238 = vmatpush1.bf16.msra.mxu0 0
        %1239 = vmatprep.subr.bf16.mxu0 0
        %1240 = vmatpush1.bf16.msra.mxu0 0
        %1241 = vmatprep.subr.bf16.mxu0 0
        %1242 = vmatpush1.bf16.msra.mxu0 0
        %1243 = vmatprep.subr.bf16.mxu0 0
        %1244 = vmatpush1.bf16.msra.mxu0 0
        %1245 = vmatprep.mubr.bf16.mxu0 0
        %1246 = vmatmul.mubr.bf16.gmra.mrb[0].mxu0 %v1163
        %v1247 = vpop.f32.mrb[0].mxu0
        %v1248 = vadd.f32 0.0, %v1247
        %v1249 = vpop.f32.mrb[0].mxu0
        %v1250 = vpop.f32.mrb[0].mxu0
        %v1251 = vadd.f32 0.0, %v1250
        %v1252 = vpop.f32.mrb[0].mxu0
        %1253 = vmatprep.mubr.bf16.mxu0 0
        %1254 = vmatmul.mubr.bf16.gmra.mrb[0].mxu0 %v1166
        %v1255 = vpop.f32.mrb[0].mxu0
        %v1256 = vadd.f32 0.0, %v1255
        %v1257 = vpop.f32.mrb[0].mxu0
        %v1258 = vpop.f32.mrb[0].mxu0
        %v1259 = vadd.f32 0.0, %v1258
        %v1260 = vpop.f32.mrb[0].mxu0
        %1261 = vmatprep.mubr.bf16.mxu0 0
        %1262 = vmatmul.mubr.bf16.gmra.mrb[0].mxu0 %v1169
        %v1263 = vpop.f32.mrb[0].mxu0
        %v1264 = vadd.f32 0.0, %v1263
        %v1265 = vpop.f32.mrb[0].mxu0
        %v1266 = vpop.f32.mrb[0].mxu0
        %v1267 = vadd.f32 0.0, %v1266
        %v1268 = vpop.f32.mrb[0].mxu0
        %1269 = vmatprep.mubr.bf16.mxu0 0
        %1270 = vmatmul.mubr.bf16.gmra.mrb[0].mxu0 %v1172
        %v1271 = vpop.f32.mrb[0].mxu0
        %v1272 = vadd.f32 0.0, %v1271
        %v1273 = vpop.f32.mrb[0].mxu0
        %v1274 = vpop.f32.mrb[0].mxu0
        %v1275 = vadd.f32 0.0, %v1274
        %v1276 = vpop.f32.mrb[0].mxu0
        %1277 = vmatprep.mubr.bf16.mxu0 0
        %1278 = vmatmul.mubr.bf16.gmra.mrb[0].mxu0 %v1175
        %v1279 = vpop.f32.mrb[0].mxu0
        %v1280 = vadd.f32 0.0, %v1279
        %v1281 = vpop.f32.mrb[0].mxu0
        %v1282 = vpop.f32.mrb[0].mxu0
        %v1283 = vadd.f32 0.0, %v1282
        %v1284 = vpop.f32.mrb[0].mxu0
        %1285 = vmatprep.mubr.bf16.mxu0 0
        %1286 = vmatmul.mubr.bf16.gmra.mrb[0].mxu0 %v1178
        %v1287 = vpop.f32.mrb[0].mxu0
        %v1288 = vadd.f32 0.0, %v1287
        %v1289 = vpop.f32.mrb[0].mxu0
        %v1290 = vpop.f32.mrb[0].mxu0
        %v1291 = vadd.f32 0.0, %v1290
        %v1292 = vpop.f32.mrb[0].mxu0
        %1293 = vmatprep.mubr.bf16.mxu0 0
        %1294 = vmatmul.mubr.bf16.gmra.mrb[0].mxu0 %v1181
        %v1295 = vpop.f32.mrb[0].mxu0
        %v1296 = vadd.f32 0.0, %v1295
        %v1297 = vpop.f32.mrb[0].mxu0
        %v1298 = vpop.f32.mrb[0].mxu0
        %v1299 = vadd.f32 0.0, %v1298
        %v1300 = vpop.f32.mrb[0].mxu0
        %1301 = vmatprep.mubr.bf16.mxu0 0
        %1302 = vmatmul.mubr.bf16.gmra.mrb[0].mxu0 %v1184
        %v1303 = vpop.f32.mrb[0].mxu0
        %v1304 = vadd.f32 0.0, %v1303
        %v1305 = vpop.f32.mrb[0].mxu0
        %v1306 = vpop.f32.mrb[0].mxu0
        %v1307 = vadd.f32 0.0, %v1306
        %v1308 = vpop.f32.mrb[0].mxu0
        %1309 = vmatprep.mubr.bf16.mxu0 0
        %1310 = vmatmul.mubr.bf16.gmra.mrb[0].mxu0 %v1187
        %v1311 = vpop.f32.mrb[0].mxu0
        %v1312 = vadd.f32 0.0, %v1311
        %v1313 = vpop.f32.mrb[0].mxu0
        %v1314 = vpop.f32.mrb[0].mxu0
        %v1315 = vadd.f32 0.0, %v1314
        %v1316 = vpop.f32.mrb[0].mxu0
        %1317 = vmatprep.mubr.bf16.mxu0 0
        %1318 = vmatmul.mubr.bf16.gmra.mrb[0].mxu0 %v1190
        %v1319 = vpop.f32.mrb[0].mxu0
        %v1320 = vadd.f32 0.0, %v1319
        %v1321 = vpop.f32.mrb[0].mxu0
        %v1322 = vpop.f32.mrb[0].mxu0
        %v1323 = vadd.f32 0.0, %v1322
        %v1324 = vpop.f32.mrb[0].mxu0
        %1325 = vmatprep.mubr.bf16.mxu0 0
        %1326 = vmatmul.mubr.bf16.gmra.mrb[0].mxu0 %v1193
        %v1327 = vpop.f32.mrb[0].mxu0
        %v1328 = vadd.f32 0.0, %v1327
        %v1329 = vpop.f32.mrb[0].mxu0
        %v1330 = vpop.f32.mrb[0].mxu0
        %v1331 = vadd.f32 0.0, %v1330
        %v1332 = vpop.f32.mrb[0].mxu0
        %1333 = vmatprep.mubr.bf16.mxu0 0
        %1334 = vmatmul.mubr.bf16.gmra.mrb[0].mxu0 %v1196
        %v1335 = vpop.f32.mrb[0].mxu0
        %v1336 = vadd.f32 0.0, %v1335
        %v1337 = vpop.f32.mrb[0].mxu0
        %v1338 = vpop.f32.mrb[0].mxu0
        %v1339 = vadd.f32 0.0, %v1338
        %v1340 = vpop.f32.mrb[0].mxu0
        %1341 = vmatprep.mubr.bf16.mxu0 0
        %1342 = vmatmul.mubr.bf16.gmra.mrb[0].mxu0 %v1199
        %v1343 = vpop.f32.mrb[0].mxu0
        %v1344 = vadd.f32 0.0, %v1343
        %v1345 = vpop.f32.mrb[0].mxu0
        %v1346 = vpop.f32.mrb[0].mxu0
        %v1347 = vadd.f32 0.0, %v1346
        %v1348 = vpop.f32.mrb[0].mxu0
        %1349 = vmatprep.mubr.bf16.mxu0 0
        %1350 = vmatmul.mubr.bf16.gmra.mrb[0].mxu0 %v1202
        %v1351 = vpop.f32.mrb[0].mxu0
        %v1352 = vadd.f32 0.0, %v1351
        %v1353 = vpop.f32.mrb[0].mxu0
        %v1354 = vpop.f32.mrb[0].mxu0
        %v1355 = vadd.f32 0.0, %v1354
        %v1356 = vpop.f32.mrb[0].mxu0
        %1357 = vmatprep.mubr.bf16.mxu0 0
        %1358 = vmatmul.mubr.bf16.gmra.mrb[0].mxu0 %v1205
        %v1359 = vpop.f32.mrb[0].mxu0
        %v1360 = vadd.f32 0.0, %v1359
        %v1361 = vpop.f32.mrb[0].mxu0
        %v1362 = vpop.f32.mrb[0].mxu0
        %v1363 = vadd.f32 0.0, %v1362
        %v1364 = vpop.f32.mrb[0].mxu0
        %1365 = vmatprep.mubr.bf16.mxu0 0
        %1366 = vmatmul.mubr.bf16.gmra.mrb[0].mxu0 %v1208
        %v1367 = vpop.f32.mrb[0].mxu0
        %v1368 = vadd.f32 0.0, %v1367
        %v1369 = vpop.f32.mrb[0].mxu0
        %v1370 = vpop.f32.mrb[0].mxu0
        %v1371 = vadd.f32 0.0, %v1370
        %v1372 = vpop.f32.mrb[0].mxu0
        %1373 = vdwg.mxu0
        %v1374 = vadd.f32 %v1080, %v1248
        %v1375 = vadd.f32 %v1081, %v1251
        %v1376 = vadd.f32 %v1082, %v1256
        %v1377 = vadd.f32 %v1083, %v1259
        %v1378 = vadd.f32 %v1084, %v1264
        %v1379 = vadd.f32 %v1085, %v1267
        %v1380 = vadd.f32 %v1086, %v1272
        %v1381 = vadd.f32 %v1087, %v1275
        %v1382 = vadd.f32 %v1088, %v1280
        %v1383 = vadd.f32 %v1089, %v1283
        %v1384 = vadd.f32 %v1090, %v1288
        %v1385 = vadd.f32 %v1091, %v1291
        %v1386 = vadd.f32 %v1092, %v1296
        %v1387 = vadd.f32 %v1093, %v1299
        %v1388 = vadd.f32 %v1094, %v1304
        %v1389 = vadd.f32 %v1095, %v1307
        %v1390 = vadd.f32 %v1096, %v1312
        %v1391 = vadd.f32 %v1097, %v1315
        %v1392 = vadd.f32 %v1098, %v1320
        %v1393 = vadd.f32 %v1099, %v1323
        %v1394 = vadd.f32 %v1100, %v1328
        %v1395 = vadd.f32 %v1101, %v1331
        %v1396 = vadd.f32 %v1102, %v1336
        %v1397 = vadd.f32 %v1103, %v1339
        %v1398 = vadd.f32 %v1104, %v1344
        %v1399 = vadd.f32 %v1105, %v1347
        %v1400 = vadd.f32 %v1106, %v1352
        %v1401 = vadd.f32 %v1107, %v1355
        %v1402 = vadd.f32 %v1108, %v1360
        %v1403 = vadd.f32 %v1109, %v1363
        %v1404 = vadd.f32 %v1110, %v1368
        %v1405 = vadd.f32 %v1111, %v1371
        %v1406 = vld [vmem:[%s261 + $0x1] sm:$0xff]
        %v1407 = vld [vmem:[%s261 + $0x9] sm:$0xff]
        %v1408 = vld [vmem:[%s261 + $0x19] sm:$0xff]
        %v1409 = vld [vmem:[%s261 + $0x21] sm:$0xff]
        %v1410 = vld [vmem:[%s261 + $0x31] sm:$0xff]
        %v1411 = vld [vmem:[%s261 + $0x39] sm:$0xff]
        %v1412 = vld [vmem:[%s261 + $0x49] sm:$0xff]
        %v1413 = vld [vmem:[%s261 + $0x51] sm:$0xff]
        %v1414 = vld [vmem:[%s261 + $0x61] sm:$0xff]
        %v1415 = vld [vmem:[%s261 + $0x69] sm:$0xff]
        %v1416 = vld [vmem:[%s261 + $0x79] sm:$0xff]
        %v1417 = vld [vmem:[%s261 + $0x81] sm:$0xff]
        %v1418 = vld [vmem:[%s261 + $0x91] sm:$0xff]
        %v1419 = vld [vmem:[%s261 + $0x99] sm:$0xff]
        %v1420 = vld [vmem:[%s261 + $0xa9] sm:$0xff]
        %v1421 = vld [vmem:[%s261 + $0xb1] sm:$0xff]
        %v1422 = vld [vmem:[%s261 + $0xc1] sm:$0xff]
        %v1423 = vld [vmem:[%s261 + $0xc9] sm:$0xff]
        %v1424 = vld [vmem:[%s261 + $0xd9] sm:$0xff]
        %v1425 = vld [vmem:[%s261 + $0xe1] sm:$0xff]
        %v1426 = vld [vmem:[%s261 + $0xf1] sm:$0xff]
        %v1427 = vld [vmem:[%s261 + $0xf9] sm:$0xff]
        %v1428 = vld [vmem:[%s261 + $0x109] sm:$0xff]
        %v1429 = vld [vmem:[%s261 + $0x111] sm:$0xff]
        %v1430 = vld [vmem:[%s261 + $0x121] sm:$0xff]
        %v1431 = vld [vmem:[%s261 + $0x129] sm:$0xff]
        %v1432 = vld [vmem:[%s261 + $0x139] sm:$0xff]
        %v1433 = vld [vmem:[%s261 + $0x141] sm:$0xff]
        %v1434 = vld [vmem:[%s261 + $0x151] sm:$0xff]
        %v1435 = vld [vmem:[%s261 + $0x159] sm:$0xff]
        %v1436 = vld [vmem:[%s261 + $0x169] sm:$0xff]
        %v1437 = vld [vmem:[%s261 + $0x171] sm:$0xff]
        %v1438 = vpack.c.bf16 %v1407, %v1406
        %v1439 = vpack.c.bf16 %v1409, %v1408
        %v1440 = vpack.c.bf16 %v1411, %v1410
        %v1441 = vpack.c.bf16 %v1413, %v1412
        %v1442 = vpack.c.bf16 %v1415, %v1414
        %v1443 = vpack.c.bf16 %v1417, %v1416
        %v1444 = vpack.c.bf16 %v1419, %v1418
        %v1445 = vpack.c.bf16 %v1421, %v1420
        %v1446 = vpack.c.bf16 %v1423, %v1422
        %v1447 = vpack.c.bf16 %v1425, %v1424
        %v1448 = vpack.c.bf16 %v1427, %v1426
        %v1449 = vpack.c.bf16 %v1429, %v1428
        %v1450 = vpack.c.bf16 %v1431, %v1430
        %v1451 = vpack.c.bf16 %v1433, %v1432
        %v1452 = vpack.c.bf16 %v1435, %v1434
        %v1453 = vpack.c.bf16 %v1437, %v1436
        %s1454 = scalar_lea.vmem %s1, 8
        %v1455 = vld [vmem:[%s1454] sm:$0x3]
        %v1457 = vsel %vm183, %v1438, 0
        %v1460 = vsel %vm183, %v1439, 0
        %v1463 = vsel %vm183, %v1440, 0
        %v1466 = vsel %vm183, %v1441, 0
        %v1469 = vsel %vm183, %v1442, 0
        %v1472 = vsel %vm183, %v1443, 0
        %v1475 = vsel %vm183, %v1444, 0
        %v1478 = vsel %vm183, %v1445, 0
        %v1481 = vsel %vm183, %v1446, 0
        %v1484 = vsel %vm183, %v1447, 0
        %v1487 = vsel %vm183, %v1448, 0
        %v1490 = vsel %vm183, %v1449, 0
        %v1493 = vsel %vm183, %v1450, 0
        %v1496 = vsel %vm183, %v1451, 0
        %v1499 = vsel %vm183, %v1452, 0
        %v1502 = vsel %vm183, %v1453, 0
        %v1505 = vsel %vm441, %v1455, 0
        %1507 = vmatprep.subr.bf16.mxu0 0
        %1508 = vmatpush1.bf16.msra.mxu0 %v1505
        %1509 = vmatprep.subr.bf16.mxu0 0
        %1510 = vmatpush1.bf16.msra.mxu0 0
        %1511 = vmatprep.subr.bf16.mxu0 0
        %1512 = vmatpush1.bf16.msra.mxu0 0
        %1513 = vmatprep.subr.bf16.mxu0 0
        %1514 = vmatpush1.bf16.msra.mxu0 0
        %1515 = vmatprep.subr.bf16.mxu0 0
        %1516 = vmatpush1.bf16.msra.mxu0 0
        %1517 = vmatprep.subr.bf16.mxu0 0
        %1518 = vmatpush1.bf16.msra.mxu0 0
        %1519 = vmatprep.subr.bf16.mxu0 0
        %1520 = vmatpush1.bf16.msra.mxu0 0
        %1521 = vmatprep.subr.bf16.mxu0 0
        %1522 = vmatpush1.bf16.msra.mxu0 0
        %1523 = vmatprep.subr.bf16.mxu0 0
        %1524 = vmatpush1.bf16.msra.mxu0 0
        %1525 = vmatprep.subr.bf16.mxu0 0
        %1526 = vmatpush1.bf16.msra.mxu0 0
        %1527 = vmatprep.subr.bf16.mxu0 0
        %1528 = vmatpush1.bf16.msra.mxu0 0
        %1529 = vmatprep.subr.bf16.mxu0 0
        %1530 = vmatpush1.bf16.msra.mxu0 0
        %1531 = vmatprep.subr.bf16.mxu0 0
        %1532 = vmatpush1.bf16.msra.mxu0 0
        %1533 = vmatprep.subr.bf16.mxu0 0
        %1534 = vmatpush1.bf16.msra.mxu0 0
        %1535 = vmatprep.subr.bf16.mxu0 0
        %1536 = vmatpush1.bf16.msra.mxu0 0
        %1537 = vmatprep.subr.bf16.mxu0 0
        %1538 = vmatpush1.bf16.msra.mxu0 0
        %1539 = vmatprep.mubr.bf16.mxu0 0
        %1540 = vmatmul.mubr.bf16.gmra.mrb[0].mxu0 %v1457
        %v1541 = vpop.f32.mrb[0].mxu0
        %v1542 = vadd.f32 0.0, %v1541
        %v1543 = vpop.f32.mrb[0].mxu0
        %v1544 = vpop.f32.mrb[0].mxu0
        %v1545 = vadd.f32 0.0, %v1544
        %v1546 = vpop.f32.mrb[0].mxu0
        %1547 = vmatprep.mubr.bf16.mxu0 0
        %1548 = vmatmul.mubr.bf16.gmra.mrb[0].mxu0 %v1460
        %v1549 = vpop.f32.mrb[0].mxu0
        %v1550 = vadd.f32 0.0, %v1549
        %v1551 = vpop.f32.mrb[0].mxu0
        %v1552 = vpop.f32.mrb[0].mxu0
        %v1553 = vadd.f32 0.0, %v1552
        %v1554 = vpop.f32.mrb[0].mxu0
        %1555 = vmatprep.mubr.bf16.mxu0 0
        %1556 = vmatmul.mubr.bf16.gmra.mrb[0].mxu0 %v1463
        %v1557 = vpop.f32.mrb[0].mxu0
        %v1558 = vadd.f32 0.0, %v1557
        %v1559 = vpop.f32.mrb[0].mxu0
        %v1560 = vpop.f32.mrb[0].mxu0
        %v1561 = vadd.f32 0.0, %v1560
        %v1562 = vpop.f32.mrb[0].mxu0
        %1563 = vmatprep.mubr.bf16.mxu0 0
        %1564 = vmatmul.mubr.bf16.gmra.mrb[0].mxu0 %v1466
        %v1565 = vpop.f32.mrb[0].mxu0
        %v1566 = vadd.f32 0.0, %v1565
        %v1567 = vpop.f32.mrb[0].mxu0
        %v1568 = vpop.f32.mrb[0].mxu0
        %v1569 = vadd.f32 0.0, %v1568
        %v1570 = vpop.f32.mrb[0].mxu0
        %1571 = vmatprep.mubr.bf16.mxu0 0
        %1572 = vmatmul.mubr.bf16.gmra.mrb[0].mxu0 %v1469
        %v1573 = vpop.f32.mrb[0].mxu0
        %v1574 = vadd.f32 0.0, %v1573
        %v1575 = vpop.f32.mrb[0].mxu0
        %v1576 = vpop.f32.mrb[0].mxu0
        %v1577 = vadd.f32 0.0, %v1576
        %v1578 = vpop.f32.mrb[0].mxu0
        %1579 = vmatprep.mubr.bf16.mxu0 0
        %1580 = vmatmul.mubr.bf16.gmra.mrb[0].mxu0 %v1472
        %v1581 = vpop.f32.mrb[0].mxu0
        %v1582 = vadd.f32 0.0, %v1581
        %v1583 = vpop.f32.mrb[0].mxu0
        %v1584 = vpop.f32.mrb[0].mxu0
        %v1585 = vadd.f32 0.0, %v1584
        %v1586 = vpop.f32.mrb[0].mxu0
        %1587 = vmatprep.mubr.bf16.mxu0 0
        %1588 = vmatmul.mubr.bf16.gmra.mrb[0].mxu0 %v1475
        %v1589 = vpop.f32.mrb[0].mxu0
        %v1590 = vadd.f32 0.0, %v1589
        %v1591 = vpop.f32.mrb[0].mxu0
        %v1592 = vpop.f32.mrb[0].mxu0
        %v1593 = vadd.f32 0.0, %v1592
        %v1594 = vpop.f32.mrb[0].mxu0
        %1595 = vmatprep.mubr.bf16.mxu0 0
        %1596 = vmatmul.mubr.bf16.gmra.mrb[0].mxu0 %v1478
        %v1597 = vpop.f32.mrb[0].mxu0
        %v1598 = vadd.f32 0.0, %v1597
        %v1599 = vpop.f32.mrb[0].mxu0
        %v1600 = vpop.f32.mrb[0].mxu0
        %v1601 = vadd.f32 0.0, %v1600
        %v1602 = vpop.f32.mrb[0].mxu0
        %1603 = vmatprep.mubr.bf16.mxu0 0
        %1604 = vmatmul.mubr.bf16.gmra.mrb[0].mxu0 %v1481
        %v1605 = vpop.f32.mrb[0].mxu0
        %v1606 = vadd.f32 0.0, %v1605
        %v1607 = vpop.f32.mrb[0].mxu0
        %v1608 = vpop.f32.mrb[0].mxu0
        %v1609 = vadd.f32 0.0, %v1608
        %v1610 = vpop.f32.mrb[0].mxu0
        %1611 = vmatprep.mubr.bf16.mxu0 0
        %1612 = vmatmul.mubr.bf16.gmra.mrb[0].mxu0 %v1484
        %v1613 = vpop.f32.mrb[0].mxu0
        %v1614 = vadd.f32 0.0, %v1613
        %v1615 = vpop.f32.mrb[0].mxu0
        %v1616 = vpop.f32.mrb[0].mxu0
        %v1617 = vadd.f32 0.0, %v1616
        %v1618 = vpop.f32.mrb[0].mxu0
        %1619 = vmatprep.mubr.bf16.mxu0 0
        %1620 = vmatmul.mubr.bf16.gmra.mrb[0].mxu0 %v1487
        %v1621 = vpop.f32.mrb[0].mxu0
        %v1622 = vadd.f32 0.0, %v1621
        %v1623 = vpop.f32.mrb[0].mxu0
        %v1624 = vpop.f32.mrb[0].mxu0
        %v1625 = vadd.f32 0.0, %v1624
        %v1626 = vpop.f32.mrb[0].mxu0
        %1627 = vmatprep.mubr.bf16.mxu0 0
        %1628 = vmatmul.mubr.bf16.gmra.mrb[0].mxu0 %v1490
        %v1629 = vpop.f32.mrb[0].mxu0
        %v1630 = vadd.f32 0.0, %v1629
        %v1631 = vpop.f32.mrb[0].mxu0
        %v1632 = vpop.f32.mrb[0].mxu0
        %v1633 = vadd.f32 0.0, %v1632
        %v1634 = vpop.f32.mrb[0].mxu0
        %1635 = vmatprep.mubr.bf16.mxu0 0
        %1636 = vmatmul.mubr.bf16.gmra.mrb[0].mxu0 %v1493
        %v1637 = vpop.f32.mrb[0].mxu0
        %v1638 = vadd.f32 0.0, %v1637
        %v1639 = vpop.f32.mrb[0].mxu0
        %v1640 = vpop.f32.mrb[0].mxu0
        %v1641 = vadd.f32 0.0, %v1640
        %v1642 = vpop.f32.mrb[0].mxu0
        %1643 = vmatprep.mubr.bf16.mxu0 0
        %1644 = vmatmul.mubr.bf16.gmra.mrb[0].mxu0 %v1496
        %v1645 = vpop.f32.mrb[0].mxu0
        %v1646 = vadd.f32 0.0, %v1645
        %v1647 = vpop.f32.mrb[0].mxu0
        %v1648 = vpop.f32.mrb[0].mxu0
        %v1649 = vadd.f32 0.0, %v1648
        %v1650 = vpop.f32.mrb[0].mxu0
        %1651 = vmatprep.mubr.bf16.mxu0 0
        %1652 = vmatmul.mubr.bf16.gmra.mrb[0].mxu0 %v1499
        %v1653 = vpop.f32.mrb[0].mxu0
        %v1654 = vadd.f32 0.0, %v1653
        %v1655 = vpop.f32.mrb[0].mxu0
        %v1656 = vpop.f32.mrb[0].mxu0
        %v1657 = vadd.f32 0.0, %v1656
        %v1658 = vpop.f32.mrb[0].mxu0
        %1659 = vmatprep.mubr.bf16.mxu0 0
        %1660 = vmatmul.mubr.bf16.gmra.mrb[0].mxu0 %v1502
        %v1661 = vpop.f32.mrb[0].mxu0
        %v1662 = vadd.f32 0.0, %v1661
        %v1663 = vpop.f32.mrb[0].mxu0
        %v1664 = vpop.f32.mrb[0].mxu0
        %v1665 = vadd.f32 0.0, %v1664
        %v1666 = vpop.f32.mrb[0].mxu0
        %1667 = vdwg.mxu0
        %v1668 = vadd.f32 %v1374, %v1542
        %v1669 = vadd.f32 %v1375, %v1545
        %v1670 = vadd.f32 %v1376, %v1550
        %v1671 = vadd.f32 %v1377, %v1553
        %v1672 = vadd.f32 %v1378, %v1558
        %v1673 = vadd.f32 %v1379, %v1561
        %v1674 = vadd.f32 %v1380, %v1566
        %v1675 = vadd.f32 %v1381, %v1569
        %v1676 = vadd.f32 %v1382, %v1574
        %v1677 = vadd.f32 %v1383, %v1577
        %v1678 = vadd.f32 %v1384, %v1582
        %v1679 = vadd.f32 %v1385, %v1585
        %v1680 = vadd.f32 %v1386, %v1590
        %v1681 = vadd.f32 %v1387, %v1593
        %v1682 = vadd.f32 %v1388, %v1598
        %v1683 = vadd.f32 %v1389, %v1601
        %v1684 = vadd.f32 %v1390, %v1606
        %v1685 = vadd.f32 %v1391, %v1609
        %v1686 = vadd.f32 %v1392, %v1614
        %v1687 = vadd.f32 %v1393, %v1617
        %v1688 = vadd.f32 %v1394, %v1622
        %v1689 = vadd.f32 %v1395, %v1625
        %v1690 = vadd.f32 %v1396, %v1630
        %v1691 = vadd.f32 %v1397, %v1633
        %v1692 = vadd.f32 %v1398, %v1638
        %v1693 = vadd.f32 %v1399, %v1641
        %v1694 = vadd.f32 %v1400, %v1646
        %v1695 = vadd.f32 %v1401, %v1649
        %v1696 = vadd.f32 %v1402, %v1654
        %v1697 = vadd.f32 %v1403, %v1657
        %v1698 = vadd.f32 %v1404, %v1662
        %v1699 = vadd.f32 %v1405, %v1665
        %v1700 = vld [vmem:[%s261 + $0x2] sm:$0xff]
        %v1701 = vld [vmem:[%s261 + $0xa] sm:$0xff]
        %v1702 = vld [vmem:[%s261 + $0x1a] sm:$0xff]
        %v1703 = vld [vmem:[%s261 + $0x22] sm:$0xff]
        %v1704 = vld [vmem:[%s261 + $0x32] sm:$0xff]
        %v1705 = vld [vmem:[%s261 + $0x3a] sm:$0xff]
        %v1706 = vld [vmem:[%s261 + $0x4a] sm:$0xff]
        %v1707 = vld [vmem:[%s261 + $0x52] sm:$0xff]
        %v1708 = vld [vmem:[%s261 + $0x62] sm:$0xff]
        %v1709 = vld [vmem:[%s261 + $0x6a] sm:$0xff]
        %v1710 = vld [vmem:[%s261 + $0x7a] sm:$0xff]
        %v1711 = vld [vmem:[%s261 + $0x82] sm:$0xff]
        %v1712 = vld [vmem:[%s261 + $0x92] sm:$0xff]
        %v1713 = vld [vmem:[%s261 + $0x9a] sm:$0xff]
        %v1714 = vld [vmem:[%s261 + $0xaa] sm:$0xff]
        %v1715 = vld [vmem:[%s261 + $0xb2] sm:$0xff]
        %v1716 = vld [vmem:[%s261 + $0xc2] sm:$0xff]
        %v1717 = vld [vmem:[%s261 + $0xca] sm:$0xff]
        %v1718 = vld [vmem:[%s261 + $0xda] sm:$0xff]
        %v1719 = vld [vmem:[%s261 + $0xe2] sm:$0xff]
        %v1720 = vld [vmem:[%s261 + $0xf2] sm:$0xff]
        %v1721 = vld [vmem:[%s261 + $0xfa] sm:$0xff]
        %v1722 = vld [vmem:[%s261 + $0x10a] sm:$0xff]
        %v1723 = vld [vmem:[%s261 + $0x112] sm:$0xff]
        %v1724 = vld [vmem:[%s261 + $0x122] sm:$0xff]
        %v1725 = vld [vmem:[%s261 + $0x12a] sm:$0xff]
        %v1726 = vld [vmem:[%s261 + $0x13a] sm:$0xff]
        %v1727 = vld [vmem:[%s261 + $0x142] sm:$0xff]
        %v1728 = vld [vmem:[%s261 + $0x152] sm:$0xff]
        %v1729 = vld [vmem:[%s261 + $0x15a] sm:$0xff]
        %v1730 = vld [vmem:[%s261 + $0x16a] sm:$0xff]
        %v1731 = vld [vmem:[%s261 + $0x172] sm:$0xff]
        %v1732 = vpack.c.bf16 %v1701, %v1700
        %v1733 = vpack.c.bf16 %v1703, %v1702
        %v1734 = vpack.c.bf16 %v1705, %v1704
        %v1735 = vpack.c.bf16 %v1707, %v1706
        %v1736 = vpack.c.bf16 %v1709, %v1708
        %v1737 = vpack.c.bf16 %v1711, %v1710
        %v1738 = vpack.c.bf16 %v1713, %v1712
        %v1739 = vpack.c.bf16 %v1715, %v1714
        %v1740 = vpack.c.bf16 %v1717, %v1716
        %v1741 = vpack.c.bf16 %v1719, %v1718
        %v1742 = vpack.c.bf16 %v1721, %v1720
        %v1743 = vpack.c.bf16 %v1723, %v1722
        %v1744 = vpack.c.bf16 %v1725, %v1724
        %v1745 = vpack.c.bf16 %v1727, %v1726
        %v1746 = vpack.c.bf16 %v1729, %v1728
        %v1747 = vpack.c.bf16 %v1731, %v1730
        %s1748 = scalar_lea.vmem %s1, 10
        %v1749 = vld [vmem:[%s1748] sm:$0x3]
        %v1751 = vsel %vm183, %v1732, 0
        %v1754 = vsel %vm183, %v1733, 0
        %v1757 = vsel %vm183, %v1734, 0
        %v1760 = vsel %vm183, %v1735, 0
        %v1763 = vsel %vm183, %v1736, 0
        %v1766 = vsel %vm183, %v1737, 0
        %v1769 = vsel %vm183, %v1738, 0
        %v1772 = vsel %vm183, %v1739, 0
        %v1775 = vsel %vm183, %v1740, 0
        %v1778 = vsel %vm183, %v1741, 0
        %v1781 = vsel %vm183, %v1742, 0
        %v1784 = vsel %vm183, %v1743, 0
        %v1787 = vsel %vm183, %v1744, 0
        %v1790 = vsel %vm183, %v1745, 0
        %v1793 = vsel %vm183, %v1746, 0
        %v1796 = vsel %vm183, %v1747, 0
        %v1799 = vsel %vm441, %v1749, 0
        %1801 = vmatprep.subr.bf16.mxu0 0
        %1802 = vmatpush1.bf16.msra.mxu0 %v1799
        %1803 = vmatprep.subr.bf16.mxu0 0
        %1804 = vmatpush1.bf16.msra.mxu0 0
        %1805 = vmatprep.subr.bf16.mxu0 0
        %1806 = vmatpush1.bf16.msra.mxu0 0
        %1807 = vmatprep.subr.bf16.mxu0 0
        %1808 = vmatpush1.bf16.msra.mxu0 0
        %1809 = vmatprep.subr.bf16.mxu0 0
        %1810 = vmatpush1.bf16.msra.mxu0 0
        %1811 = vmatprep.subr.bf16.mxu0 0
        %1812 = vmatpush1.bf16.msra.mxu0 0
        %1813 = vmatprep.subr.bf16.mxu0 0
        %1814 = vmatpush1.bf16.msra.mxu0 0
        %1815 = vmatprep.subr.bf16.mxu0 0
        %1816 = vmatpush1.bf16.msra.mxu0 0
        %1817 = vmatprep.subr.bf16.mxu0 0
        %1818 = vmatpush1.bf16.msra.mxu0 0
        %1819 = vmatprep.subr.bf16.mxu0 0
        %1820 = vmatpush1.bf16.msra.mxu0 0
        %1821 = vmatprep.subr.bf16.mxu0 0
        %1822 = vmatpush1.bf16.msra.mxu0 0
        %1823 = vmatprep.subr.bf16.mxu0 0
        %1824 = vmatpush1.bf16.msra.mxu0 0
        %1825 = vmatprep.subr.bf16.mxu0 0
        %1826 = vmatpush1.bf16.msra.mxu0 0
        %1827 = vmatprep.subr.bf16.mxu0 0
        %1828 = vmatpush1.bf16.msra.mxu0 0
        %1829 = vmatprep.subr.bf16.mxu0 0
        %1830 = vmatpush1.bf16.msra.mxu0 0
        %1831 = vmatprep.subr.bf16.mxu0 0
        %1832 = vmatpush1.bf16.msra.mxu0 0
        %1833 = vmatprep.mubr.bf16.mxu0 0
        %1834 = vmatmul.mubr.bf16.gmra.mrb[0].mxu0 %v1751
        %v1835 = vpop.f32.mrb[0].mxu0
        %v1836 = vadd.f32 0.0, %v1835
        %v1837 = vpop.f32.mrb[0].mxu0
        %v1838 = vpop.f32.mrb[0].mxu0
        %v1839 = vadd.f32 0.0, %v1838
        %v1840 = vpop.f32.mrb[0].mxu0
        %1841 = vmatprep.mubr.bf16.mxu0 0
        %1842 = vmatmul.mubr.bf16.gmra.mrb[0].mxu0 %v1754
        %v1843 = vpop.f32.mrb[0].mxu0
        %v1844 = vadd.f32 0.0, %v1843
        %v1845 = vpop.f32.mrb[0].mxu0
        %v1846 = vpop.f32.mrb[0].mxu0
        %v1847 = vadd.f32 0.0, %v1846
        %v1848 = vpop.f32.mrb[0].mxu0
        %1849 = vmatprep.mubr.bf16.mxu0 0
        %1850 = vmatmul.mubr.bf16.gmra.mrb[0].mxu0 %v1757
        %v1851 = vpop.f32.mrb[0].mxu0
        %v1852 = vadd.f32 0.0, %v1851
        %v1853 = vpop.f32.mrb[0].mxu0
        %v1854 = vpop.f32.mrb[0].mxu0
        %v1855 = vadd.f32 0.0, %v1854
        %v1856 = vpop.f32.mrb[0].mxu0
        %1857 = vmatprep.mubr.bf16.mxu0 0
        %1858 = vmatmul.mubr.bf16.gmra.mrb[0].mxu0 %v1760
        %v1859 = vpop.f32.mrb[0].mxu0
        %v1860 = vadd.f32 0.0, %v1859
        %v1861 = vpop.f32.mrb[0].mxu0
        %v1862 = vpop.f32.mrb[0].mxu0
        %v1863 = vadd.f32 0.0, %v1862
        %v1864 = vpop.f32.mrb[0].mxu0
        %1865 = vmatprep.mubr.bf16.mxu0 0
        %1866 = vmatmul.mubr.bf16.gmra.mrb[0].mxu0 %v1763
        %v1867 = vpop.f32.mrb[0].mxu0
        %v1868 = vadd.f32 0.0, %v1867
        %v1869 = vpop.f32.mrb[0].mxu0
        %v1870 = vpop.f32.mrb[0].mxu0
        %v1871 = vadd.f32 0.0, %v1870
        %v1872 = vpop.f32.mrb[0].mxu0
        %1873 = vmatprep.mubr.bf16.mxu0 0
        %1874 = vmatmul.mubr.bf16.gmra.mrb[0].mxu0 %v1766
        %v1875 = vpop.f32.mrb[0].mxu0
        %v1876 = vadd.f32 0.0, %v1875
        %v1877 = vpop.f32.mrb[0].mxu0
        %v1878 = vpop.f32.mrb[0].mxu0
        %v1879 = vadd.f32 0.0, %v1878
        %v1880 = vpop.f32.mrb[0].mxu0
        %1881 = vmatprep.mubr.bf16.mxu0 0
        %1882 = vmatmul.mubr.bf16.gmra.mrb[0].mxu0 %v1769
        %v1883 = vpop.f32.mrb[0].mxu0
        %v1884 = vadd.f32 0.0, %v1883
        %v1885 = vpop.f32.mrb[0].mxu0
        %v1886 = vpop.f32.mrb[0].mxu0
        %v1887 = vadd.f32 0.0, %v1886
        %v1888 = vpop.f32.mrb[0].mxu0
        %1889 = vmatprep.mubr.bf16.mxu0 0
        %1890 = vmatmul.mubr.bf16.gmra.mrb[0].mxu0 %v1772
        %v1891 = vpop.f32.mrb[0].mxu0
        %v1892 = vadd.f32 0.0, %v1891
        %v1893 = vpop.f32.mrb[0].mxu0
        %v1894 = vpop.f32.mrb[0].mxu0
        %v1895 = vadd.f32 0.0, %v1894
        %v1896 = vpop.f32.mrb[0].mxu0
        %1897 = vmatprep.mubr.bf16.mxu0 0
        %1898 = vmatmul.mubr.bf16.gmra.mrb[0].mxu0 %v1775
        %v1899 = vpop.f32.mrb[0].mxu0
        %v1900 = vadd.f32 0.0, %v1899
        %v1901 = vpop.f32.mrb[0].mxu0
        %v1902 = vpop.f32.mrb[0].mxu0
        %v1903 = vadd.f32 0.0, %v1902
        %v1904 = vpop.f32.mrb[0].mxu0
        %1905 = vmatprep.mubr.bf16.mxu0 0
        %1906 = vmatmul.mubr.bf16.gmra.mrb[0].mxu0 %v1778
        %v1907 = vpop.f32.mrb[0].mxu0
        %v1908 = vadd.f32 0.0, %v1907
        %v1909 = vpop.f32.mrb[0].mxu0
        %v1910 = vpop.f32.mrb[0].mxu0
        %v1911 = vadd.f32 0.0, %v1910
        %v1912 = vpop.f32.mrb[0].mxu0
        %1913 = vmatprep.mubr.bf16.mxu0 0
        %1914 = vmatmul.mubr.bf16.gmra.mrb[0].mxu0 %v1781
        %v1915 = vpop.f32.mrb[0].mxu0
        %v1916 = vadd.f32 0.0, %v1915
        %v1917 = vpop.f32.mrb[0].mxu0
        %v1918 = vpop.f32.mrb[0].mxu0
        %v1919 = vadd.f32 0.0, %v1918
        %v1920 = vpop.f32.mrb[0].mxu0
        %1921 = vmatprep.mubr.bf16.mxu0 0
        %1922 = vmatmul.mubr.bf16.gmra.mrb[0].mxu0 %v1784
        %v1923 = vpop.f32.mrb[0].mxu0
        %v1924 = vadd.f32 0.0, %v1923
        %v1925 = vpop.f32.mrb[0].mxu0
        %v1926 = vpop.f32.mrb[0].mxu0
        %v1927 = vadd.f32 0.0, %v1926
        %v1928 = vpop.f32.mrb[0].mxu0
        %1929 = vmatprep.mubr.bf16.mxu0 0
        %1930 = vmatmul.mubr.bf16.gmra.mrb[0].mxu0 %v1787
        %v1931 = vpop.f32.mrb[0].mxu0
        %v1932 = vadd.f32 0.0, %v1931
        %v1933 = vpop.f32.mrb[0].mxu0
        %v1934 = vpop.f32.mrb[0].mxu0
        %v1935 = vadd.f32 0.0, %v1934
        %v1936 = vpop.f32.mrb[0].mxu0
        %1937 = vmatprep.mubr.bf16.mxu0 0
        %1938 = vmatmul.mubr.bf16.gmra.mrb[0].mxu0 %v1790
        %v1939 = vpop.f32.mrb[0].mxu0
        %v1940 = vadd.f32 0.0, %v1939
        %v1941 = vpop.f32.mrb[0].mxu0
        %v1942 = vpop.f32.mrb[0].mxu0
        %v1943 = vadd.f32 0.0, %v1942
        %v1944 = vpop.f32.mrb[0].mxu0
        %1945 = vmatprep.mubr.bf16.mxu0 0
        %1946 = vmatmul.mubr.bf16.gmra.mrb[0].mxu0 %v1793
        %v1947 = vpop.f32.mrb[0].mxu0
        %v1948 = vadd.f32 0.0, %v1947
        %v1949 = vpop.f32.mrb[0].mxu0
        %v1950 = vpop.f32.mrb[0].mxu0
        %v1951 = vadd.f32 0.0, %v1950
        %v1952 = vpop.f32.mrb[0].mxu0
        %1953 = vmatprep.mubr.bf16.mxu0 0
        %1954 = vmatmul.mubr.bf16.gmra.mrb[0].mxu0 %v1796
        %v1955 = vpop.f32.mrb[0].mxu0
        %v1956 = vadd.f32 0.0, %v1955
        %v1957 = vpop.f32.mrb[0].mxu0
        %v1958 = vpop.f32.mrb[0].mxu0
        %v1959 = vadd.f32 0.0, %v1958
        %v1960 = vpop.f32.mrb[0].mxu0
        %1961 = vdwg.mxu0
        %v1962 = vadd.f32 %v1668, %v1836
        %v1963 = vadd.f32 %v1669, %v1839
        %v1964 = vadd.f32 %v1670, %v1844
        %v1965 = vadd.f32 %v1671, %v1847
        %v1966 = vadd.f32 %v1672, %v1852
        %v1967 = vadd.f32 %v1673, %v1855
        %v1968 = vadd.f32 %v1674, %v1860
        %v1969 = vadd.f32 %v1675, %v1863
        %v1970 = vadd.f32 %v1676, %v1868
        %v1971 = vadd.f32 %v1677, %v1871
        %v1972 = vadd.f32 %v1678, %v1876
        %v1973 = vadd.f32 %v1679, %v1879
        %v1974 = vadd.f32 %v1680, %v1884
        %v1975 = vadd.f32 %v1681, %v1887
        %v1976 = vadd.f32 %v1682, %v1892
        %v1977 = vadd.f32 %v1683, %v1895
        %v1978 = vadd.f32 %v1684, %v1900
        %v1979 = vadd.f32 %v1685, %v1903
        %v1980 = vadd.f32 %v1686, %v1908
        %v1981 = vadd.f32 %v1687, %v1911
        %v1982 = vadd.f32 %v1688, %v1916
        %v1983 = vadd.f32 %v1689, %v1919
        %v1984 = vadd.f32 %v1690, %v1924
        %v1985 = vadd.f32 %v1691, %v1927
        %v1986 = vadd.f32 %v1692, %v1932
        %v1987 = vadd.f32 %v1693, %v1935
        %v1988 = vadd.f32 %v1694, %v1940
        %v1989 = vadd.f32 %v1695, %v1943
        %v1990 = vadd.f32 %v1696, %v1948
        %v1991 = vadd.f32 %v1697, %v1951
        %v1992 = vadd.f32 %v1698, %v1956
        %v1993 = vadd.f32 %v1699, %v1959
        %s1994 = scalar_lea.vmem [#allocation2], 48
        %v1995 = vld [vmem:[%s1994] sm:$0xff]
        %v1996 = vld [vmem:[%s1994 + $0x8] sm:$0xff]
        %v1997 = vld [vmem:[%s1994 + $0x18] sm:$0xff]
        %v1998 = vld [vmem:[%s1994 + $0x20] sm:$0xff]
        %v1999 = vld [vmem:[%s1994 + $0x30] sm:$0xff]
        %v2000 = vld [vmem:[%s1994 + $0x38] sm:$0xff]
        %v2001 = vld [vmem:[%s1994 + $0x48] sm:$0xff]
        %v2002 = vld [vmem:[%s1994 + $0x50] sm:$0xff]
        %v2003 = vld [vmem:[%s1994 + $0x60] sm:$0xff]
        %v2004 = vld [vmem:[%s1994 + $0x68] sm:$0xff]
        %v2005 = vld [vmem:[%s1994 + $0x78] sm:$0xff]
        %v2006 = vld [vmem:[%s1994 + $0x80] sm:$0xff]
        %v2007 = vld [vmem:[%s1994 + $0x90] sm:$0xff]
        %v2008 = vld [vmem:[%s1994 + $0x98] sm:$0xff]
        %v2009 = vld [vmem:[%s1994 + $0xa8] sm:$0xff]
        %v2010 = vld [vmem:[%s1994 + $0xb0] sm:$0xff]
        %v2011 = vld [vmem:[%s1994 + $0xc0] sm:$0xff]
        %v2012 = vld [vmem:[%s1994 + $0xc8] sm:$0xff]
        %v2013 = vld [vmem:[%s1994 + $0xd8] sm:$0xff]
        %v2014 = vld [vmem:[%s1994 + $0xe0] sm:$0xff]
        %v2015 = vld [vmem:[%s1994 + $0xf0] sm:$0xff]
        %v2016 = vld [vmem:[%s1994 + $0xf8] sm:$0xff]
        %v2017 = vld [vmem:[%s1994 + $0x108] sm:$0xff]
        %v2018 = vld [vmem:[%s1994 + $0x110] sm:$0xff]
        %v2019 = vld [vmem:[%s1994 + $0x120] sm:$0xff]
        %v2020 = vld [vmem:[%s1994 + $0x128] sm:$0xff]
        %v2021 = vld [vmem:[%s1994 + $0x138] sm:$0xff]
        %v2022 = vld [vmem:[%s1994 + $0x140] sm:$0xff]
        %v2023 = vld [vmem:[%s1994 + $0x150] sm:$0xff]
        %v2024 = vld [vmem:[%s1994 + $0x158] sm:$0xff]
        %v2025 = vld [vmem:[%s1994 + $0x168] sm:$0xff]
        %v2026 = vld [vmem:[%s1994 + $0x170] sm:$0xff]
        %v2027 = vpack.c.bf16 %v1996, %v1995
        %v2028 = vpack.c.bf16 %v1998, %v1997
        %v2029 = vpack.c.bf16 %v2000, %v1999
        %v2030 = vpack.c.bf16 %v2002, %v2001
        %v2031 = vpack.c.bf16 %v2004, %v2003
        %v2032 = vpack.c.bf16 %v2006, %v2005
        %v2033 = vpack.c.bf16 %v2008, %v2007
        %v2034 = vpack.c.bf16 %v2010, %v2009
        %v2035 = vpack.c.bf16 %v2012, %v2011
        %v2036 = vpack.c.bf16 %v2014, %v2013
        %v2037 = vpack.c.bf16 %v2016, %v2015
        %v2038 = vpack.c.bf16 %v2018, %v2017
        %v2039 = vpack.c.bf16 %v2020, %v2019
        %v2040 = vpack.c.bf16 %v2022, %v2021
        %v2041 = vpack.c.bf16 %v2024, %v2023
        %v2042 = vpack.c.bf16 %v2026, %v2025
        %s2043 = scalar_lea.vmem %s1, 12
        %v2044 = vld [vmem:[%s2043] sm:$0x3]
        %v2046 = vsel %vm183, %v2027, 0
        %v2049 = vsel %vm183, %v2028, 0
        %v2052 = vsel %vm183, %v2029, 0
        %v2055 = vsel %vm183, %v2030, 0
        %v2058 = vsel %vm183, %v2031, 0
        %v2061 = vsel %vm183, %v2032, 0
        %v2064 = vsel %vm183, %v2033, 0
        %v2067 = vsel %vm183, %v2034, 0
        %v2070 = vsel %vm183, %v2035, 0
        %v2073 = vsel %vm183, %v2036, 0
        %v2076 = vsel %vm183, %v2037, 0
        %v2079 = vsel %vm183, %v2038, 0
        %v2082 = vsel %vm183, %v2039, 0
        %v2085 = vsel %vm183, %v2040, 0
        %v2088 = vsel %vm183, %v2041, 0
        %v2091 = vsel %vm183, %v2042, 0
        %v2094 = vsel %vm441, %v2044, 0
        %2096 = vmatprep.subr.bf16.mxu0 0
        %2097 = vmatpush1.bf16.msra.mxu0 %v2094
        %2098 = vmatprep.subr.bf16.mxu0 0
        %2099 = vmatpush1.bf16.msra.mxu0 0
        %2100 = vmatprep.subr.bf16.mxu0 0
        %2101 = vmatpush1.bf16.msra.mxu0 0
        %2102 = vmatprep.subr.bf16.mxu0 0
        %2103 = vmatpush1.bf16.msra.mxu0 0
        %2104 = vmatprep.subr.bf16.mxu0 0
        %2105 = vmatpush1.bf16.msra.mxu0 0
        %2106 = vmatprep.subr.bf16.mxu0 0
        %2107 = vmatpush1.bf16.msra.mxu0 0
        %2108 = vmatprep.subr.bf16.mxu0 0
        %2109 = vmatpush1.bf16.msra.mxu0 0
        %2110 = vmatprep.subr.bf16.mxu0 0
        %2111 = vmatpush1.bf16.msra.mxu0 0
        %2112 = vmatprep.subr.bf16.mxu0 0
        %2113 = vmatpush1.bf16.msra.mxu0 0
        %2114 = vmatprep.subr.bf16.mxu0 0
        %2115 = vmatpush1.bf16.msra.mxu0 0
        %2116 = vmatprep.subr.bf16.mxu0 0
        %2117 = vmatpush1.bf16.msra.mxu0 0
        %2118 = vmatprep.subr.bf16.mxu0 0
        %2119 = vmatpush1.bf16.msra.mxu0 0
        %2120 = vmatprep.subr.bf16.mxu0 0
        %2121 = vmatpush1.bf16.msra.mxu0 0
        %2122 = vmatprep.subr.bf16.mxu0 0
        %2123 = vmatpush1.bf16.msra.mxu0 0
        %2124 = vmatprep.subr.bf16.mxu0 0
        %2125 = vmatpush1.bf16.msra.mxu0 0
        %2126 = vmatprep.subr.bf16.mxu0 0
        %2127 = vmatpush1.bf16.msra.mxu0 0
        %2128 = vmatprep.mubr.bf16.mxu0 0
        %2129 = vmatmul.mubr.bf16.gmra.mrb[0].mxu0 %v2046
        %v2130 = vpop.f32.mrb[0].mxu0
        %v2131 = vadd.f32 0.0, %v2130
        %v2132 = vpop.f32.mrb[0].mxu0
        %v2133 = vpop.f32.mrb[0].mxu0
        %v2134 = vadd.f32 0.0, %v2133
        %v2135 = vpop.f32.mrb[0].mxu0
        %2136 = vmatprep.mubr.bf16.mxu0 0
        %2137 = vmatmul.mubr.bf16.gmra.mrb[0].mxu0 %v2049
        %v2138 = vpop.f32.mrb[0].mxu0
        %v2139 = vadd.f32 0.0, %v2138
        %v2140 = vpop.f32.mrb[0].mxu0
        %v2141 = vpop.f32.mrb[0].mxu0
        %v2142 = vadd.f32 0.0, %v2141
        %v2143 = vpop.f32.mrb[0].mxu0
        %2144 = vmatprep.mubr.bf16.mxu0 0
        %2145 = vmatmul.mubr.bf16.gmra.mrb[0].mxu0 %v2052
        %v2146 = vpop.f32.mrb[0].mxu0
        %v2147 = vadd.f32 0.0, %v2146
        %v2148 = vpop.f32.mrb[0].mxu0
        %v2149 = vpop.f32.mrb[0].mxu0
        %v2150 = vadd.f32 0.0, %v2149
        %v2151 = vpop.f32.mrb[0].mxu0
        %2152 = vmatprep.mubr.bf16.mxu0 0
        %2153 = vmatmul.mubr.bf16.gmra.mrb[0].mxu0 %v2055
        %v2154 = vpop.f32.mrb[0].mxu0
        %v2155 = vadd.f32 0.0, %v2154
        %v2156 = vpop.f32.mrb[0].mxu0
        %v2157 = vpop.f32.mrb[0].mxu0
        %v2158 = vadd.f32 0.0, %v2157
        %v2159 = vpop.f32.mrb[0].mxu0
        %2160 = vmatprep.mubr.bf16.mxu0 0
        %2161 = vmatmul.mubr.bf16.gmra.mrb[0].mxu0 %v2058
        %v2162 = vpop.f32.mrb[0].mxu0
        %v2163 = vadd.f32 0.0, %v2162
        %v2164 = vpop.f32.mrb[0].mxu0
        %v2165 = vpop.f32.mrb[0].mxu0
        %v2166 = vadd.f32 0.0, %v2165
        %v2167 = vpop.f32.mrb[0].mxu0
        %2168 = vmatprep.mubr.bf16.mxu0 0
        %2169 = vmatmul.mubr.bf16.gmra.mrb[0].mxu0 %v2061
        %v2170 = vpop.f32.mrb[0].mxu0
        %v2171 = vadd.f32 0.0, %v2170
        %v2172 = vpop.f32.mrb[0].mxu0
        %v2173 = vpop.f32.mrb[0].mxu0
        %v2174 = vadd.f32 0.0, %v2173
        %v2175 = vpop.f32.mrb[0].mxu0
        %2176 = vmatprep.mubr.bf16.mxu0 0
        %2177 = vmatmul.mubr.bf16.gmra.mrb[0].mxu0 %v2064
        %v2178 = vpop.f32.mrb[0].mxu0
        %v2179 = vadd.f32 0.0, %v2178
        %v2180 = vpop.f32.mrb[0].mxu0
        %v2181 = vpop.f32.mrb[0].mxu0
        %v2182 = vadd.f32 0.0, %v2181
        %v2183 = vpop.f32.mrb[0].mxu0
        %2184 = vmatprep.mubr.bf16.mxu0 0
        %2185 = vmatmul.mubr.bf16.gmra.mrb[0].mxu0 %v2067
        %v2186 = vpop.f32.mrb[0].mxu0
        %v2187 = vadd.f32 0.0, %v2186
        %v2188 = vpop.f32.mrb[0].mxu0
        %v2189 = vpop.f32.mrb[0].mxu0
        %v2190 = vadd.f32 0.0, %v2189
        %v2191 = vpop.f32.mrb[0].mxu0
        %2192 = vmatprep.mubr.bf16.mxu0 0
        %2193 = vmatmul.mubr.bf16.gmra.mrb[0].mxu0 %v2070
        %v2194 = vpop.f32.mrb[0].mxu0
        %v2195 = vadd.f32 0.0, %v2194
        %v2196 = vpop.f32.mrb[0].mxu0
        %v2197 = vpop.f32.mrb[0].mxu0
        %v2198 = vadd.f32 0.0, %v2197
        %v2199 = vpop.f32.mrb[0].mxu0
        %2200 = vmatprep.mubr.bf16.mxu0 0
        %2201 = vmatmul.mubr.bf16.gmra.mrb[0].mxu0 %v2073
        %v2202 = vpop.f32.mrb[0].mxu0
        %v2203 = vadd.f32 0.0, %v2202
        %v2204 = vpop.f32.mrb[0].mxu0
        %v2205 = vpop.f32.mrb[0].mxu0
        %v2206 = vadd.f32 0.0, %v2205
        %v2207 = vpop.f32.mrb[0].mxu0
        %2208 = vmatprep.mubr.bf16.mxu0 0
        %2209 = vmatmul.mubr.bf16.gmra.mrb[0].mxu0 %v2076
        %v2210 = vpop.f32.mrb[0].mxu0
        %v2211 = vadd.f32 0.0, %v2210
        %v2212 = vpop.f32.mrb[0].mxu0
        %v2213 = vpop.f32.mrb[0].mxu0
        %v2214 = vadd.f32 0.0, %v2213
        %v2215 = vpop.f32.mrb[0].mxu0
        %2216 = vmatprep.mubr.bf16.mxu0 0
        %2217 = vmatmul.mubr.bf16.gmra.mrb[0].mxu0 %v2079
        %v2218 = vpop.f32.mrb[0].mxu0
        %v2219 = vadd.f32 0.0, %v2218
        %v2220 = vpop.f32.mrb[0].mxu0
        %v2221 = vpop.f32.mrb[0].mxu0
        %v2222 = vadd.f32 0.0, %v2221
        %v2223 = vpop.f32.mrb[0].mxu0
        %2224 = vmatprep.mubr.bf16.mxu0 0
        %2225 = vmatmul.mubr.bf16.gmra.mrb[0].mxu0 %v2082
        %v2226 = vpop.f32.mrb[0].mxu0
        %v2227 = vadd.f32 0.0, %v2226
        %v2228 = vpop.f32.mrb[0].mxu0
        %v2229 = vpop.f32.mrb[0].mxu0
        %v2230 = vadd.f32 0.0, %v2229
        %v2231 = vpop.f32.mrb[0].mxu0
        %2232 = vmatprep.mubr.bf16.mxu0 0
        %2233 = vmatmul.mubr.bf16.gmra.mrb[0].mxu0 %v2085
        %v2234 = vpop.f32.mrb[0].mxu0
        %v2235 = vadd.f32 0.0, %v2234
        %v2236 = vpop.f32.mrb[0].mxu0
        %v2237 = vpop.f32.mrb[0].mxu0
        %v2238 = vadd.f32 0.0, %v2237
        %v2239 = vpop.f32.mrb[0].mxu0
        %2240 = vmatprep.mubr.bf16.mxu0 0
        %2241 = vmatmul.mubr.bf16.gmra.mrb[0].mxu0 %v2088
        %v2242 = vpop.f32.mrb[0].mxu0
        %v2243 = vadd.f32 0.0, %v2242
        %v2244 = vpop.f32.mrb[0].mxu0
        %v2245 = vpop.f32.mrb[0].mxu0
        %v2246 = vadd.f32 0.0, %v2245
        %v2247 = vpop.f32.mrb[0].mxu0
        %2248 = vmatprep.mubr.bf16.mxu0 0
        %2249 = vmatmul.mubr.bf16.gmra.mrb[0].mxu0 %v2091
        %v2250 = vpop.f32.mrb[0].mxu0
        %v2251 = vadd.f32 0.0, %v2250
        %v2252 = vpop.f32.mrb[0].mxu0
        %v2253 = vpop.f32.mrb[0].mxu0
        %v2254 = vadd.f32 0.0, %v2253
        %v2255 = vpop.f32.mrb[0].mxu0
        %2256 = vdwg.mxu0
        %v2257 = vadd.f32 %v1962, %v2131
        %v2258 = vadd.f32 %v1963, %v2134
        %v2259 = vadd.f32 %v1964, %v2139
        %v2260 = vadd.f32 %v1965, %v2142
        %v2261 = vadd.f32 %v1966, %v2147
        %v2262 = vadd.f32 %v1967, %v2150
        %v2263 = vadd.f32 %v1968, %v2155
        %v2264 = vadd.f32 %v1969, %v2158
        %v2265 = vadd.f32 %v1970, %v2163
        %v2266 = vadd.f32 %v1971, %v2166
        %v2267 = vadd.f32 %v1972, %v2171
        %v2268 = vadd.f32 %v1973, %v2174
        %v2269 = vadd.f32 %v1974, %v2179
        %v2270 = vadd.f32 %v1975, %v2182
        %v2271 = vadd.f32 %v1976, %v2187
        %v2272 = vadd.f32 %v1977, %v2190
        %v2273 = vadd.f32 %v1978, %v2195
        %v2274 = vadd.f32 %v1979, %v2198
        %v2275 = vadd.f32 %v1980, %v2203
        %v2276 = vadd.f32 %v1981, %v2206
        %v2277 = vadd.f32 %v1982, %v2211
        %v2278 = vadd.f32 %v1983, %v2214
        %v2279 = vadd.f32 %v1984, %v2219
        %v2280 = vadd.f32 %v1985, %v2222
        %v2281 = vadd.f32 %v1986, %v2227
        %v2282 = vadd.f32 %v1987, %v2230
        %v2283 = vadd.f32 %v1988, %v2235
        %v2284 = vadd.f32 %v1989, %v2238
        %v2285 = vadd.f32 %v1990, %v2243
        %v2286 = vadd.f32 %v1991, %v2246
        %v2287 = vadd.f32 %v1992, %v2251
        %v2288 = vadd.f32 %v1993, %v2254
        %v2289 = vld [vmem:[%s1994 + $0x1] sm:$0xff]
        %v2290 = vld [vmem:[%s1994 + $0x9] sm:$0xff]
        %v2291 = vld [vmem:[%s1994 + $0x19] sm:$0xff]
        %v2292 = vld [vmem:[%s1994 + $0x21] sm:$0xff]
        %v2293 = vld [vmem:[%s1994 + $0x31] sm:$0xff]
        %v2294 = vld [vmem:[%s1994 + $0x39] sm:$0xff]
        %v2295 = vld [vmem:[%s1994 + $0x49] sm:$0xff]
        %v2296 = vld [vmem:[%s1994 + $0x51] sm:$0xff]
        %v2297 = vld [vmem:[%s1994 + $0x61] sm:$0xff]
        %v2298 = vld [vmem:[%s1994 + $0x69] sm:$0xff]
        %v2299 = vld [vmem:[%s1994 + $0x79] sm:$0xff]
        %v2300 = vld [vmem:[%s1994 + $0x81] sm:$0xff]
        %v2301 = vld [vmem:[%s1994 + $0x91] sm:$0xff]
        %v2302 = vld [vmem:[%s1994 + $0x99] sm:$0xff]
        %v2303 = vld [vmem:[%s1994 + $0xa9] sm:$0xff]
        %v2304 = vld [vmem:[%s1994 + $0xb1] sm:$0xff]
        %v2305 = vld [vmem:[%s1994 + $0xc1] sm:$0xff]
        %v2306 = vld [vmem:[%s1994 + $0xc9] sm:$0xff]
        %v2307 = vld [vmem:[%s1994 + $0xd9] sm:$0xff]
        %v2308 = vld [vmem:[%s1994 + $0xe1] sm:$0xff]
        %v2309 = vld [vmem:[%s1994 + $0xf1] sm:$0xff]
        %v2310 = vld [vmem:[%s1994 + $0xf9] sm:$0xff]
        %v2311 = vld [vmem:[%s1994 + $0x109] sm:$0xff]
        %v2312 = vld [vmem:[%s1994 + $0x111] sm:$0xff]
        %v2313 = vld [vmem:[%s1994 + $0x121] sm:$0xff]
        %v2314 = vld [vmem:[%s1994 + $0x129] sm:$0xff]
        %v2315 = vld [vmem:[%s1994 + $0x139] sm:$0xff]
        %v2316 = vld [vmem:[%s1994 + $0x141] sm:$0xff]
        %v2317 = vld [vmem:[%s1994 + $0x151] sm:$0xff]
        %v2318 = vld [vmem:[%s1994 + $0x159] sm:$0xff]
        %v2319 = vld [vmem:[%s1994 + $0x169] sm:$0xff]
        %v2320 = vld [vmem:[%s1994 + $0x171] sm:$0xff]
        %v2321 = vpack.c.bf16 %v2290, %v2289
        %v2322 = vpack.c.bf16 %v2292, %v2291
        %v2323 = vpack.c.bf16 %v2294, %v2293
        %v2324 = vpack.c.bf16 %v2296, %v2295
        %v2325 = vpack.c.bf16 %v2298, %v2297
        %v2326 = vpack.c.bf16 %v2300, %v2299
        %v2327 = vpack.c.bf16 %v2302, %v2301
        %v2328 = vpack.c.bf16 %v2304, %v2303
        %v2329 = vpack.c.bf16 %v2306, %v2305
        %v2330 = vpack.c.bf16 %v2308, %v2307
        %v2331 = vpack.c.bf16 %v2310, %v2309
        %v2332 = vpack.c.bf16 %v2312, %v2311
        %v2333 = vpack.c.bf16 %v2314, %v2313
        %v2334 = vpack.c.bf16 %v2316, %v2315
        %v2335 = vpack.c.bf16 %v2318, %v2317
        %v2336 = vpack.c.bf16 %v2320, %v2319
        %s2337 = scalar_lea.vmem %s1, 14
        %v2338 = vld [vmem:[%s2337] sm:$0x3]
        %v2340 = vsel %vm183, %v2321, 0
        %v2343 = vsel %vm183, %v2322, 0
        %v2346 = vsel %vm183, %v2323, 0
        %v2349 = vsel %vm183, %v2324, 0
        %v2352 = vsel %vm183, %v2325, 0
        %v2355 = vsel %vm183, %v2326, 0
        %v2358 = vsel %vm183, %v2327, 0
        %v2361 = vsel %vm183, %v2328, 0
        %v2364 = vsel %vm183, %v2329, 0
        %v2367 = vsel %vm183, %v2330, 0
        %v2370 = vsel %vm183, %v2331, 0
        %v2373 = vsel %vm183, %v2332, 0
        %v2376 = vsel %vm183, %v2333, 0
        %v2379 = vsel %vm183, %v2334, 0
        %v2382 = vsel %vm183, %v2335, 0
        %v2385 = vsel %vm183, %v2336, 0
        %v2388 = vsel %vm441, %v2338, 0
        %2390 = vmatprep.subr.bf16.mxu0 0
        %2391 = vmatpush1.bf16.msra.mxu0 %v2388
        %2392 = vmatprep.subr.bf16.mxu0 0
        %2393 = vmatpush1.bf16.msra.mxu0 0
        %2394 = vmatprep.subr.bf16.mxu0 0
        %2395 = vmatpush1.bf16.msra.mxu0 0
        %2396 = vmatprep.subr.bf16.mxu0 0
        %2397 = vmatpush1.bf16.msra.mxu0 0
        %2398 = vmatprep.subr.bf16.mxu0 0
        %2399 = vmatpush1.bf16.msra.mxu0 0
        %2400 = vmatprep.subr.bf16.mxu0 0
        %2401 = vmatpush1.bf16.msra.mxu0 0
        %2402 = vmatprep.subr.bf16.mxu0 0
        %2403 = vmatpush1.bf16.msra.mxu0 0
        %2404 = vmatprep.subr.bf16.mxu0 0
        %2405 = vmatpush1.bf16.msra.mxu0 0
        %2406 = vmatprep.subr.bf16.mxu0 0
        %2407 = vmatpush1.bf16.msra.mxu0 0
        %2408 = vmatprep.subr.bf16.mxu0 0
        %2409 = vmatpush1.bf16.msra.mxu0 0
        %2410 = vmatprep.subr.bf16.mxu0 0
        %2411 = vmatpush1.bf16.msra.mxu0 0
        %2412 = vmatprep.subr.bf16.mxu0 0
        %2413 = vmatpush1.bf16.msra.mxu0 0
        %2414 = vmatprep.subr.bf16.mxu0 0
        %2415 = vmatpush1.bf16.msra.mxu0 0
        %2416 = vmatprep.subr.bf16.mxu0 0
        %2417 = vmatpush1.bf16.msra.mxu0 0
        %2418 = vmatprep.subr.bf16.mxu0 0
        %2419 = vmatpush1.bf16.msra.mxu0 0
        %2420 = vmatprep.subr.bf16.mxu0 0
        %2421 = vmatpush1.bf16.msra.mxu0 0
        %2422 = vmatprep.mubr.bf16.mxu0 0
        %2423 = vmatmul.mubr.bf16.gmra.mrb[0].mxu0 %v2340
        %v2424 = vpop.f32.mrb[0].mxu0
        %v2425 = vadd.f32 0.0, %v2424
        %v2426 = vpop.f32.mrb[0].mxu0
        %v2427 = vpop.f32.mrb[0].mxu0
        %v2428 = vadd.f32 0.0, %v2427
        %v2429 = vpop.f32.mrb[0].mxu0
        %2430 = vmatprep.mubr.bf16.mxu0 0
        %2431 = vmatmul.mubr.bf16.gmra.mrb[0].mxu0 %v2343
        %v2432 = vpop.f32.mrb[0].mxu0
        %v2433 = vadd.f32 0.0, %v2432
        %v2434 = vpop.f32.mrb[0].mxu0
        %v2435 = vpop.f32.mrb[0].mxu0
        %v2436 = vadd.f32 0.0, %v2435
        %v2437 = vpop.f32.mrb[0].mxu0
        %2438 = vmatprep.mubr.bf16.mxu0 0
        %2439 = vmatmul.mubr.bf16.gmra.mrb[0].mxu0 %v2346
        %v2440 = vpop.f32.mrb[0].mxu0
        %v2441 = vadd.f32 0.0, %v2440
        %v2442 = vpop.f32.mrb[0].mxu0
        %v2443 = vpop.f32.mrb[0].mxu0
        %v2444 = vadd.f32 0.0, %v2443
        %v2445 = vpop.f32.mrb[0].mxu0
        %2446 = vmatprep.mubr.bf16.mxu0 0
        %2447 = vmatmul.mubr.bf16.gmra.mrb[0].mxu0 %v2349
        %v2448 = vpop.f32.mrb[0].mxu0
        %v2449 = vadd.f32 0.0, %v2448
        %v2450 = vpop.f32.mrb[0].mxu0
        %v2451 = vpop.f32.mrb[0].mxu0
        %v2452 = vadd.f32 0.0, %v2451
        %v2453 = vpop.f32.mrb[0].mxu0
        %2454 = vmatprep.mubr.bf16.mxu0 0
        %2455 = vmatmul.mubr.bf16.gmra.mrb[0].mxu0 %v2352
        %v2456 = vpop.f32.mrb[0].mxu0
        %v2457 = vadd.f32 0.0, %v2456
        %v2458 = vpop.f32.mrb[0].mxu0
        %v2459 = vpop.f32.mrb[0].mxu0
        %v2460 = vadd.f32 0.0, %v2459
        %v2461 = vpop.f32.mrb[0].mxu0
        %2462 = vmatprep.mubr.bf16.mxu0 0
        %2463 = vmatmul.mubr.bf16.gmra.mrb[0].mxu0 %v2355
        %v2464 = vpop.f32.mrb[0].mxu0
        %v2465 = vadd.f32 0.0, %v2464
        %v2466 = vpop.f32.mrb[0].mxu0
        %v2467 = vpop.f32.mrb[0].mxu0
        %v2468 = vadd.f32 0.0, %v2467
        %v2469 = vpop.f32.mrb[0].mxu0
        %2470 = vmatprep.mubr.bf16.mxu0 0
        %2471 = vmatmul.mubr.bf16.gmra.mrb[0].mxu0 %v2358
        %v2472 = vpop.f32.mrb[0].mxu0
        %v2473 = vadd.f32 0.0, %v2472
        %v2474 = vpop.f32.mrb[0].mxu0
        %v2475 = vpop.f32.mrb[0].mxu0
        %v2476 = vadd.f32 0.0, %v2475
        %v2477 = vpop.f32.mrb[0].mxu0
        %2478 = vmatprep.mubr.bf16.mxu0 0
        %2479 = vmatmul.mubr.bf16.gmra.mrb[0].mxu0 %v2361
        %v2480 = vpop.f32.mrb[0].mxu0
        %v2481 = vadd.f32 0.0, %v2480
        %v2482 = vpop.f32.mrb[0].mxu0
        %v2483 = vpop.f32.mrb[0].mxu0
        %v2484 = vadd.f32 0.0, %v2483
        %v2485 = vpop.f32.mrb[0].mxu0
        %2486 = vmatprep.mubr.bf16.mxu0 0
        %2487 = vmatmul.mubr.bf16.gmra.mrb[0].mxu0 %v2364
        %v2488 = vpop.f32.mrb[0].mxu0
        %v2489 = vadd.f32 0.0, %v2488
        %v2490 = vpop.f32.mrb[0].mxu0
        %v2491 = vpop.f32.mrb[0].mxu0
        %v2492 = vadd.f32 0.0, %v2491
        %v2493 = vpop.f32.mrb[0].mxu0
        %2494 = vmatprep.mubr.bf16.mxu0 0
        %2495 = vmatmul.mubr.bf16.gmra.mrb[0].mxu0 %v2367
        %v2496 = vpop.f32.mrb[0].mxu0
        %v2497 = vadd.f32 0.0, %v2496
        %v2498 = vpop.f32.mrb[0].mxu0
        %v2499 = vpop.f32.mrb[0].mxu0
        %v2500 = vadd.f32 0.0, %v2499
        %v2501 = vpop.f32.mrb[0].mxu0
        %2502 = vmatprep.mubr.bf16.mxu0 0
        %2503 = vmatmul.mubr.bf16.gmra.mrb[0].mxu0 %v2370
        %v2504 = vpop.f32.mrb[0].mxu0
        %v2505 = vadd.f32 0.0, %v2504
        %v2506 = vpop.f32.mrb[0].mxu0
        %v2507 = vpop.f32.mrb[0].mxu0
        %v2508 = vadd.f32 0.0, %v2507
        %v2509 = vpop.f32.mrb[0].mxu0
        %2510 = vmatprep.mubr.bf16.mxu0 0
        %2511 = vmatmul.mubr.bf16.gmra.mrb[0].mxu0 %v2373
        %v2512 = vpop.f32.mrb[0].mxu0
        %v2513 = vadd.f32 0.0, %v2512
        %v2514 = vpop.f32.mrb[0].mxu0
        %v2515 = vpop.f32.mrb[0].mxu0
        %v2516 = vadd.f32 0.0, %v2515
        %v2517 = vpop.f32.mrb[0].mxu0
        %2518 = vmatprep.mubr.bf16.mxu0 0
        %2519 = vmatmul.mubr.bf16.gmra.mrb[0].mxu0 %v2376
        %v2520 = vpop.f32.mrb[0].mxu0
        %v2521 = vadd.f32 0.0, %v2520
        %v2522 = vpop.f32.mrb[0].mxu0
        %v2523 = vpop.f32.mrb[0].mxu0
        %v2524 = vadd.f32 0.0, %v2523
        %v2525 = vpop.f32.mrb[0].mxu0
        %2526 = vmatprep.mubr.bf16.mxu0 0
        %2527 = vmatmul.mubr.bf16.gmra.mrb[0].mxu0 %v2379
        %v2528 = vpop.f32.mrb[0].mxu0
        %v2529 = vadd.f32 0.0, %v2528
        %v2530 = vpop.f32.mrb[0].mxu0
        %v2531 = vpop.f32.mrb[0].mxu0
        %v2532 = vadd.f32 0.0, %v2531
        %v2533 = vpop.f32.mrb[0].mxu0
        %2534 = vmatprep.mubr.bf16.mxu0 0
        %2535 = vmatmul.mubr.bf16.gmra.mrb[0].mxu0 %v2382
        %v2536 = vpop.f32.mrb[0].mxu0
        %v2537 = vadd.f32 0.0, %v2536
        %v2538 = vpop.f32.mrb[0].mxu0
        %v2539 = vpop.f32.mrb[0].mxu0
        %v2540 = vadd.f32 0.0, %v2539
        %v2541 = vpop.f32.mrb[0].mxu0
        %2542 = vmatprep.mubr.bf16.mxu0 0
        %2543 = vmatmul.mubr.bf16.gmra.mrb[0].mxu0 %v2385
        %v2544 = vpop.f32.mrb[0].mxu0
        %v2545 = vadd.f32 0.0, %v2544
        %v2546 = vpop.f32.mrb[0].mxu0
        %v2547 = vpop.f32.mrb[0].mxu0
        %v2548 = vadd.f32 0.0, %v2547
        %v2549 = vpop.f32.mrb[0].mxu0
        %2550 = vdwg.mxu0
        %v2551 = vadd.f32 %v2257, %v2425
        %v2552 = vadd.f32 %v2258, %v2428
        %v2553 = vadd.f32 %v2259, %v2433
        %v2554 = vadd.f32 %v2260, %v2436
        %v2555 = vadd.f32 %v2261, %v2441
        %v2556 = vadd.f32 %v2262, %v2444
        %v2557 = vadd.f32 %v2263, %v2449
        %v2558 = vadd.f32 %v2264, %v2452
        %v2559 = vadd.f32 %v2265, %v2457
        %v2560 = vadd.f32 %v2266, %v2460
        %v2561 = vadd.f32 %v2267, %v2465
        %v2562 = vadd.f32 %v2268, %v2468
        %v2563 = vadd.f32 %v2269, %v2473
        %v2564 = vadd.f32 %v2270, %v2476
        %v2565 = vadd.f32 %v2271, %v2481
        %v2566 = vadd.f32 %v2272, %v2484
        %v2567 = vadd.f32 %v2273, %v2489
        %v2568 = vadd.f32 %v2274, %v2492
        %v2569 = vadd.f32 %v2275, %v2497
        %v2570 = vadd.f32 %v2276, %v2500
        %v2571 = vadd.f32 %v2277, %v2505
        %v2572 = vadd.f32 %v2278, %v2508
        %v2573 = vadd.f32 %v2279, %v2513
        %v2574 = vadd.f32 %v2280, %v2516
        %v2575 = vadd.f32 %v2281, %v2521
        %v2576 = vadd.f32 %v2282, %v2524
        %v2577 = vadd.f32 %v2283, %v2529
        %v2578 = vadd.f32 %v2284, %v2532
        %v2579 = vadd.f32 %v2285, %v2537
        %v2580 = vadd.f32 %v2286, %v2540
        %v2581 = vadd.f32 %v2287, %v2545
        %v2582 = vadd.f32 %v2288, %v2548
        %v2583 = vld [vmem:[%s1994 + $0x2] sm:$0xff]
        %v2584 = vld [vmem:[%s1994 + $0xa] sm:$0xff]
        %v2585 = vld [vmem:[%s1994 + $0x1a] sm:$0xff]
        %v2586 = vld [vmem:[%s1994 + $0x22] sm:$0xff]
        %v2587 = vld [vmem:[%s1994 + $0x32] sm:$0xff]
        %v2588 = vld [vmem:[%s1994 + $0x3a] sm:$0xff]
        %v2589 = vld [vmem:[%s1994 + $0x4a] sm:$0xff]
        %v2590 = vld [vmem:[%s1994 + $0x52] sm:$0xff]
        %v2591 = vld [vmem:[%s1994 + $0x62] sm:$0xff]
        %v2592 = vld [vmem:[%s1994 + $0x6a] sm:$0xff]
        %v2593 = vld [vmem:[%s1994 + $0x7a] sm:$0xff]
        %v2594 = vld [vmem:[%s1994 + $0x82] sm:$0xff]
        %v2595 = vld [vmem:[%s1994 + $0x92] sm:$0xff]
        %v2596 = vld [vmem:[%s1994 + $0x9a] sm:$0xff]
        %v2597 = vld [vmem:[%s1994 + $0xaa] sm:$0xff]
        %v2598 = vld [vmem:[%s1994 + $0xb2] sm:$0xff]
        %v2599 = vld [vmem:[%s1994 + $0xc2] sm:$0xff]
        %v2600 = vld [vmem:[%s1994 + $0xca] sm:$0xff]
        %v2601 = vld [vmem:[%s1994 + $0xda] sm:$0xff]
        %v2602 = vld [vmem:[%s1994 + $0xe2] sm:$0xff]
        %v2603 = vld [vmem:[%s1994 + $0xf2] sm:$0xff]
        %v2604 = vld [vmem:[%s1994 + $0xfa] sm:$0xff]
        %v2605 = vld [vmem:[%s1994 + $0x10a] sm:$0xff]
        %v2606 = vld [vmem:[%s1994 + $0x112] sm:$0xff]
        %v2607 = vld [vmem:[%s1994 + $0x122] sm:$0xff]
        %v2608 = vld [vmem:[%s1994 + $0x12a] sm:$0xff]
        %v2609 = vld [vmem:[%s1994 + $0x13a] sm:$0xff]
        %v2610 = vld [vmem:[%s1994 + $0x142] sm:$0xff]
        %v2611 = vld [vmem:[%s1994 + $0x152] sm:$0xff]
        %v2612 = vld [vmem:[%s1994 + $0x15a] sm:$0xff]
        %v2613 = vld [vmem:[%s1994 + $0x16a] sm:$0xff]
        %v2614 = vld [vmem:[%s1994 + $0x172] sm:$0xff]
        %v2615 = vpack.c.bf16 %v2584, %v2583
        %v2616 = vpack.c.bf16 %v2586, %v2585
        %v2617 = vpack.c.bf16 %v2588, %v2587
        %v2618 = vpack.c.bf16 %v2590, %v2589
        %v2619 = vpack.c.bf16 %v2592, %v2591
        %v2620 = vpack.c.bf16 %v2594, %v2593
        %v2621 = vpack.c.bf16 %v2596, %v2595
        %v2622 = vpack.c.bf16 %v2598, %v2597
        %v2623 = vpack.c.bf16 %v2600, %v2599
        %v2624 = vpack.c.bf16 %v2602, %v2601
        %v2625 = vpack.c.bf16 %v2604, %v2603
        %v2626 = vpack.c.bf16 %v2606, %v2605
        %v2627 = vpack.c.bf16 %v2608, %v2607
        %v2628 = vpack.c.bf16 %v2610, %v2609
        %v2629 = vpack.c.bf16 %v2612, %v2611
        %v2630 = vpack.c.bf16 %v2614, %v2613
        %s2631 = scalar_lea.vmem %s1, 16
        %v2632 = vld [vmem:[%s2631] sm:$0x3]
        %v2634 = vsel %vm183, %v2615, 0
        %v2637 = vsel %vm183, %v2616, 0
        %v2640 = vsel %vm183, %v2617, 0
        %v2643 = vsel %vm183, %v2618, 0
        %v2646 = vsel %vm183, %v2619, 0
        %v2649 = vsel %vm183, %v2620, 0
        %v2652 = vsel %vm183, %v2621, 0
        %v2655 = vsel %vm183, %v2622, 0
        %v2658 = vsel %vm183, %v2623, 0
        %v2661 = vsel %vm183, %v2624, 0
        %v2664 = vsel %vm183, %v2625, 0
        %v2667 = vsel %vm183, %v2626, 0
        %v2670 = vsel %vm183, %v2627, 0
        %v2673 = vsel %vm183, %v2628, 0
        %v2676 = vsel %vm183, %v2629, 0
        %v2679 = vsel %vm183, %v2630, 0
        %v2682 = vsel %vm441, %v2632, 0
        %2684 = vmatprep.subr.bf16.mxu0 0
        %2685 = vmatpush1.bf16.msra.mxu0 %v2682
        %2686 = vmatprep.subr.bf16.mxu0 0
        %2687 = vmatpush1.bf16.msra.mxu0 0
        %2688 = vmatprep.subr.bf16.mxu0 0
        %2689 = vmatpush1.bf16.msra.mxu0 0
        %2690 = vmatprep.subr.bf16.mxu0 0
        %2691 = vmatpush1.bf16.msra.mxu0 0
        %2692 = vmatprep.subr.bf16.mxu0 0
        %2693 = vmatpush1.bf16.msra.mxu0 0
        %2694 = vmatprep.subr.bf16.mxu0 0
        %2695 = vmatpush1.bf16.msra.mxu0 0
        %2696 = vmatprep.subr.bf16.mxu0 0
        %2697 = vmatpush1.bf16.msra.mxu0 0
        %2698 = vmatprep.subr.bf16.mxu0 0
        %2699 = vmatpush1.bf16.msra.mxu0 0
        %2700 = vmatprep.subr.bf16.mxu0 0
        %2701 = vmatpush1.bf16.msra.mxu0 0
        %2702 = vmatprep.subr.bf16.mxu0 0
        %2703 = vmatpush1.bf16.msra.mxu0 0
        %2704 = vmatprep.subr.bf16.mxu0 0
        %2705 = vmatpush1.bf16.msra.mxu0 0
        %2706 = vmatprep.subr.bf16.mxu0 0
        %2707 = vmatpush1.bf16.msra.mxu0 0
        %2708 = vmatprep.subr.bf16.mxu0 0
        %2709 = vmatpush1.bf16.msra.mxu0 0
        %2710 = vmatprep.subr.bf16.mxu0 0
        %2711 = vmatpush1.bf16.msra.mxu0 0
        %2712 = vmatprep.subr.bf16.mxu0 0
        %2713 = vmatpush1.bf16.msra.mxu0 0
        %2714 = vmatprep.subr.bf16.mxu0 0
        %2715 = vmatpush1.bf16.msra.mxu0 0
        %2716 = vmatprep.mubr.bf16.mxu0 0
        %2717 = vmatmul.mubr.bf16.gmra.mrb[0].mxu0 %v2634
        %v2718 = vpop.f32.mrb[0].mxu0
        %v2719 = vadd.f32 0.0, %v2718
        %v2720 = vpop.f32.mrb[0].mxu0
        %v2721 = vpop.f32.mrb[0].mxu0
        %v2722 = vadd.f32 0.0, %v2721
        %v2723 = vpop.f32.mrb[0].mxu0
        %2724 = vmatprep.mubr.bf16.mxu0 0
        %2725 = vmatmul.mubr.bf16.gmra.mrb[0].mxu0 %v2637
        %v2726 = vpop.f32.mrb[0].mxu0
        %v2727 = vadd.f32 0.0, %v2726
        %v2728 = vpop.f32.mrb[0].mxu0
        %v2729 = vpop.f32.mrb[0].mxu0
        %v2730 = vadd.f32 0.0, %v2729
        %v2731 = vpop.f32.mrb[0].mxu0
        %2732 = vmatprep.mubr.bf16.mxu0 0
        %2733 = vmatmul.mubr.bf16.gmra.mrb[0].mxu0 %v2640
        %v2734 = vpop.f32.mrb[0].mxu0
        %v2735 = vadd.f32 0.0, %v2734
        %v2736 = vpop.f32.mrb[0].mxu0
        %v2737 = vpop.f32.mrb[0].mxu0
        %v2738 = vadd.f32 0.0, %v2737
        %v2739 = vpop.f32.mrb[0].mxu0
        %2740 = vmatprep.mubr.bf16.mxu0 0
        %2741 = vmatmul.mubr.bf16.gmra.mrb[0].mxu0 %v2643
        %v2742 = vpop.f32.mrb[0].mxu0
        %v2743 = vadd.f32 0.0, %v2742
        %v2744 = vpop.f32.mrb[0].mxu0
        %v2745 = vpop.f32.mrb[0].mxu0
        %v2746 = vadd.f32 0.0, %v2745
        %v2747 = vpop.f32.mrb[0].mxu0
        %2748 = vmatprep.mubr.bf16.mxu0 0
        %2749 = vmatmul.mubr.bf16.gmra.mrb[0].mxu0 %v2646
        %v2750 = vpop.f32.mrb[0].mxu0
        %v2751 = vadd.f32 0.0, %v2750
        %v2752 = vpop.f32.mrb[0].mxu0
        %v2753 = vpop.f32.mrb[0].mxu0
        %v2754 = vadd.f32 0.0, %v2753
        %v2755 = vpop.f32.mrb[0].mxu0
        %2756 = vmatprep.mubr.bf16.mxu0 0
        %2757 = vmatmul.mubr.bf16.gmra.mrb[0].mxu0 %v2649
        %v2758 = vpop.f32.mrb[0].mxu0
        %v2759 = vadd.f32 0.0, %v2758
        %v2760 = vpop.f32.mrb[0].mxu0
        %v2761 = vpop.f32.mrb[0].mxu0
        %v2762 = vadd.f32 0.0, %v2761
        %v2763 = vpop.f32.mrb[0].mxu0
        %2764 = vmatprep.mubr.bf16.mxu0 0
        %2765 = vmatmul.mubr.bf16.gmra.mrb[0].mxu0 %v2652
        %v2766 = vpop.f32.mrb[0].mxu0
        %v2767 = vadd.f32 0.0, %v2766
        %v2768 = vpop.f32.mrb[0].mxu0
        %v2769 = vpop.f32.mrb[0].mxu0
        %v2770 = vadd.f32 0.0, %v2769
        %v2771 = vpop.f32.mrb[0].mxu0
        %2772 = vmatprep.mubr.bf16.mxu0 0
        %2773 = vmatmul.mubr.bf16.gmra.mrb[0].mxu0 %v2655
        %v2774 = vpop.f32.mrb[0].mxu0
        %v2775 = vadd.f32 0.0, %v2774
        %v2776 = vpop.f32.mrb[0].mxu0
        %v2777 = vpop.f32.mrb[0].mxu0
        %v2778 = vadd.f32 0.0, %v2777
        %v2779 = vpop.f32.mrb[0].mxu0
        %2780 = vmatprep.mubr.bf16.mxu0 0
        %2781 = vmatmul.mubr.bf16.gmra.mrb[0].mxu0 %v2658
        %v2782 = vpop.f32.mrb[0].mxu0
        %v2783 = vadd.f32 0.0, %v2782
        %v2784 = vpop.f32.mrb[0].mxu0
        %v2785 = vpop.f32.mrb[0].mxu0
        %v2786 = vadd.f32 0.0, %v2785
        %v2787 = vpop.f32.mrb[0].mxu0
        %2788 = vmatprep.mubr.bf16.mxu0 0
        %2789 = vmatmul.mubr.bf16.gmra.mrb[0].mxu0 %v2661
        %v2790 = vpop.f32.mrb[0].mxu0
        %v2791 = vadd.f32 0.0, %v2790
        %v2792 = vpop.f32.mrb[0].mxu0
        %v2793 = vpop.f32.mrb[0].mxu0
        %v2794 = vadd.f32 0.0, %v2793
        %v2795 = vpop.f32.mrb[0].mxu0
        %2796 = vmatprep.mubr.bf16.mxu0 0
        %2797 = vmatmul.mubr.bf16.gmra.mrb[0].mxu0 %v2664
        %v2798 = vpop.f32.mrb[0].mxu0
        %v2799 = vadd.f32 0.0, %v2798
        %v2800 = vpop.f32.mrb[0].mxu0
        %v2801 = vpop.f32.mrb[0].mxu0
        %v2802 = vadd.f32 0.0, %v2801
        %v2803 = vpop.f32.mrb[0].mxu0
        %2804 = vmatprep.mubr.bf16.mxu0 0
        %2805 = vmatmul.mubr.bf16.gmra.mrb[0].mxu0 %v2667
        %v2806 = vpop.f32.mrb[0].mxu0
        %v2807 = vadd.f32 0.0, %v2806
        %v2808 = vpop.f32.mrb[0].mxu0
        %v2809 = vpop.f32.mrb[0].mxu0
        %v2810 = vadd.f32 0.0, %v2809
        %v2811 = vpop.f32.mrb[0].mxu0
        %2812 = vmatprep.mubr.bf16.mxu0 0
        %2813 = vmatmul.mubr.bf16.gmra.mrb[0].mxu0 %v2670
        %v2814 = vpop.f32.mrb[0].mxu0
        %v2815 = vadd.f32 0.0, %v2814
        %v2816 = vpop.f32.mrb[0].mxu0
        %v2817 = vpop.f32.mrb[0].mxu0
        %v2818 = vadd.f32 0.0, %v2817
        %v2819 = vpop.f32.mrb[0].mxu0
        %2820 = vmatprep.mubr.bf16.mxu0 0
        %2821 = vmatmul.mubr.bf16.gmra.mrb[0].mxu0 %v2673
        %v2822 = vpop.f32.mrb[0].mxu0
        %v2823 = vadd.f32 0.0, %v2822
        %v2824 = vpop.f32.mrb[0].mxu0
        %v2825 = vpop.f32.mrb[0].mxu0
        %v2826 = vadd.f32 0.0, %v2825
        %v2827 = vpop.f32.mrb[0].mxu0
        %2828 = vmatprep.mubr.bf16.mxu0 0
        %2829 = vmatmul.mubr.bf16.gmra.mrb[0].mxu0 %v2676
        %v2830 = vpop.f32.mrb[0].mxu0
        %v2831 = vadd.f32 0.0, %v2830
        %v2832 = vpop.f32.mrb[0].mxu0
        %v2833 = vpop.f32.mrb[0].mxu0
        %v2834 = vadd.f32 0.0, %v2833
        %v2835 = vpop.f32.mrb[0].mxu0
        %2836 = vmatprep.mubr.bf16.mxu0 0
        %2837 = vmatmul.mubr.bf16.gmra.mrb[0].mxu0 %v2679
        %v2838 = vpop.f32.mrb[0].mxu0
        %v2839 = vadd.f32 0.0, %v2838
        %v2840 = vpop.f32.mrb[0].mxu0
        %v2841 = vpop.f32.mrb[0].mxu0
        %v2842 = vadd.f32 0.0, %v2841
        %v2843 = vpop.f32.mrb[0].mxu0
        %2844 = vdwg.mxu0
        %v2845 = vadd.f32 %v2551, %v2719
        %v2846 = vadd.f32 %v2552, %v2722
        %v2847 = vadd.f32 %v2553, %v2727
        %v2848 = vadd.f32 %v2554, %v2730
        %v2849 = vadd.f32 %v2555, %v2735
        %v2850 = vadd.f32 %v2556, %v2738
        %v2851 = vadd.f32 %v2557, %v2743
        %v2852 = vadd.f32 %v2558, %v2746
        %v2853 = vadd.f32 %v2559, %v2751
        %v2854 = vadd.f32 %v2560, %v2754
        %v2855 = vadd.f32 %v2561, %v2759
        %v2856 = vadd.f32 %v2562, %v2762
        %v2857 = vadd.f32 %v2563, %v2767
        %v2858 = vadd.f32 %v2564, %v2770
        %v2859 = vadd.f32 %v2565, %v2775
        %v2860 = vadd.f32 %v2566, %v2778
        %v2861 = vadd.f32 %v2567, %v2783
        %v2862 = vadd.f32 %v2568, %v2786
        %v2863 = vadd.f32 %v2569, %v2791
        %v2864 = vadd.f32 %v2570, %v2794
        %v2865 = vadd.f32 %v2571, %v2799
        %v2866 = vadd.f32 %v2572, %v2802
        %v2867 = vadd.f32 %v2573, %v2807
        %v2868 = vadd.f32 %v2574, %v2810
        %v2869 = vadd.f32 %v2575, %v2815
        %v2870 = vadd.f32 %v2576, %v2818
        %v2871 = vadd.f32 %v2577, %v2823
        %v2872 = vadd.f32 %v2578, %v2826
        %v2873 = vadd.f32 %v2579, %v2831
        %v2874 = vadd.f32 %v2580, %v2834
        %v2875 = vadd.f32 %v2581, %v2839
        %v2876 = vadd.f32 %v2582, %v2842
        %v2877 = vpack.c.bf16 %v2846, %v2845
        %v2878 = vpack.c.bf16 %v2848, %v2847
        %v2879 = vpack.c.bf16 %v2850, %v2849
        %v2880 = vpack.c.bf16 %v2852, %v2851
        %v2881 = vpack.c.bf16 %v2854, %v2853
        %v2882 = vpack.c.bf16 %v2856, %v2855
        %v2883 = vpack.c.bf16 %v2858, %v2857
        %v2884 = vpack.c.bf16 %v2860, %v2859
        %v2885 = vpack.c.bf16 %v2862, %v2861
        %v2886 = vpack.c.bf16 %v2864, %v2863
        %v2887 = vpack.c.bf16 %v2866, %v2865
        %v2888 = vpack.c.bf16 %v2868, %v2867
        %v2889 = vpack.c.bf16 %v2870, %v2869
        %v2890 = vpack.c.bf16 %v2872, %v2871
        %v2891 = vpack.c.bf16 %v2874, %v2873
        %v2892 = vpack.c.bf16 %v2876, %v2875
        %v2909 = vunpack.c.l.b16 %v2877
        %v2910 = vunpack.c.h.b16 %v2877
        %v2911 = vunpack.c.l.b16 %v2878
        %v2912 = vunpack.c.h.b16 %v2878
        %v2913 = vunpack.c.l.b16 %v2879
        %v2914 = vunpack.c.h.b16 %v2879
        %v2915 = vunpack.c.l.b16 %v2880
        %v2916 = vunpack.c.h.b16 %v2880
        %v2917 = vunpack.c.l.b16 %v2881
        %v2918 = vunpack.c.h.b16 %v2881
        %v2919 = vunpack.c.l.b16 %v2882
        %v2920 = vunpack.c.h.b16 %v2882
        %v2921 = vunpack.c.l.b16 %v2883
        %v2922 = vunpack.c.h.b16 %v2883
        %v2923 = vunpack.c.l.b16 %v2884
        %v2924 = vunpack.c.h.b16 %v2884
        %v2925 = vunpack.c.l.b16 %v2885
        %v2926 = vunpack.c.h.b16 %v2885
        %v2927 = vunpack.c.l.b16 %v2886
        %v2928 = vunpack.c.h.b16 %v2886
        %v2929 = vunpack.c.l.b16 %v2887
        %v2930 = vunpack.c.h.b16 %v2887
        %v2931 = vunpack.c.l.b16 %v2888
        %v2932 = vunpack.c.h.b16 %v2888
        %v2933 = vunpack.c.l.b16 %v2889
        %v2934 = vunpack.c.h.b16 %v2889
        %v2935 = vunpack.c.l.b16 %v2890
        %v2936 = vunpack.c.h.b16 %v2890
        %v2937 = vunpack.c.l.b16 %v2891
        %v2938 = vunpack.c.h.b16 %v2891
        %v2939 = vunpack.c.l.b16 %v2892
        %v2940 = vunpack.c.h.b16 %v2892
        %v2941 = vpack.c.b16 %v2909, %v2909
        %v2942 = vpack.c.b16 %v2910, %v2910
        %v2943 = vpack.c.b16 %v2911, %v2911
        %v2944 = vpack.c.b16 %v2912, %v2912
        %v2945 = vpack.c.b16 %v2913, %v2913
        %v2946 = vpack.c.b16 %v2914, %v2914
        %v2947 = vpack.c.b16 %v2915, %v2915
        %v2948 = vpack.c.b16 %v2916, %v2916
        %v2949 = vpack.c.b16 %v2917, %v2917
        %v2950 = vpack.c.b16 %v2918, %v2918
        %v2951 = vpack.c.b16 %v2919, %v2919
        %v2952 = vpack.c.b16 %v2920, %v2920
        %v2953 = vpack.c.b16 %v2921, %v2921
        %v2954 = vpack.c.b16 %v2922, %v2922
        %v2955 = vpack.c.b16 %v2923, %v2923
        %v2956 = vpack.c.b16 %v2924, %v2924
        %v2957 = vpack.c.b16 %v2925, %v2925
        %v2958 = vpack.c.b16 %v2926, %v2926
        %v2959 = vpack.c.b16 %v2927, %v2927
        %v2960 = vpack.c.b16 %v2928, %v2928
        %v2961 = vpack.c.b16 %v2929, %v2929
        %v2962 = vpack.c.b16 %v2930, %v2930
        %v2963 = vpack.c.b16 %v2931, %v2931
        %v2964 = vpack.c.b16 %v2932, %v2932
        %v2965 = vpack.c.b16 %v2933, %v2933
        %v2966 = vpack.c.b16 %v2934, %v2934
        %v2967 = vpack.c.b16 %v2935, %v2935
        %v2968 = vpack.c.b16 %v2936, %v2936
        %v2969 = vpack.c.b16 %v2937, %v2937
        %v2970 = vpack.c.b16 %v2938, %v2938
        %v2971 = vpack.c.b16 %v2939, %v2939
        %v2972 = vpack.c.b16 %v2940, %v2940
        %vm3005 = vcmask 60416
        %3006 = vst.msk [vmem:[%s181] sm:$0xf] %vm3005, %v2941
        %3007 = vst.msk [vmem:[%s181 + $0x4] sm:$0xf] %vm3005, %v2942
        %3008 = vst.msk [vmem:[%s181 + $0x8] sm:$0xf] %vm3005, %v2943
        %3009 = vst.msk [vmem:[%s181 + $0xc] sm:$0xf] %vm3005, %v2944
        %3010 = vst.msk [vmem:[%s181 + $0x10] sm:$0xf] %vm3005, %v2945
        %3011 = vst.msk [vmem:[%s181 + $0x14] sm:$0xf] %vm3005, %v2946
        %3012 = vst.msk [vmem:[%s181 + $0x18] sm:$0xf] %vm3005, %v2947
        %3013 = vst.msk [vmem:[%s181 + $0x1c] sm:$0xf] %vm3005, %v2948
        %3014 = vst.msk [vmem:[%s181 + $0x20] sm:$0xf] %vm3005, %v2949
        %3015 = vst.msk [vmem:[%s181 + $0x24] sm:$0xf] %vm3005, %v2950
        %3016 = vst.msk [vmem:[%s181 + $0x28] sm:$0xf] %vm3005, %v2951
        %3017 = vst.msk [vmem:[%s181 + $0x2c] sm:$0xf] %vm3005, %v2952
        %3018 = vst.msk [vmem:[%s181 + $0x30] sm:$0xf] %vm3005, %v2953
        %3019 = vst.msk [vmem:[%s181 + $0x34] sm:$0xf] %vm3005, %v2954
        %3020 = vst.msk [vmem:[%s181 + $0x38] sm:$0xf] %vm3005, %v2955
        %3021 = vst.msk [vmem:[%s181 + $0x3c] sm:$0xf] %vm3005, %v2956
        %3022 = vst.msk [vmem:[%s181 + $0x40] sm:$0xf] %vm3005, %v2957
        %3023 = vst.msk [vmem:[%s181 + $0x44] sm:$0xf] %vm3005, %v2958
        %3024 = vst.msk [vmem:[%s181 + $0x48] sm:$0xf] %vm3005, %v2959
        %3025 = vst.msk [vmem:[%s181 + $0x4c] sm:$0xf] %vm3005, %v2960
        %3026 = vst.msk [vmem:[%s181 + $0x50] sm:$0xf] %vm3005, %v2961
        %3027 = vst.msk [vmem:[%s181 + $0x54] sm:$0xf] %vm3005, %v2962
        %3028 = vst.msk [vmem:[%s181 + $0x58] sm:$0xf] %vm3005, %v2963
        %3029 = vst.msk [vmem:[%s181 + $0x5c] sm:$0xf] %vm3005, %v2964
        %3030 = vst.msk [vmem:[%s181 + $0x60] sm:$0xf] %vm3005, %v2965
        %3031 = vst.msk [vmem:[%s181 + $0x64] sm:$0xf] %vm3005, %v2966
        %3032 = vst.msk [vmem:[%s181 + $0x68] sm:$0xf] %vm3005, %v2967
        %3033 = vst.msk [vmem:[%s181 + $0x6c] sm:$0xf] %vm3005, %v2968
        %3034 = vst.msk [vmem:[%s181 + $0x70] sm:$0xf] %vm3005, %v2969
        %3035 = vst.msk [vmem:[%s181 + $0x74] sm:$0xf] %vm3005, %v2970
        %3036 = vst.msk [vmem:[%s181 + $0x78] sm:$0xf] %vm3005, %v2971
        %3037 = vst.msk [vmem:[%s181 + $0x7c] sm:$0xf] %vm3005, %v2972
        %vm3038 = vcmask 64512
        %v3039 = vsel %vm3038, %v2845, 0.0
        %v3040 = vsel %vm3038, %v2846, 0.0
        %v3041 = vadd.f32 %v3039, %v3040
        %v3042 = vsel %vm3038, %v2847, 0.0
        %v3043 = vadd.f32 %v3041, %v3042
        %v3044 = vsel %vm3038, %v2848, 0.0
        %v3045 = vadd.f32 %v3043, %v3044
        %v3046 = vsel %vm3038, %v2849, 0.0
        %v3047 = vadd.f32 %v3045, %v3046
        %v3048 = vsel %vm3038, %v2850, 0.0
        %v3049 = vadd.f32 %v3047, %v3048
        %v3050 = vsel %vm3038, %v2851, 0.0
        %v3051 = vadd.f32 %v3049, %v3050
        %v3052 = vsel %vm3038, %v2852, 0.0
        %v3053 = vadd.f32 %v3051, %v3052
        %v3054 = vsel %vm3038, %v2853, 0.0
        %v3055 = vadd.f32 %v3053, %v3054
        %v3056 = vsel %vm3038, %v2854, 0.0
        %v3057 = vadd.f32 %v3055, %v3056
        %v3058 = vsel %vm3038, %v2855, 0.0
        %v3059 = vadd.f32 %v3057, %v3058
        %v3060 = vsel %vm3038, %v2856, 0.0
        %v3061 = vadd.f32 %v3059, %v3060
        %v3062 = vsel %vm3038, %v2857, 0.0
        %v3063 = vadd.f32 %v3061, %v3062
        %v3064 = vsel %vm3038, %v2858, 0.0
        %v3065 = vadd.f32 %v3063, %v3064
        %v3066 = vsel %vm3038, %v2859, 0.0
        %v3067 = vadd.f32 %v3065, %v3066
        %v3068 = vsel %vm3038, %v2860, 0.0
        %v3069 = vadd.f32 %v3067, %v3068
        %v3070 = vsel %vm3038, %v2861, 0.0
        %v3071 = vadd.f32 %v3069, %v3070
        %v3072 = vsel %vm3038, %v2862, 0.0
        %v3073 = vadd.f32 %v3071, %v3072
        %v3074 = vsel %vm3038, %v2863, 0.0
        %v3075 = vadd.f32 %v3073, %v3074
        %v3076 = vsel %vm3038, %v2864, 0.0
        %v3077 = vadd.f32 %v3075, %v3076
        %v3078 = vsel %vm3038, %v2865, 0.0
        %v3079 = vadd.f32 %v3077, %v3078
        %v3080 = vsel %vm3038, %v2866, 0.0
        %v3081 = vadd.f32 %v3079, %v3080
        %v3082 = vsel %vm3038, %v2867, 0.0
        %v3083 = vadd.f32 %v3081, %v3082
        %v3084 = vsel %vm3038, %v2868, 0.0
        %v3085 = vadd.f32 %v3083, %v3084
        %v3086 = vsel %vm3038, %v2869, 0.0
        %v3087 = vadd.f32 %v3085, %v3086
        %v3088 = vsel %vm3038, %v2870, 0.0
        %v3089 = vadd.f32 %v3087, %v3088
        %v3090 = vsel %vm3038, %v2871, 0.0
        %v3091 = vadd.f32 %v3089, %v3090
        %v3092 = vsel %vm3038, %v2872, 0.0
        %v3093 = vadd.f32 %v3091, %v3092
        %v3094 = vsel %vm3038, %v2873, 0.0
        %v3095 = vadd.f32 %v3093, %v3094
        %v3096 = vsel %vm3038, %v2874, 0.0
        %v3097 = vadd.f32 %v3095, %v3096
        %v3098 = vsel %vm3038, %v2875, 0.0
        %v3099 = vadd.f32 %v3097, %v3098
        %v3100 = vsel %vm3038, %v2876, 0.0
        %v3101 = vadd.f32 %v3099, %v3100
        %v3102 = vrot.slane %v3101, 4
        %v3103 = vadd.f32 %v3101, %v3102
        %v3104 = vrot.slane %v3103, 2
        %v3105 = vadd.f32 %v3103, %v3104
        %v3106 = vrot.slane %v3105, 1
        %v3107 = vadd.f32 %v3105, %v3106
        %vm3108 = vcmask 57344
        %3109 = vst.msk [vmem:[%s171] sm:$0x1] %vm3108, %v3107
        %v3110 = vmul.f32 %v2845, %v2845
        %v3111 = vmul.f32 %v2846, %v2846
        %v3112 = vmul.f32 %v2847, %v2847
        %v3113 = vmul.f32 %v2848, %v2848
        %v3114 = vmul.f32 %v2849, %v2849
        %v3115 = vmul.f32 %v2850, %v2850
        %v3116 = vmul.f32 %v2851, %v2851
        %v3117 = vmul.f32 %v2852, %v2852
        %v3118 = vmul.f32 %v2853, %v2853
        %v3119 = vmul.f32 %v2854, %v2854
        %v3120 = vmul.f32 %v2855, %v2855
        %v3121 = vmul.f32 %v2856, %v2856
        %v3122 = vmul.f32 %v2857, %v2857
        %v3123 = vmul.f32 %v2858, %v2858
        %v3124 = vmul.f32 %v2859, %v2859
        %v3125 = vmul.f32 %v2860, %v2860
        %v3126 = vmul.f32 %v2861, %v2861
        %v3127 = vmul.f32 %v2862, %v2862
        %v3128 = vmul.f32 %v2863, %v2863
        %v3129 = vmul.f32 %v2864, %v2864
        %v3130 = vmul.f32 %v2865, %v2865
        %v3131 = vmul.f32 %v2866, %v2866
        %v3132 = vmul.f32 %v2867, %v2867
        %v3133 = vmul.f32 %v2868, %v2868
        %v3134 = vmul.f32 %v2869, %v2869
        %v3135 = vmul.f32 %v2870, %v2870
        %v3136 = vmul.f32 %v2871, %v2871
        %v3137 = vmul.f32 %v2872, %v2872
        %v3138 = vmul.f32 %v2873, %v2873
        %v3139 = vmul.f32 %v2874, %v2874
        %v3140 = vmul.f32 %v2875, %v2875
        %v3141 = vmul.f32 %v2876, %v2876
        %v3142 = vsel %vm3038, %v3110, 0.0
        %v3143 = vsel %vm3038, %v3111, 0.0
        %v3144 = vadd.f32 %v3142, %v3143
        %v3145 = vsel %vm3038, %v3112, 0.0
        %v3146 = vadd.f32 %v3144, %v3145
        %v3147 = vsel %vm3038, %v3113, 0.0
        %v3148 = vadd.f32 %v3146, %v3147
        %v3149 = vsel %vm3038, %v3114, 0.0
        %v3150 = vadd.f32 %v3148, %v3149
        %v3151 = vsel %vm3038, %v3115, 0.0
        %v3152 = vadd.f32 %v3150, %v3151
        %v3153 = vsel %vm3038, %v3116, 0.0
        %v3154 = vadd.f32 %v3152, %v3153
        %v3155 = vsel %vm3038, %v3117, 0.0
        %v3156 = vadd.f32 %v3154, %v3155
        %v3157 = vsel %vm3038, %v3118, 0.0
        %v3158 = vadd.f32 %v3156, %v3157
        %v3159 = vsel %vm3038, %v3119, 0.0
        %v3160 = vadd.f32 %v3158, %v3159
        %v3161 = vsel %vm3038, %v3120, 0.0
        %v3162 = vadd.f32 %v3160, %v3161
        %v3163 = vsel %vm3038, %v3121, 0.0
        %v3164 = vadd.f32 %v3162, %v3163
        %v3165 = vsel %vm3038, %v3122, 0.0
        %v3166 = vadd.f32 %v3164, %v3165
        %v3167 = vsel %vm3038, %v3123, 0.0
        %v3168 = vadd.f32 %v3166, %v3167
        %v3169 = vsel %vm3038, %v3124, 0.0
        %v3170 = vadd.f32 %v3168, %v3169
        %v3171 = vsel %vm3038, %v3125, 0.0
        %v3172 = vadd.f32 %v3170, %v3171
        %v3173 = vsel %vm3038, %v3126, 0.0
        %v3174 = vadd.f32 %v3172, %v3173
        %v3175 = vsel %vm3038, %v3127, 0.0
        %v3176 = vadd.f32 %v3174, %v3175
        %v3177 = vsel %vm3038, %v3128, 0.0
        %v3178 = vadd.f32 %v3176, %v3177
        %v3179 = vsel %vm3038, %v3129, 0.0
        %v3180 = vadd.f32 %v3178, %v3179
        %v3181 = vsel %vm3038, %v3130, 0.0
        %v3182 = vadd.f32 %v3180, %v3181
        %v3183 = vsel %vm3038, %v3131, 0.0
        %v3184 = vadd.f32 %v3182, %v3183
        %v3185 = vsel %vm3038, %v3132, 0.0
        %v3186 = vadd.f32 %v3184, %v3185
        %v3187 = vsel %vm3038, %v3133, 0.0
        %v3188 = vadd.f32 %v3186, %v3187
        %v3189 = vsel %vm3038, %v3134, 0.0
        %v3190 = vadd.f32 %v3188, %v3189
        %v3191 = vsel %vm3038, %v3135, 0.0
        %v3192 = vadd.f32 %v3190, %v3191
        %v3193 = vsel %vm3038, %v3136, 0.0
        %v3194 = vadd.f32 %v3192, %v3193
        %v3195 = vsel %vm3038, %v3137, 0.0
        %v3196 = vadd.f32 %v3194, %v3195
        %v3197 = vsel %vm3038, %v3138, 0.0
        %v3198 = vadd.f32 %v3196, %v3197
        %v3199 = vsel %vm3038, %v3139, 0.0
        %v3200 = vadd.f32 %v3198, %v3199
        %v3201 = vsel %vm3038, %v3140, 0.0
        %v3202 = vadd.f32 %v3200, %v3201
        %v3203 = vsel %vm3038, %v3141, 0.0
        %v3204 = vadd.f32 %v3202, %v3203
        %v3205 = vrot.slane %v3204, 4
        %v3206 = vadd.f32 %v3204, %v3205
        %v3207 = vrot.slane %v3206, 2
        %v3208 = vadd.f32 %v3206, %v3207
        %v3209 = vrot.slane %v3208, 1
        %v3210 = vadd.f32 %v3208, %v3209
        %3211 = vst.msk [vmem:[%s171 + $0x1] sm:$0x1] %vm3108, %v3210
        %p3212 = scmp.lt.s32.totalorder %s18, 1
        %s3213 = scalar_select %p3212, %s18, 1
        %s3214 = smul.addr %s3213, 32
        %s3215 = smul.addr %s3214, 4
        %s3216 = scalar_lea.vmem %s2, %s3215
        %s3217 = sand.u32 %s99, 1
        %s3218 = scalar_lea.sflag [#allocation4], %s3217
        %s3219 = sand.u32 %s99, 1
        %s3220 = smul.addr %s3219, 2
        %s3221 = scalar_lea.vmem [#allocation3], %s3220
        // Predicated region
        $region29: #{tpu_custom_call.1} parent=27 // pred_check
          %p3222 = pneg %p83
        $region30: #{tpu_custom_call.1} parent=27 // pred_check_branch
          %3224 = sbr.rel (%p3222) target = $region32
        $region31: #{tpu_custom_call.1} parent=27 // pred_region
          _
        $region32: #{tpu_custom_call.1} parent=27 // pred_fallthru
          _
        // Predicated region
        $region33: #{tpu_custom_call.1} parent=27 // pred_check
          %p3225 = pneg %p109
        $region34: #{tpu_custom_call.1} parent=27 // pred_check_branch
          %3227 = sbr.rel (%p3225) target = $region36
        $region35: #{tpu_custom_call.1} parent=27 // pred_region
          %s3229 = ssub.s32 32, 32
          %3230 = vsyncadd %s3218, %s3229
          %s3231 = smul.addr %s18, 32
          %s3232 = scalar_lea.hbm %s3, %s3231
          %s3234 = sshll.u32 %s3221, 4
          %s3235 = int_to_ptr.vmem [resolvable:$true] %s3234
          %3237 = dma.vmem_to_hbm [thread:$0]  %s3235, 32, %s3232, %s3218
        $region36: #{tpu_custom_call.1} parent=27 // pred_fallthru
          _
      $region28: #{tpu_custom_call.1} parent=5 // pred_fallthru
        _
      %p3238 = scmp.le.s32.totalorder 2, %s13
      // Predicated region
      $region37: #{tpu_custom_call.1} parent=5 // pred_check
        %p3239 = pneg %p3238
      $region38: #{tpu_custom_call.1} parent=5 // pred_check_branch
        %3241 = sbr.rel (%p3239) target = $region40
      $region39: #{tpu_custom_call.1} parent=5 // pred_region
        %s3242 = ssub.s32 %s13, 2
        // Predicated region
        $region41: #{tpu_custom_call.1} parent=39 // pred_check
          %p3243 = pneg %p89
        $region42: #{tpu_custom_call.1} parent=39 // pred_check_branch
          %3245 = sbr.rel (%p3243) target = $region44
        $region43: #{tpu_custom_call.1} parent=39 // pred_region
          %p3246 = scmp.lt.s32.totalorder %s19, 1
          %s3247 = scalar_select %p3246, %s19, 1
          %s3248 = smul.addr %s3247, 32
          %s3249 = smul.addr %s3248, 4
          %s3250 = scalar_lea.vmem %s2, %s3249
        $region44: #{tpu_custom_call.1} parent=39 // pred_fallthru
          _
        // Predicated region
        $region45: #{tpu_custom_call.1} parent=39 // pred_check
          %p3251 = pneg %p115
        $region46: #{tpu_custom_call.1} parent=39 // pred_check_branch
          %3253 = sbr.rel (%p3251) target = $region48
        $region47: #{tpu_custom_call.1} parent=39 // pred_region
          %s3254 = sand.u32 %s100, 1
          %s3255 = scalar_lea.sflag [#allocation4], %s3254
          %s3256 = sand.u32 %s100, 1
          %s3257 = smul.addr %s3256, 2
          %s3258 = scalar_lea.vmem [#allocation3], %s3257
          %3259 = dma.done %s3255, 32
        $region48: #{tpu_custom_call.1} parent=39 // pred_fallthru
          _
      $region40: #{tpu_custom_call.1} parent=5 // pred_fallthru
        _
    $region6: #{tpu_custom_call.1} parent=1 // loop_footer
      %s17 = sadd.s32 1, %s13
    $region7: #{tpu_custom_call.1} parent=1 // loop_footer_branch
      %12 = sbr.rel target = $region3
    $region8: #{tpu_custom_call.1} parent=1 // loop_exit
      _
    %3260 = vsyncpa [#allocation4], 1
    %s3261 = scalar_lea.sflag [#allocation4], 1
    %3262 = vsyncpa %s3261, 1

</llo_original>
